<compile_context>
chip_gen: v5e
topology: v5e:2x2
jax: 0.10.0
libtpu: 0.0.40
codegen_flags: <defaults>
</compile_context>

<pallas_src>
import numpy as np
from functools import partial

import jax
import jax.numpy as jnp
from jax import lax
from jax.experimental import pallas as pl
from jax.experimental.pallas import tpu as pltpu


# MXU operand dtype: bf16 operands + f32 accumulation gives ~2-3x MXU
# throughput on v6e/v7x and halves VMEM/DMA for the DFT constants.
# TODO(synk): validate the ~8-deep bf16 DFT->iDFT chain against a complex64
# jnp.fft reference; flip back to jnp.float32 if the drift matters.
MATMUL_DTYPE = jnp.bfloat16


# ----------------------------------------------------------------------------
# small helpers
# ----------------------------------------------------------------------------
def _round_up(n, m):
    return ((n + m - 1) // m) * m


def _device_kind():
    try:
        return jax.devices()[0].device_kind.lower()
    except Exception:
        return ""


def pick_batch_block(B):
    """Generation-aware batch block: Bb=1 on v7x (64 MiB VMEM/TC, and nb>=2
    feeds both TensorCores); Bb=2-4 on v5e/v6e (128 MiB VMEM) to amortize the
    per-grid-step overhead."""
    if B <= 1:
        return max(B, 1)
    if "v7" in _device_kind():
        return 1
    for bb in (4, 2, 1):
        if B % bb == 0:
            return bb
    return 1


def _vmem_limit_bytes(Np, Bb):
    # Working set (bytes):
    #   single-buffered bf16 DFT constants (6 arrays)        : 12 * Np^2
    #   double-buffered f32 H / T stage inputs (4 arrays)     : 32 * Np^2
    #   ~14 live f32 Np^2 temporaries (1 elem, fori-bounded)   : 56 * Np^2
    #   double-buffered field in/out + eabs + carried scratch  : 48 * Bb * Np^2
    need = (12 + 32 + 56 + 48 * Bb) * Np * Np
    need = int(need * 1.3)                      # headroom for compiler scratch
    cap = (60 << 20) if "v7" in _device_kind() else (120 << 20)
    return max(min(need, cap), 32 << 20)


def _pad_last2(x, Np):
    n = x.shape[-1]
    if n == Np:
        return x
    pad = [(0, 0)] * (x.ndim - 2) + [(0, Np - n), (0, Np - n)]
    return jnp.pad(x, pad)


# ----------------------------------------------------------------------------
# Kernel 1: per-layer mask transmission (layer params -> complex transmission)
# ----------------------------------------------------------------------------
def _mask_transmission_kernel(phase_ref, amp_ref, mr_ref, mi_ref):
    phase = phase_ref[...]
    amp = amp_ref[...]
    # MaskLayer: constr_phase = 2*pi*sigmoid(phase); modulation = exp(i*phase)
    constr_phase = (2.0 * np.pi) / (1.0 + jnp.exp(-phase))
    cr = jnp.cos(constr_phase)
    ci = jnp.sin(constr_phase)
    # amplitude: relu(amp) / max(relu(amp)).  The eps guard only differs from
    # the literal PyTorch max-divide in the degenerate all-nonpositive case
    # (PyTorch would produce NaN).
    relu_amp = jnp.maximum(amp, 0.0)
    constr_amp = relu_amp / jnp.maximum(jnp.max(relu_amp), 1e-20)
    mr_ref[...] = constr_amp * cr
    mi_ref[...] = constr_amp * ci


def mask_transmissions(phases, amps):
    """[L,N,N] phase/amplitude parameters -> complex transmission (re, im)."""
    L, N, _ = phases.shape
    # lane-dense layout when N*N is a multiple of 128 (fills all 128 lanes)
    if (N * N) % 128 == 0:
        inner = ((N * N) // 128, 128)
    else:
        inner = (N, N)
    ph = phases.reshape((L,) + inner)
    am = amps.reshape((L,) + inner)
    spec = pl.BlockSpec((1,) + inner, lambda l: (l, 0, 0))
    mr, mi = pl.pallas_call(
        _mask_transmission_kernel,
        out_shape=[jax.ShapeDtypeStruct((L,) + inner, jnp.float32)] * 2,
        grid=(L,),
        in_specs=[spec, spec],
        out_specs=[spec, spec],
        compiler_params=pltpu.CompilerParams(
            dimension_semantics=("parallel",)),
    )(ph, am)
    return mr.reshape(L, N, N), mi.reshape(L, N, N)


# ----------------------------------------------------------------------------
# Kernel 2: fused forward — all stages in one pallas_call, field kept in VMEM
# ----------------------------------------------------------------------------
def _fourier_dnn_kernel(fr_ref, fi_ref, fs_ref, gr_ref, gi_ref, gs_ref,
                        hr_ref, hi_ref, tr_ref, ti_ref,
                        e0r_ref, e0i_ref,
                        outr_ref, outi_ref, eabs_ref,
                        cur_r, cur_i):
    s = pl.program_id(1)          # stage index (sequential / "arbitrary")
    n_s = pl.num_programs(1)
    Bb = cur_r.shape[0]           # batch-block size (static)

    # Load the input field into the carried VMEM scratch at the first stage of
    # every batch block.
    @pl.when(s == 0)
    def _():
        cur_r[...] = e0r_ref[...]
        cur_i[...] = e0i_ref[...]

    fr = fr_ref[...]; fi = fi_ref[...]; fs = fs_ref[...]   # bf16 DFT consts
    gr = gr_ref[...]; gi = gi_ref[...]; gs = gs_ref[...]
    hr = hr_ref[...]; hi = hi_ref[...]                     # f32, per stage
    tr = tr_ref[...]; ti = ti_ref[...]

    is_last = s == n_s - 1
    # Only stages 1 .. S-2 produce fields the module actually returns.
    is_out = jnp.logical_and(s >= 1, s < n_s - 1)

    def cdot_rhs(ar, ai, br, bi, bs):
        # complex (A @ B), B a constant matrix; Gauss 3-mult (3 MXU passes),
        # constant sum bs = br + bi hoisted to the host; f32 accumulation.
        a1 = ar.astype(MATMUL_DTYPE)
        a2 = ai.astype(MATMUL_DTYPE)
        a3 = (ar + ai).astype(MATMUL_DTYPE)
        p1 = jnp.dot(a1, br, preferred_element_type=jnp.float32)
        p2 = jnp.dot(a2, bi, preferred_element_type=jnp.float32)
        p3 = jnp.dot(a3, bs, preferred_element_type=jnp.float32)
        return p1 - p2, p3 - p1 - p2

    def cdot_lhs(br, bi, bs, ar, ai):
        # complex (B @ A), B a constant matrix (same Gauss trick).
        a1 = ar.astype(MATMUL_DTYPE)
        a2 = ai.astype(MATMUL_DTYPE)
        a3 = (ar + ai).astype(MATMUL_DTYPE)
        p1 = jnp.dot(br, a1, preferred_element_type=jnp.float32)
        p2 = jnp.dot(bi, a2, preferred_element_type=jnp.float32)
        p3 = jnp.dot(bs, a3, preferred_element_type=jnp.float32)
        return p1 - p2, p3 - p1 - p2

    def body(b, carry):
        er = cur_r[b]
        ei = cur_i[b]
        # fft2(E) = F @ (E @ F)      (F is the symmetric DFT matrix)
        x1r, x1i = cdot_rhs(er, ei, fr, fi, fs)
        x2r, x2i = cdot_lhs(fr, fi, fs, x1r, x1i)
        # multiply by this stage's angular-spectrum transfer function H
        yr = x2r * hr - x2i * hi
        yi = x2r * hi + x2i * hr
        # ifft2(Y) = G @ (Y @ G)     (G = conj(F) / N)
        z1r, z1i = cdot_rhs(yr, yi, gr, gi, gs)
        dr, di = cdot_lhs(gr, gi, gs, z1r, z1i)

        # per-stage complex transmission (lens / mask / identity)
        nr = dr * tr - di * ti
        ni = dr * ti + di * tr
        cur_r[b] = nr
        cur_i[b] = ni

        # only stages 1..S-2 are returned by the module -> only those hit HBM
        @pl.when(is_out)
        def _():
            outr_ref[b] = nr
            outi_ref[b] = ni

        # |E|^2 only on the final propagation (T = 1 there): matches
        # torch.abs(E)**2 of the module output; skipped on every other stage.
        @pl.when(is_last)
        def _():
            eabs_ref[b] = dr * dr + di * di

        return carry

    # lax.fori_loop bounds the ~12 live Np^2 temporaries to ONE batch element
    # (an unrolled Python loop would keep them live across the whole block).
    if Bb == 1:
        body(0, 0)
    else:
        lax.fori_loop(0, Bb, body, 0)


def fourier_dnn_pallas(e0r, e0i, h_r, h_i, t_r, t_i,
                       fr, fi, fs, gr, gi, gs, *, batch_block):
    B, Np, _ = e0r.shape
    S = h_r.shape[0]
    Bb = batch_block
    assert B % Bb == 0
    nb = B // Bb

    # DFT constants: block index constant over the whole grid -> fetched once;
    # single-buffered (pl.Buffered(1)) so no dead second VMEM copy.
    const_spec = pl.BlockSpec((Np, Np), lambda b, s: (0, 0),
                              pipeline_mode=pl.Buffered(1))
    # Per-stage transfer function / transmission (re-DMA'd every stage step).
    stage_spec = pl.BlockSpec((None, Np, Np), lambda b, s: (s, 0, 0))
    # Input field: index depends only on b -> DMA'd once per batch block.
    field_in_spec = pl.BlockSpec((Bb, Np, Np), lambda b, s: (b, 0, 0))
    # Intermediate outputs: only stages 1..S-2 exist in the output stack; the
    # index map clamps, and the kernel only writes inside that range, so the
    # unused stage-0 / final-stage writebacks never happen.
    out_spec = pl.BlockSpec(
        (None, Bb, Np, Np),
        lambda b, s: (jnp.minimum(jnp.maximum(s - 1, 0), S - 3), b, 0, 0))
    eabs_spec = pl.BlockSpec((Bb, Np, Np), lambda b, s: (b, 0, 0))

    outs_r, outs_i, eabs = pl.pallas_call(
        _fourier_dnn_kernel,
        out_shape=[jax.ShapeDtypeStruct((S - 2, B, Np, Np), jnp.float32),
                   jax.ShapeDtypeStruct((S - 2, B, Np, Np), jnp.float32),
                   jax.ShapeDtypeStruct((B, Np, Np), jnp.float32)],
        grid=(nb, S),
        in_specs=[const_spec] * 6 + [stage_spec] * 4 + [field_in_spec] * 2,
        out_specs=[out_spec, out_spec, eabs_spec],
        scratch_shapes=[pltpu.VMEM((Bb, Np, Np), jnp.float32),
                        pltpu.VMEM((Bb, Np, Np), jnp.float32)],
        compiler_params=pltpu.CompilerParams(
            dimension_semantics=("parallel", "arbitrary"),
            vmem_limit_bytes=_vmem_limit_bytes(Np, Bb)),
    )(fr, fi, fs, gr, gi, gs, h_r, h_i, t_r, t_i, e0r, e0i)
    return outs_r, outs_i, eabs


# ----------------------------------------------------------------------------
# Host-side (pure numpy) construction of constant matrices — built ONCE
# ----------------------------------------------------------------------------
def make_dft_mats(N):
    j = np.arange(N)
    theta = 2.0 * np.pi * np.outer(j, j) / N
    Fr = np.cos(theta)                   # F = exp(-i*theta)   (symmetric)
    Fi = -np.sin(theta)
    Gr = np.cos(theta) / N               # G = conj(F)/N
    Gi = np.sin(theta) / N
    return Fr, Fi, Gr, Gi


def make_transfer(N, pixel_size, wl, dist):
    """Band-limited angular-spectrum transfer function H(dist)."""
    fx = np.fft.fftfreq(N, d=pixel_size)
    FX, FY = np.meshgrid(fx, fx, indexing="ij")
    arg = (1.0 / wl) ** 2 - FX ** 2 - FY ** 2
    prop = arg > 0.0
    phase = 2.0 * np.pi * dist * np.sqrt(np.maximum(arg, 0.0))
    Hr = np.where(prop, np.cos(phase), 0.0).astype(np.float32)
    Hi = np.where(prop, np.sin(phase), 0.0).astype(np.float32)
    return Hr, Hi


def make_lens(N, pixel_size, wl, focus):
    x = (np.arange(N) - N / 2.0) * pixel_size
    X, Y = np.meshgrid(x, x, indexing="ij")
    phase = -np.pi / (wl * focus) * (X ** 2 + Y ** 2)
    return np.cos(phase).astype(np.float32), np.sin(phase).astype(np.float32)


def build_constants(N, num_layers, *, wl, pixel_size, distance, lens_focus):
    Np = _round_up(N, 128)
    Fr, Fi, Gr, Gi = make_dft_mats(N)
    Hf = make_transfer(N, pixel_size, wl, lens_focus)             # lens_diffractive_layer
    H1 = make_transfer(N, pixel_size, wl, lens_focus - distance)  # first_diffractive_layer
    Hd = make_transfer(N, pixel_size, wl, distance)               # inside each MaskLayer
    Lr, Li = make_lens(N, pixel_size, wl, lens_focus)

    # stage order: [lens_diff+lens, first_diff, mask_diff x L, lens_diff+lens, lens_diff]
    hr = np.stack([Hf[0], H1[0]] + [Hd[0]] * num_layers + [Hf[0], Hf[0]])
    hi = np.stack([Hf[1], H1[1]] + [Hd[1]] * num_layers + [Hf[1], Hf[1]])

    def pad2(x):
        pad = [(0, 0)] * (x.ndim - 2) + [(0, Np - N), (0, Np - N)]
        return np.pad(x, pad)

    ones = np.ones((N, N), np.float32)
    zeros = np.zeros((N, N), np.float32)
    # Zero padding of F/G/H keeps the top-left N x N block of every stage
    # exactly equal to the unpadded math (padded field region stays 0).
    return dict(
        fr=jnp.asarray(pad2(Fr).astype(np.float32), MATMUL_DTYPE),
        fi=jnp.asarray(pad2(Fi).astype(np.float32), MATMUL_DTYPE),
        fs=jnp.asarray(pad2(Fr + Fi).astype(np.float32), MATMUL_DTYPE),  # hoisted Gauss sum
        gr=jnp.asarray(pad2(Gr).astype(np.float32), MATMUL_DTYPE),
        gi=jnp.asarray(pad2(Gi).astype(np.float32), MATMUL_DTYPE),
        gs=jnp.asarray(pad2(Gr + Gi).astype(np.float32), MATMUL_DTYPE),  # hoisted Gauss sum
        hr=jnp.asarray(pad2(hr), jnp.float32),
        hi=jnp.asarray(pad2(hi), jnp.float32),
        t_pre_r=jnp.asarray(np.stack([Lr, ones])),     # stages 0,1
        t_pre_i=jnp.asarray(np.stack([Li, zeros])),
        t_post_r=jnp.asarray(np.stack([Lr, ones])),    # stages L+2, L+3
        t_post_i=jnp.asarray(np.stack([Li, zeros])),
    )


# ----------------------------------------------------------------------------
# Full forward pass of new_Fourier_DNN (jitted)
# ----------------------------------------------------------------------------
@partial(jax.jit, static_argnames=("batch_block",))
def fourier_dnn_forward(er, ei, phases, amps, consts, *, batch_block=1):
    """Returns (E_abs, outputs) mirroring new_Fourier_DNN.forward."""
    L = phases.shape[0]
    B, N, _ = er.shape
    Np = consts["fr"].shape[-1]

    # per-layer mask transmissions (computed once from the parameters)
    mr, mi = mask_transmissions(phases, amps)
    t_r = jnp.concatenate([consts["t_pre_r"], mr, consts["t_post_r"]], axis=0)
    t_i = jnp.concatenate([consts["t_pre_i"], mi, consts["t_post_i"]], axis=0)

    # zero-pad fields / transmissions to the lane-aligned size (exact)
    er_p = _pad_last2(er, Np)
    ei_p = _pad_last2(ei, Np)
    t_r = _pad_last2(t_r, Np)
    t_i = _pad_last2(t_i, Np)

    outs_r, outs_i, eabs = fourier_dnn_pallas(
        er_p, ei_p, consts["hr"], consts["hi"], t_r, t_i,
        consts["fr"], consts["fi"], consts["fs"],
        consts["gr"], consts["gi"], consts["gs"],
        batch_block=batch_block)

    outs_r = outs_r[..., :N, :N]
    outs_i = outs_i[..., :N, :N]
    eabs = eabs[..., :N, :N]

    # outputs = [input, after first_diffractive_layer, each mask layer,
    #            after the second lens pass]   (stage 0 and the final stage
    #            are internal only and were never written back)
    outputs = [(er, ei)] + [(outs_r[k], outs_i[k]) for k in range(L + 2)]
    return eabs, outputs


# ----------------------------------------------------------------------------
if __name__ == "__main__":
    key = jax.random.PRNGKey(0)
    B, N = 2, 32            # small demo: batch=2, N_pixels=32 (padded to 128)
    num_layers = 3
    wl = 5.32e-07
    pixel_size = 1e-05
    distance = 0.005
    lens_focus = 0.1

    k_er, k_ei, k_ph = jax.random.split(key, 3)
    er = jax.random.normal(k_er, (B, N, N), dtype=jnp.float32)
    ei = jax.random.normal(k_ei, (B, N, N), dtype=jnp.float32)

    # MaskLayer parameters (__init__: phase zeros, amplitude ones); a small
    # deterministic random phase makes the modulation non-trivial.
    phases = 0.1 * jax.random.normal(k_ph, (num_layers, N, N), dtype=jnp.float32)
    amps = jnp.ones((num_layers, N, N), dtype=jnp.float32)

    consts = build_constants(N, num_layers, wl=wl, pixel_size=pixel_size,
                             distance=distance, lens_focus=lens_focus)

    E_abs, outputs = fourier_dnn_forward(
        er, ei, phases, amps, consts, batch_block=pick_batch_block(B))

    jax.block_until_ready(E_abs)
    for o_r, o_i in outputs:
        jax.block_until_ready(o_r)
        jax.block_until_ready(o_i)
    print("KERNEL_OK")
</pallas_src>

<mosaic_0001>
module attributes {stable_mosaic.version = 11 : i64} {
  func.func @_mask_transmission_kernel(%arg0: i32, %arg1: memref<1x8x128xf32, #tpu.memory_space<vmem>>, %arg2: memref<1x8x128xf32, #tpu.memory_space<vmem>>, %arg3: memref<1x8x128xf32, #tpu.memory_space<vmem>>, %arg4: memref<1x8x128xf32, #tpu.memory_space<vmem>>) attributes {dimension_semantics = [#tpu.dimension_semantics<parallel>], iteration_bounds = array<i64: 3>, scalar_prefetch = 0 : i64, scratch_operands = 0 : i64, tpu.core_type = #tpu.core_type<tc>, window_params = [{transform_indices = @transform_0, window_bounds = array<i64: 1, 8, 128>}, {transform_indices = @transform_1, window_bounds = array<i64: 1, 8, 128>}, {transform_indices = @transform_2, window_bounds = array<i64: 1, 8, 128>}, {transform_indices = @transform_3, window_bounds = array<i64: 1, 8, 128>}]} {
    %c0 = arith.constant 0 : index
    %c0_0 = arith.constant 0 : index
    %c0_1 = arith.constant 0 : index
    %0 = vector.load %arg1[%c0, %c0_0, %c0_1] : memref<1x8x128xf32, #tpu.memory_space<vmem>>, vector<1x8x128xf32>
    %c0_2 = arith.constant 0 : index
    %c0_3 = arith.constant 0 : index
    %c0_4 = arith.constant 0 : index
    %1 = vector.load %arg2[%c0_2, %c0_3, %c0_4] : memref<1x8x128xf32, #tpu.memory_space<vmem>>, vector<1x8x128xf32>
    %cst = arith.constant 0.000000e+00 : f32
    %2 = vector.broadcast %cst : f32 to vector<1x8x128xf32>
    %3 = arith.subf %2, %0 : vector<1x8x128xf32>
    %4 = math.exp %3 : vector<1x8x128xf32>
    %cst_5 = arith.constant 1.000000e+00 : f32
    %5 = vector.broadcast %cst_5 : f32 to vector<1x8x128xf32>
    %6 = arith.addf %5, %4 : vector<1x8x128xf32>
    %cst_6 = arith.constant 6.28318548 : f32
    %7 = vector.broadcast %cst_6 : f32 to vector<1x8x128xf32>
    %8 = arith.divf %7, %6 : vector<1x8x128xf32>
    %9 = math.cos %8 : vector<1x8x128xf32>
    %10 = math.sin %8 : vector<1x8x128xf32>
    %cst_7 = arith.constant 0.000000e+00 : f32
    %11 = vector.broadcast %cst_7 : f32 to vector<1x8x128xf32>
    %12 = arith.maximumf %1, %11 : vector<1x8x128xf32>
    %13 = vector.shape_cast %12 : vector<1x8x128xf32> to vector<1x1x8x128xf32>
    %cst_8 = arith.constant dense<0xFF800000> : vector<1xf32>
    %14 = vector.multi_reduction <maximumf>, %13, %cst_8 [1, 2, 3] : vector<1x1x8x128xf32> to vector<1xf32>
    %15 = vector.shape_cast %14 : vector<1xf32> to vector<1x1x1x1xf32>
    %16 = vector.extract %15[0, 0, 0, 0] : f32 from vector<1x1x1x1xf32>
    %cst_9 = arith.constant 9.99999968E-21 : f32
    %17 = arith.maximumf %16, %cst_9 : f32
    %18 = vector.broadcast %17 : f32 to vector<1x8x128xf32>
    %19 = arith.divf %12, %18 : vector<1x8x128xf32>
    %20 = arith.mulf %19, %9 : vector<1x8x128xf32>
    %c0_10 = arith.constant 0 : index
    %c0_11 = arith.constant 0 : index
    %c0_12 = arith.constant 0 : index
    %21 = vector.load %arg3[%c0_10, %c0_11, %c0_12] : memref<1x8x128xf32, #tpu.memory_space<vmem>>, vector<1x8x128xf32>
    tpu.vector_store %arg3[%c0_10, %c0_11, %c0_12], %20 {strides = array<i32>} : memref<1x8x128xf32, #tpu.memory_space<vmem>>, vector<1x8x128xf32>,
    %22 = arith.mulf %19, %10 : vector<1x8x128xf32>
    %c0_13 = arith.constant 0 : index
    %c0_14 = arith.constant 0 : index
    %c0_15 = arith.constant 0 : index
    %23 = vector.load %arg4[%c0_13, %c0_14, %c0_15] : memref<1x8x128xf32, #tpu.memory_space<vmem>>, vector<1x8x128xf32>
    tpu.vector_store %arg4[%c0_13, %c0_14, %c0_15], %22 {strides = array<i32>} : memref<1x8x128xf32, #tpu.memory_space<vmem>>, vector<1x8x128xf32>,
    return
  }
  func.func @transform_0(%arg0: i32) -> (i32, i32, i32) {
    %c0_i32 = arith.constant 0 : i32
    %c0_i32_0 = arith.constant 0 : i32
    %c0_i32_1 = arith.constant 0 : i32
    return %arg0, %c0_i32, %c0_i32_0 : i32, i32, i32
  }
  func.func @transform_1(%arg0: i32) -> (i32, i32, i32) {
    %c0_i32 = arith.constant 0 : i32
    %c0_i32_0 = arith.constant 0 : i32
    %c0_i32_1 = arith.constant 0 : i32
    return %arg0, %c0_i32, %c0_i32_0 : i32, i32, i32
  }
  func.func @transform_2(%arg0: i32) -> (i32, i32, i32) {
    %c0_i32 = arith.constant 0 : i32
    %c0_i32_0 = arith.constant 0 : i32
    %c0_i32_1 = arith.constant 0 : i32
    return %arg0, %c0_i32, %c0_i32_0 : i32, i32, i32
  }
  func.func @transform_3(%arg0: i32) -> (i32, i32, i32) {
    %c0_i32 = arith.constant 0 : i32
    %c0_i32_0 = arith.constant 0 : i32
    %c0_i32_1 = arith.constant 0 : i32
    return %arg0, %c0_i32, %c0_i32_0 : i32, i32, i32
  }
}

module attributes {stable_mosaic.version = 11 : i64} {
  func.func @_fourier_dnn_kernel(%arg0: i32, %arg1: i32, %arg2: memref<128x128xbf16, #tpu.memory_space<vmem>>, %arg3: memref<128x128xbf16, #tpu.memory_space<vmem>>, %arg4: memref<128x128xbf16, #tpu.memory_space<vmem>>, %arg5: memref<128x128xbf16, #tpu.memory_space<vmem>>, %arg6: memref<128x128xbf16, #tpu.memory_space<vmem>>, %arg7: memref<128x128xbf16, #tpu.memory_space<vmem>>, %arg8: memref<1x128x128xf32, #tpu.memory_space<vmem>>, %arg9: memref<1x128x128xf32, #tpu.memory_space<vmem>>, %arg10: memref<1x128x128xf32, #tpu.memory_space<vmem>>, %arg11: memref<1x128x128xf32, #tpu.memory_space<vmem>>, %arg12: memref<2x128x128xf32, #tpu.memory_space<vmem>>, %arg13: memref<2x128x128xf32, #tpu.memory_space<vmem>>, %arg14: memref<1x2x128x128xf32, #tpu.memory_space<vmem>>, %arg15: memref<1x2x128x128xf32, #tpu.memory_space<vmem>>, %arg16: memref<2x128x128xf32, #tpu.memory_space<vmem>>, %arg17: memref<2x128x128xf32, #tpu.memory_space<vmem>>, %arg18: memref<2x128x128xf32, #tpu.memory_space<vmem>>) attributes {dimension_semantics = [#tpu.dimension_semantics<parallel>, #tpu.dimension_semantics<arbitrary>], iteration_bounds = array<i64: 1, 7>, scalar_prefetch = 0 : i64, scratch_operands = 2 : i64, tpu.core_type = #tpu.core_type<tc>, window_params = [{pipeline_mode = #tpu.pipeline_mode<synchronous>, transform_indices = @transform_0, window_bounds = array<i64: 128, 128>}, {pipeline_mode = #tpu.pipeline_mode<synchronous>, transform_indices = @transform_1, window_bounds = array<i64: 128, 128>}, {pipeline_mode = #tpu.pipeline_mode<synchronous>, transform_indices = @transform_2, window_bounds = array<i64: 128, 128>}, {pipeline_mode = #tpu.pipeline_mode<synchronous>, transform_indices = @transform_3, window_bounds = array<i64: 128, 128>}, {pipeline_mode = #tpu.pipeline_mode<synchronous>, transform_indices = @transform_4, window_bounds = array<i64: 128, 128>}, {pipeline_mode = #tpu.pipeline_mode<synchronous>, transform_indices = @transform_5, window_bounds = array<i64: 128, 128>}, {transform_indices = @transform_6, window_bounds = array<i64: 1, 128, 128>}, {transform_indices = @transform_7, window_bounds = array<i64: 1, 128, 128>}, {transform_indices = @transform_8, window_bounds = array<i64: 1, 128, 128>}, {transform_indices = @transform_9, window_bounds = array<i64: 1, 128, 128>}, {transform_indices = @transform_10, window_bounds = array<i64: 2, 128, 128>}, {transform_indices = @transform_11, window_bounds = array<i64: 2, 128, 128>}, {transform_indices = @transform_12, window_bounds = array<i64: 1, 2, 128, 128>}, {transform_indices = @transform_13, window_bounds = array<i64: 1, 2, 128, 128>}, {transform_indices = @transform_14, window_bounds = array<i64: 2, 128, 128>}]} {
    %c0_i32 = arith.constant 0 : i32
    %0 = arith.cmpi eq, %arg1, %c0_i32 : i32
    %1 = arith.extui %0 : i1 to i32
    %c0_i32_0 = arith.constant 0 : i32
    %2 = arith.cmpi ne, %1, %c0_i32_0 : i32
    scf.if %2 {
      %c0_28 = arith.constant 0 : index
      %c0_29 = arith.constant 0 : index
      %c0_30 = arith.constant 0 : index
      %22 = vector.load %arg12[%c0_28, %c0_29, %c0_30] : memref<2x128x128xf32, #tpu.memory_space<vmem>>, vector<2x128x128xf32>
      %c0_31 = arith.constant 0 : index
      %c0_32 = arith.constant 0 : index
      %c0_33 = arith.constant 0 : index
      %23 = vector.load %arg17[%c0_31, %c0_32, %c0_33] : memref<2x128x128xf32, #tpu.memory_space<vmem>>, vector<2x128x128xf32>
      tpu.vector_store %arg17[%c0_31, %c0_32, %c0_33], %22 {strides = array<i32>} : memref<2x128x128xf32, #tpu.memory_space<vmem>>, vector<2x128x128xf32>,
      %c0_34 = arith.constant 0 : index
      %c0_35 = arith.constant 0 : index
      %c0_36 = arith.constant 0 : index
      %24 = vector.load %arg13[%c0_34, %c0_35, %c0_36] : memref<2x128x128xf32, #tpu.memory_space<vmem>>, vector<2x128x128xf32>
      %c0_37 = arith.constant 0 : index
      %c0_38 = arith.constant 0 : index
      %c0_39 = arith.constant 0 : index
      %25 = vector.load %arg18[%c0_37, %c0_38, %c0_39] : memref<2x128x128xf32, #tpu.memory_space<vmem>>, vector<2x128x128xf32>
      tpu.vector_store %arg18[%c0_37, %c0_38, %c0_39], %24 {strides = array<i32>} : memref<2x128x128xf32, #tpu.memory_space<vmem>>, vector<2x128x128xf32>,
    } else {
    }
    %c0 = arith.constant 0 : index
    %c0_1 = arith.constant 0 : index
    %3 = vector.load %arg2[%c0, %c0_1] : memref<128x128xbf16, #tpu.memory_space<vmem>>, vector<128x128xbf16>
    %c0_2 = arith.constant 0 : index
    %c0_3 = arith.constant 0 : index
    %4 = vector.load %arg3[%c0_2, %c0_3] : memref<128x128xbf16, #tpu.memory_space<vmem>>, vector<128x128xbf16>
    %c0_4 = arith.constant 0 : index
    %c0_5 = arith.constant 0 : index
    %5 = vector.load %arg4[%c0_4, %c0_5] : memref<128x128xbf16, #tpu.memory_space<vmem>>, vector<128x128xbf16>
    %c0_6 = arith.constant 0 : index
    %c0_7 = arith.constant 0 : index
    %6 = vector.load %arg5[%c0_6, %c0_7] : memref<128x128xbf16, #tpu.memory_space<vmem>>, vector<128x128xbf16>
    %c0_8 = arith.constant 0 : index
    %c0_9 = arith.constant 0 : index
    %7 = vector.load %arg6[%c0_8, %c0_9] : memref<128x128xbf16, #tpu.memory_space<vmem>>, vector<128x128xbf16>
    %c0_10 = arith.constant 0 : index
    %c0_11 = arith.constant 0 : index
    %8 = vector.load %arg7[%c0_10, %c0_11] : memref<128x128xbf16, #tpu.memory_space<vmem>>, vector<128x128xbf16>
    %c0_12 = arith.constant 0 : index
    %c0_13 = arith.constant 0 : index
    %c0_14 = arith.constant 0 : index
    %9 = vector.load %arg8[%c0_12, %c0_13, %c0_14] : memref<1x128x128xf32, #tpu.memory_space<vmem>>, vector<1x128x128xf32>
    %10 = vector.shape_cast %9 : vector<1x128x128xf32> to vector<128x128xf32>
    %c0_15 = arith.constant 0 : index
    %c0_16 = arith.constant 0 : index
    %c0_17 = arith.constant 0 : index
    %11 = vector.load %arg9[%c0_15, %c0_16, %c0_17] : memref<1x128x128xf32, #tpu.memory_space<vmem>>, vector<1x128x128xf32>
    %12 = vector.shape_cast %11 : vector<1x128x128xf32> to vector<128x128xf32>
    %c0_18 = arith.constant 0 : index
    %c0_19 = arith.constant 0 : index
    %c0_20 = arith.constant 0 : index
    %13 = vector.load %arg10[%c0_18, %c0_19, %c0_20] : memref<1x128x128xf32, #tpu.memory_space<vmem>>, vector<1x128x128xf32>
    %14 = vector.shape_cast %13 : vector<1x128x128xf32> to vector<128x128xf32>
    %c0_21 = arith.constant 0 : index
    %c0_22 = arith.constant 0 : index
    %c0_23 = arith.constant 0 : index
    %15 = vector.load %arg11[%c0_21, %c0_22, %c0_23] : memref<1x128x128xf32, #tpu.memory_space<vmem>>, vector<1x128x128xf32>
    %16 = vector.shape_cast %15 : vector<1x128x128xf32> to vector<128x128xf32>
    %c6_i32 = arith.constant 6 : i32
    %17 = arith.cmpi eq, %arg1, %c6_i32 : i32
    %c1_i32 = arith.constant 1 : i32
    %18 = arith.cmpi sge, %arg1, %c1_i32 : i32
    %c6_i32_24 = arith.constant 6 : i32
    %19 = arith.cmpi slt, %arg1, %c6_i32_24 : i32
    %20 = arith.andi %18, %19 : i1
    %c0_i32_25 = arith.constant 0 : i32
    %c2_i32 = arith.constant 2 : i32
    %21 = arith.addi %c0_i32_25, %c2_i32 : i32
    %c1_i32_26 = arith.constant 1 : i32
    scf.for %arg19 = %c0_i32_25 to %21 step %c1_i32_26  : i32 {
      %22 = arith.index_cast %arg19 : i32 to index
      %c0_28 = arith.constant 0 : index
      %c0_29 = arith.constant 0 : index
      %23 = vector.load %arg17[%22, %c0_28, %c0_29] : memref<2x128x128xf32, #tpu.memory_space<vmem>>, vector<1x128x128xf32>
      %24 = vector.shape_cast %23 : vector<1x128x128xf32> to vector<128x128xf32>
      %25 = arith.index_cast %arg19 : i32 to index
      %c0_30 = arith.constant 0 : index
      %c0_31 = arith.constant 0 : index
      %26 = vector.load %arg18[%25, %c0_30, %c0_31] : memref<2x128x128xf32, #tpu.memory_space<vmem>>, vector<1x128x128xf32>
      %27 = vector.shape_cast %26 : vector<1x128x128xf32> to vector<128x128xf32>
      %28 = arith.truncf %24 : vector<128x128xf32> to vector<128x128xbf16>
      %29 = arith.truncf %27 : vector<128x128xf32> to vector<128x128xbf16>
      %30 = arith.addf %24, %27 : vector<128x128xf32>
      %31 = arith.truncf %30 : vector<128x128xf32> to vector<128x128xbf16>
      %cst = arith.constant dense<0.000000e+00> : vector<128x128xf32>
      %32 = tpu.matmul %28, %3, %cst {dimension_numbers = #tpu.dot_dimension_numbers<[1], [0], [0], [1], [0, 0, 1, 1], [], []>} : vector<128x128xbf16>, vector<128x128xbf16>, vector<128x128xf32> -> vector<128x128xf32>
      %cst_32 = arith.constant dense<0.000000e+00> : vector<128x128xf32>
      %33 = tpu.matmul %29, %4, %cst_32 {dimension_numbers = #tpu.dot_dimension_numbers<[1], [0], [0], [1], [0, 0, 1, 1], [], []>} : vector<128x128xbf16>, vector<128x128xbf16>, vector<128x128xf32> -> vector<128x128xf32>
      %cst_33 = arith.constant dense<0.000000e+00> : vector<128x128xf32>
      %34 = tpu.matmul %31, %5, %cst_33 {dimension_numbers = #tpu.dot_dimension_numbers<[1], [0], [0], [1], [0, 0, 1, 1], [], []>} : vector<128x128xbf16>, vector<128x128xbf16>, vector<128x128xf32> -> vector<128x128xf32>
      %35 = arith.subf %32, %33 : vector<128x128xf32>
      %36 = arith.subf %34, %32 : vector<128x128xf32>
      %37 = arith.subf %36, %33 : vector<128x128xf32>
      %38 = arith.truncf %35 : vector<128x128xf32> to vector<128x128xbf16>
      %39 = arith.truncf %37 : vector<128x128xf32> to vector<128x128xbf16>
      %40 = arith.addf %35, %37 : vector<128x128xf32>
      %41 = arith.truncf %40 : vector<128x128xf32> to vector<128x128xbf16>
      %cst_34 = arith.constant dense<0.000000e+00> : vector<128x128xf32>
      %42 = tpu.matmul %3, %38, %cst_34 {dimension_numbers = #tpu.dot_dimension_numbers<[1], [0], [0], [1], [0, 0, 1, 1], [], []>} : vector<128x128xbf16>, vector<128x128xbf16>, vector<128x128xf32> -> vector<128x128xf32>
      %cst_35 = arith.constant dense<0.000000e+00> : vector<128x128xf32>
      %43 = tpu.matmul %4, %39, %cst_35 {dimension_numbers = #tpu.dot_dimension_numbers<[1], [0], [0], [1], [0, 0, 1, 1], [], []>} : vector<128x128xbf16>, vector<128x128xbf16>, vector<128x128xf32> -> vector<128x128xf32>
      %cst_36 = arith.constant dense<0.000000e+00> : vector<128x128xf32>
      %44 = tpu.matmul %5, %41, %cst_36 {dimension_numbers = #tpu.dot_dimension_numbers<[1], [0], [0], [1], [0, 0, 1, 1], [], []>} : vector<128x128xbf16>, vector<128x128xbf16>, vector<128x128xf32> -> vector<128x128xf32>
      %45 = arith.subf %42, %43 : vector<128x128xf32>
      %46 = arith.subf %44, %42 : vector<128x128xf32>
      %47 = arith.subf %46, %43 : vector<128x128xf32>
      %48 = arith.mulf %45, %10 : vector<128x128xf32>
      %49 = arith.mulf %47, %12 : vector<128x128xf32>
      %50 = arith.subf %48, %49 : vector<128x128xf32>
      %51 = arith.mulf %45, %12 : vector<128x128xf32>
      %52 = arith.mulf %47, %10 : vector<128x128xf32>
      %53 = arith.addf %51, %52 : vector<128x128xf32>
      %54 = arith.truncf %50 : vector<128x128xf32> to vector<128x128xbf16>
      %55 = arith.truncf %53 : vector<128x128xf32> to vector<128x128xbf16>
      %56 = arith.addf %50, %53 : vector<128x128xf32>
      %57 = arith.truncf %56 : vector<128x128xf32> to vector<128x128xbf16>
      %cst_37 = arith.constant dense<0.000000e+00> : vector<128x128xf32>
      %58 = tpu.matmul %54, %6, %cst_37 {dimension_numbers = #tpu.dot_dimension_numbers<[1], [0], [0], [1], [0, 0, 1, 1], [], []>} : vector<128x128xbf16>, vector<128x128xbf16>, vector<128x128xf32> -> vector<128x128xf32>
      %cst_38 = arith.constant dense<0.000000e+00> : vector<128x128xf32>
      %59 = tpu.matmul %55, %7, %cst_38 {dimension_numbers = #tpu.dot_dimension_numbers<[1], [0], [0], [1], [0, 0, 1, 1], [], []>} : vector<128x128xbf16>, vector<128x128xbf16>, vector<128x128xf32> -> vector<128x128xf32>
      %cst_39 = arith.constant dense<0.000000e+00> : vector<128x128xf32>
      %60 = tpu.matmul %57, %8, %cst_39 {dimension_numbers = #tpu.dot_dimension_numbers<[1], [0], [0], [1], [0, 0, 1, 1], [], []>} : vector<128x128xbf16>, vector<128x128xbf16>, vector<128x128xf32> -> vector<128x128xf32>
      %61 = arith.subf %58, %59 : vector<128x128xf32>
      %62 = arith.subf %60, %58 : vector<128x128xf32>
      %63 = arith.subf %62, %59 : vector<128x128xf32>
      %64 = arith.truncf %61 : vector<128x128xf32> to vector<128x128xbf16>
      %65 = arith.truncf %63 : vector<128x128xf32> to vector<128x128xbf16>
      %66 = arith.addf %61, %63 : vector<128x128xf32>
      %67 = arith.truncf %66 : vector<128x128xf32> to vector<128x128xbf16>
      %cst_40 = arith.constant dense<0.000000e+00> : vector<128x128xf32>
      %68 = tpu.matmul %6, %64, %cst_40 {dimension_numbers = #tpu.dot_dimension_numbers<[1], [0], [0], [1], [0, 0, 1, 1], [], []>} : vector<128x128xbf16>, vector<128x128xbf16>, vector<128x128xf32> -> vector<128x128xf32>
      %cst_41 = arith.constant dense<0.000000e+00> : vector<128x128xf32>
      %69 = tpu.matmul %7, %65, %cst_41 {dimension_numbers = #tpu.dot_dimension_numbers<[1], [0], [0], [1], [0, 0, 1, 1], [], []>} : vector<128x128xbf16>, vector<128x128xbf16>, vector<128x128xf32> -> vector<128x128xf32>
      %cst_42 = arith.constant dense<0.000000e+00> : vector<128x128xf32>
      %70 = tpu.matmul %8, %67, %cst_42 {dimension_numbers = #tpu.dot_dimension_numbers<[1], [0], [0], [1], [0, 0, 1, 1], [], []>} : vector<128x128xbf16>, vector<128x128xbf16>, vector<128x128xf32> -> vector<128x128xf32>
      %71 = arith.subf %68, %69 : vector<128x128xf32>
      %72 = arith.subf %70, %68 : vector<128x128xf32>
      %73 = arith.subf %72, %69 : vector<128x128xf32>
      %74 = arith.mulf %71, %14 : vector<128x128xf32>
      %75 = arith.mulf %73, %16 : vector<128x128xf32>
      %76 = arith.subf %74, %75 : vector<128x128xf32>
      %77 = arith.mulf %71, %16 : vector<128x128xf32>
      %78 = arith.mulf %73, %14 : vector<128x128xf32>
      %79 = arith.addf %77, %78 : vector<128x128xf32>
      %80 = arith.index_cast %arg19 : i32 to index
      %c0_43 = arith.constant 0 : index
      %c0_44 = arith.constant 0 : index
      %81 = vector.load %arg17[%80, %c0_43, %c0_44] : memref<2x128x128xf32, #tpu.memory_space<vmem>>, vector<1x128x128xf32>
      %82 = vector.shape_cast %81 : vector<1x128x128xf32> to vector<128x128xf32>
      %83 = vector.shape_cast %76 : vector<128x128xf32> to vector<1x128x128xf32>
      tpu.vector_store %arg17[%80, %c0_43, %c0_44], %83 {strides = array<i32>} : memref<2x128x128xf32, #tpu.memory_space<vmem>>, vector<1x128x128xf32>,
      %84 = arith.index_cast %arg19 : i32 to index
      %c0_45 = arith.constant 0 : index
      %c0_46 = arith.constant 0 : index
      %85 = vector.load %arg18[%84, %c0_45, %c0_46] : memref<2x128x128xf32, #tpu.memory_space<vmem>>, vector<1x128x128xf32>
      %86 = vector.shape_cast %85 : vector<1x128x128xf32> to vector<128x128xf32>
      %87 = vector.shape_cast %79 : vector<128x128xf32> to vector<1x128x128xf32>
      tpu.vector_store %arg18[%84, %c0_45, %c0_46], %87 {strides = array<i32>} : memref<2x128x128xf32, #tpu.memory_space<vmem>>, vector<1x128x128xf32>,
      %88 = arith.extui %20 : i1 to i32
      %c0_i32_47 = arith.constant 0 : i32
      %89 = arith.cmpi ne, %88, %c0_i32_47 : i32
      scf.if %89 {
        %c0_49 = arith.constant 0 : index
        %92 = arith.index_cast %arg19 : i32 to index
        %c0_50 = arith.constant 0 : index
        %c0_51 = arith.constant 0 : index
        %93 = vector.load %arg14[%c0_49, %92, %c0_50, %c0_51] : memref<1x2x128x128xf32, #tpu.memory_space<vmem>>, vector<1x1x128x128xf32>
        %94 = vector.shape_cast %93 : vector<1x1x128x128xf32> to vector<128x128xf32>
        %95 = vector.shape_cast %76 : vector<128x128xf32> to vector<1x1x128x128xf32>
        tpu.vector_store %arg14[%c0_49, %92, %c0_50, %c0_51], %95 {strides = array<i32>} : memref<1x2x128x128xf32, #tpu.memory_space<vmem>>, vector<1x1x128x128xf32>,
        %c0_52 = arith.constant 0 : index
        %96 = arith.index_cast %arg19 : i32 to index
        %c0_53 = arith.constant 0 : index
        %c0_54 = arith.constant 0 : index
        %97 = vector.load %arg15[%c0_52, %96, %c0_53, %c0_54] : memref<1x2x128x128xf32, #tpu.memory_space<vmem>>, vector<1x1x128x128xf32>
        %98 = vector.shape_cast %97 : vector<1x1x128x128xf32> to vector<128x128xf32>
        %99 = vector.shape_cast %79 : vector<128x128xf32> to vector<1x1x128x128xf32>
        tpu.vector_store %arg15[%c0_52, %96, %c0_53, %c0_54], %99 {strides = array<i32>} : memref<1x2x128x128xf32, #tpu.memory_space<vmem>>, vector<1x1x128x128xf32>,
      } else {
      }
      %90 = arith.extui %17 : i1 to i32
      %c0_i32_48 = arith.constant 0 : i32
      %91 = arith.cmpi ne, %90, %c0_i32_48 : i32
      scf.if %91 {
        %92 = arith.mulf %71, %71 : vector<128x128xf32>
        %93 = arith.mulf %73, %73 : vector<128x128xf32>
        %94 = arith.addf %92, %93 : vector<128x128xf32>
        %95 = arith.index_cast %arg19 : i32 to index
        %c0_49 = arith.constant 0 : index
        %c0_50 = arith.constant 0 : index
        %96 = vector.load %arg16[%95, %c0_49, %c0_50] : memref<2x128x128xf32, #tpu.memory_space<vmem>>, vector<1x128x128xf32>
        %97 = vector.shape_cast %96 : vector<1x128x128xf32> to vector<128x128xf32>
        %98 = vector.shape_cast %94 : vector<128x128xf32> to vector<1x128x128xf32>
        tpu.vector_store %arg16[%95, %c0_49, %c0_50], %98 {strides = array<i32>} : memref<2x128x128xf32, #tpu.memory_space<vmem>>, vector<1x128x128xf32>,
      } else {
      }
    }
    %c2_i32_27 = arith.constant 2 : i32
    return
  }
  func.func @transform_0(%arg0: i32, %arg1: i32) -> (i32, i32) {
    %c0_i32 = arith.constant 0 : i32
    %c0_i32_0 = arith.constant 0 : i32
    %c0_i32_1 = arith.constant 0 : i32
    return %c0_i32, %c0_i32_0 : i32, i32
  }
  func.func @transform_1(%arg0: i32, %arg1: i32) -> (i32, i32) {
    %c0_i32 = arith.constant 0 : i32
    %c0_i32_0 = arith.constant 0 : i32
    %c0_i32_1 = arith.constant 0 : i32
    return %c0_i32, %c0_i32_0 : i32, i32
  }
  func.func @transform_2(%arg0: i32, %arg1: i32) -> (i32, i32) {
    %c0_i32 = arith.constant 0 : i32
    %c0_i32_0 = arith.constant 0 : i32
    %c0_i32_1 = arith.constant 0 : i32
    return %c0_i32, %c0_i32_0 : i32, i32
  }
  func.func @transform_3(%arg0: i32, %arg1: i32) -> (i32, i32) {
    %c0_i32 = arith.constant 0 : i32
    %c0_i32_0 = arith.constant 0 : i32
    %c0_i32_1 = arith.constant 0 : i32
    return %c0_i32, %c0_i32_0 : i32, i32
  }
  func.func @transform_4(%arg0: i32, %arg1: i32) -> (i32, i32) {
    %c0_i32 = arith.constant 0 : i32
    %c0_i32_0 = arith.constant 0 : i32
    %c0_i32_1 = arith.constant 0 : i32
    return %c0_i32, %c0_i32_0 : i32, i32
  }
  func.func @transform_5(%arg0: i32, %arg1: i32) -> (i32, i32) {
    %c0_i32 = arith.constant 0 : i32
    %c0_i32_0 = arith.constant 0 : i32
    %c0_i32_1 = arith.constant 0 : i32
    return %c0_i32, %c0_i32_0 : i32, i32
  }
  func.func @transform_6(%arg0: i32, %arg1: i32) -> (i32, i32, i32) {
    %c0_i32 = arith.constant 0 : i32
    %c0_i32_0 = arith.constant 0 : i32
    %c0_i32_1 = arith.constant 0 : i32
    return %arg1, %c0_i32, %c0_i32_0 : i32, i32, i32
  }
  func.func @transform_7(%arg0: i32, %arg1: i32) -> (i32, i32, i32) {
    %c0_i32 = arith.constant 0 : i32
    %c0_i32_0 = arith.constant 0 : i32
    %c0_i32_1 = arith.constant 0 : i32
    return %arg1, %c0_i32, %c0_i32_0 : i32, i32, i32
  }
  func.func @transform_8(%arg0: i32, %arg1: i32) -> (i32, i32, i32) {
    %c0_i32 = arith.constant 0 : i32
    %c0_i32_0 = arith.constant 0 : i32
    %c0_i32_1 = arith.constant 0 : i32
    return %arg1, %c0_i32, %c0_i32_0 : i32, i32, i32
  }
  func.func @transform_9(%arg0: i32, %arg1: i32) -> (i32, i32, i32) {
    %c0_i32 = arith.constant 0 : i32
    %c0_i32_0 = arith.constant 0 : i32
    %c0_i32_1 = arith.constant 0 : i32
    return %arg1, %c0_i32, %c0_i32_0 : i32, i32, i32
  }
  func.func @transform_10(%arg0: i32, %arg1: i32) -> (i32, i32, i32) {
    %c0_i32 = arith.constant 0 : i32
    %c0_i32_0 = arith.constant 0 : i32
    %c0_i32_1 = arith.constant 0 : i32
    return %arg0, %c0_i32, %c0_i32_0 : i32, i32, i32
  }
  func.func @transform_11(%arg0: i32, %arg1: i32) -> (i32, i32, i32) {
    %c0_i32 = arith.constant 0 : i32
    %c0_i32_0 = arith.constant 0 : i32
    %c0_i32_1 = arith.constant 0 : i32
    return %arg0, %c0_i32, %c0_i32_0 : i32, i32, i32
  }
  func.func @transform_12(%arg0: i32, %arg1: i32) -> (i32, i32, i32, i32) {
    %c1_i32 = arith.constant 1 : i32
    %0 = arith.subi %arg1, %c1_i32 : i32
    %c0_i32 = arith.constant 0 : i32
    %1 = arith.maxsi %0, %c0_i32 : i32
    %c4_i32 = arith.constant 4 : i32
    %2 = arith.minsi %1, %c4_i32 : i32
    %c0_i32_0 = arith.constant 0 : i32
    %c0_i32_1 = arith.constant 0 : i32
    %c0_i32_2 = arith.constant 0 : i32
    return %2, %arg0, %c0_i32_0, %c0_i32_1 : i32, i32, i32, i32
  }
  func.func @transform_13(%arg0: i32, %arg1: i32) -> (i32, i32, i32, i32) {
    %c1_i32 = arith.constant 1 : i32
    %0 = arith.subi %arg1, %c1_i32 : i32
    %c0_i32 = arith.constant 0 : i32
    %1 = arith.maxsi %0, %c0_i32 : i32
    %c4_i32 = arith.constant 4 : i32
    %2 = arith.minsi %1, %c4_i32 : i32
    %c0_i32_0 = arith.constant 0 : i32
    %c0_i32_1 = arith.constant 0 : i32
    %c0_i32_2 = arith.constant 0 : i32
    return %2, %arg0, %c0_i32_0, %c0_i32_1 : i32, i32, i32, i32
  }
  func.func @transform_14(%arg0: i32, %arg1: i32) -> (i32, i32, i32) {
    %c0_i32 = arith.constant 0 : i32
    %c0_i32_0 = arith.constant 0 : i32
    %c0_i32_1 = arith.constant 0 : i32
    return %arg0, %c0_i32, %c0_i32_0 : i32, i32, i32
  }
}

</mosaic_0001>

<llo_original>
// kernel: fourier_dnn_forward.2
$region0: #{fourier_dnn_forward.2}
  #allocation0 [shape = 'u32[]', space=smem, size = 0x4, offset = 0x4, fixed_abs, tag = 'smem constant byte address 0x4 - core index']
  #allocation1 [shape = 'u32[72,128]{1,0:T(1,128)}', space=vmem, size = 0x9000, scoped, tag = 'internal scratch']
  %s0 = inlined_call_operand.vmem [shape: f32[3,8,128], index: 0, kind: input, shape index: {}]
  %s1 = inlined_call_operand.vmem [shape: f32[3,8,128], index: 1, kind: input, shape index: {}]
  %s2 = inlined_call_operand.vmem [shape: f32[3,8,128], index: 2, kind: output, shape index: {0}]
  %s3 = inlined_call_operand.vmem [shape: f32[3,8,128], index: 3, kind: output, shape index: {1}]
  %4 = xla_tuple %s2, %s3
  %s5 = sld [smem:[#allocation0]]
  $region49: #{fourier_dnn_forward.2} parent=0
    _
  %s7 = ssub.s32 1, %s5
  %s8 = scalar_select 0, %s7, %s5
  loop: start=0, step=1, limit=5
  $region2: #{fourier_dnn_forward.2} parent=0 // loop_pre_header
    _
  $region3: #{fourier_dnn_forward.2} parent=0 // loop_header
    %s10 = sphi 0, %s14
    %p11 = scmp.ge.s32.totalorder %s10, 5
    %s20 = sphi 0, %s22
    %s23 = sphi 0, %s20
    %s24 = sphi 0, %s23
    %s40 = sphi 0, %s24
    %s46 = sphi 0, %s48
    %s49 = sphi 0, %s46
    %s50 = sphi 0, %s49
    %s66 = sphi 0, %s50
    %s72 = sphi 0, %s74
    %s75 = sphi 0, %s72
    %s76 = sphi 0, %s75
    %s92 = sphi 0, %s76
    %s98 = sphi 0, %s100
    %s101 = sphi 0, %s98
    %s102 = sphi 0, %s101
    %s118 = sphi 0, %s102
  $region4: #{fourier_dnn_forward.2} parent=0 // loop_header_branch
    %13 = sbr.rel (%p11) target = $region8
  $region5: #{fourier_dnn_forward.2} parent=0 // loop_body
    %s15 = ssub.s32 %s10, 1
    %s16 = ssub.s32 %s10, 2
    %s17 = sadd.s32 %s10, 1
    %s18 = ssub.s32 %s10, %s17
    %p19 = scmp.eq.s32.totalorder %s18, 0
    %s21 = sadd.s32 %s20, 1
    %s22 = scalar_select %p19, %s20, %s21
    %p25 = pneg %p19
    %p26 = scmp.eq.s32.totalorder %s10, 2
    %p27 = por %p25, %p26
    %p28 = scmp.ne.s32.totalorder %s20, %s23
    %p29 = scmp.eq.s32.totalorder %s10, 0
    %p30 = por %p28, %p29
    %p31 = scmp.ne.s32.totalorder %s20, %s23
    %p32 = scmp.eq.s32.totalorder %s15, 2
    %p33 = por %p31, %p32
    %p34 = scmp.ne.s32.totalorder %s23, %s24
    %p35 = scmp.eq.s32.totalorder %s15, 0
    %p36 = por %p34, %p35
    %p37 = scmp.ne.s32.totalorder %s23, %s24
    %p38 = scmp.eq.s32.totalorder %s16, 2
    %p39 = por %p37, %p38
    %p41 = scmp.ne.s32.totalorder %s24, %s40
    %p42 = scmp.eq.s32.totalorder %s16, 0
    %p43 = por %p41, %p42
    %s44 = ssub.s32 %s10, %s17
    %p45 = scmp.eq.s32.totalorder %s44, 0
    %s47 = sadd.s32 %s46, 1
    %s48 = scalar_select %p45, %s46, %s47
    %p51 = pneg %p45
    %p52 = scmp.eq.s32.totalorder %s10, 2
    %p53 = por %p51, %p52
    %p54 = scmp.ne.s32.totalorder %s46, %s49
    %p55 = scmp.eq.s32.totalorder %s10, 0
    %p56 = por %p54, %p55
    %p57 = scmp.ne.s32.totalorder %s46, %s49
    %p58 = scmp.eq.s32.totalorder %s15, 2
    %p59 = por %p57, %p58
    %p60 = scmp.ne.s32.totalorder %s49, %s50
    %p61 = scmp.eq.s32.totalorder %s15, 0
    %p62 = por %p60, %p61
    %p63 = scmp.ne.s32.totalorder %s49, %s50
    %p64 = scmp.eq.s32.totalorder %s16, 2
    %p65 = por %p63, %p64
    %p67 = scmp.ne.s32.totalorder %s50, %s66
    %p68 = scmp.eq.s32.totalorder %s16, 0
    %p69 = por %p67, %p68
    %s70 = ssub.s32 %s10, %s17
    %p71 = scmp.eq.s32.totalorder %s70, 0
    %s73 = sadd.s32 %s72, 1
    %s74 = scalar_select %p71, %s72, %s73
    %p77 = pneg %p71
    %p78 = scmp.eq.s32.totalorder %s10, 2
    %p79 = por %p77, %p78
    %p80 = scmp.ne.s32.totalorder %s72, %s75
    %p81 = scmp.eq.s32.totalorder %s10, 0
    %p82 = por %p80, %p81
    %p83 = scmp.ne.s32.totalorder %s72, %s75
    %p84 = scmp.eq.s32.totalorder %s15, 2
    %p85 = por %p83, %p84
    %p86 = scmp.ne.s32.totalorder %s75, %s76
    %p87 = scmp.eq.s32.totalorder %s15, 0
    %p88 = por %p86, %p87
    %p89 = scmp.ne.s32.totalorder %s75, %s76
    %p90 = scmp.eq.s32.totalorder %s16, 2
    %p91 = por %p89, %p90
    %p93 = scmp.ne.s32.totalorder %s76, %s92
    %p94 = scmp.eq.s32.totalorder %s16, 0
    %p95 = por %p93, %p94
    %s96 = ssub.s32 %s10, %s17
    %p97 = scmp.eq.s32.totalorder %s96, 0
    %s99 = sadd.s32 %s98, 1
    %s100 = scalar_select %p97, %s98, %s99
    %p103 = pneg %p97
    %p104 = scmp.eq.s32.totalorder %s10, 2
    %p105 = por %p103, %p104
    %p106 = scmp.ne.s32.totalorder %s98, %s101
    %p107 = scmp.eq.s32.totalorder %s10, 0
    %p108 = por %p106, %p107
    %p109 = scmp.ne.s32.totalorder %s98, %s101
    %p110 = scmp.eq.s32.totalorder %s15, 2
    %p111 = por %p109, %p110
    %p112 = scmp.ne.s32.totalorder %s101, %s102
    %p113 = scmp.eq.s32.totalorder %s15, 0
    %p114 = por %p112, %p113
    %p115 = scmp.ne.s32.totalorder %s101, %s102
    %p116 = scmp.eq.s32.totalorder %s16, 2
    %p117 = por %p115, %p116
    %p119 = scmp.ne.s32.totalorder %s102, %s118
    %p120 = scmp.eq.s32.totalorder %s16, 0
    %p121 = por %p119, %p120
    %p122 = scmp.le.s32.totalorder 1, %s10
    %p123 = scmp.lt.s32.totalorder %s10, 4
    %p124 = pnand %p122, %p123
    %p125 = pneg %p124
    // Predicated region
    $region9: #{fourier_dnn_forward.2} parent=5 // pred_check
      _
    $region10: #{fourier_dnn_forward.2} parent=5 // pred_check_branch
      %127 = sbr.rel (%p124) target = $region12
    $region11: #{fourier_dnn_forward.2} parent=5 // pred_region
      %s128 = ssub.s32 %s10, 1
    $region12: #{fourier_dnn_forward.2} parent=5 // pred_fallthru
      _
    %p129 = scmp.lt.s32.totalorder %s10, 3
    // Predicated region
    $region13: #{fourier_dnn_forward.2} parent=5 // pred_check
      %p130 = pneg %p129
    $region14: #{fourier_dnn_forward.2} parent=5 // pred_check_branch
      %132 = sbr.rel (%p130) target = $region16
    $region15: #{fourier_dnn_forward.2} parent=5 // pred_region
      // Predicated region
      $region17: #{fourier_dnn_forward.2} parent=15 // pred_check
        %p133 = pneg %p30
      $region18: #{fourier_dnn_forward.2} parent=15 // pred_check_branch
        %135 = sbr.rel (%p133) target = $region20
      $region19: #{fourier_dnn_forward.2} parent=15 // pred_region
        %p136 = scmp.lt.s32.totalorder %s10, 2
        %s137 = scalar_select %p136, %s10, 2
        %s138 = smul.addr %s137, 8
        %s139 = scalar_lea.vmem %s0, %s138
      $region20: #{fourier_dnn_forward.2} parent=15 // pred_fallthru
        _
      // Predicated region
      $region21: #{fourier_dnn_forward.2} parent=15 // pred_check
        %p140 = pneg %p56
      $region22: #{fourier_dnn_forward.2} parent=15 // pred_check_branch
        %142 = sbr.rel (%p140) target = $region24
      $region23: #{fourier_dnn_forward.2} parent=15 // pred_region
        %p143 = scmp.lt.s32.totalorder %s10, 2
        %s144 = scalar_select %p143, %s10, 2
        %s145 = smul.addr %s144, 8
        %s146 = scalar_lea.vmem %s1, %s145
      $region24: #{fourier_dnn_forward.2} parent=15 // pred_fallthru
        _
    $region16: #{fourier_dnn_forward.2} parent=5 // pred_fallthru
      _
    %p147 = scmp.le.s32.totalorder 1, %s10
    %p148 = scmp.lt.s32.totalorder %s10, 4
    %p149 = pnand %p147, %p148
    %p150 = pneg %p149
    // Predicated region
    $region25: #{fourier_dnn_forward.2} parent=5 // pred_check
      _
    $region26: #{fourier_dnn_forward.2} parent=5 // pred_check_branch
      %152 = sbr.rel (%p149) target = $region28
    $region27: #{fourier_dnn_forward.2} parent=5 // pred_region
      %s153 = ssub.s32 %s10, 1
      %p154 = scmp.lt.s32.totalorder %s15, 2
      %s155 = scalar_select %p154, %s15, 2
      %s156 = smul.addr %s155, 8
      %s157 = scalar_lea.vmem %s0, %s156
      %p158 = pneg %p36
      %p159 = pneg %p33
      %p160 = scmp.lt.s32.totalorder %s15, 2
      %s161 = scalar_select %p160, %s15, 2
      %s162 = smul.addr %s161, 8
      %s163 = scalar_lea.vmem %s1, %s162
      %p164 = pneg %p62
      %p165 = pneg %p59
      %p166 = pneg %p88
      %p167 = pneg %p85
      %p168 = scmp.lt.s32.totalorder %s15, 2
      %s169 = scalar_select %p168, %s15, 2
      %s170 = smul.addr %s169, 8
      %s171 = scalar_lea.vmem %s2, %s170
      %p172 = pneg %p114
      %p173 = pneg %p111
      %p174 = scmp.lt.s32.totalorder %s15, 2
      %s175 = scalar_select %p174, %s15, 2
      %s176 = smul.addr %s175, 8
      %s177 = scalar_lea.vmem %s3, %s176
      %p178 = scmp.lt.s32.totalorder %s15, 2
      %s179 = scalar_select %p178, %s15, 2
      %s180 = smul.addr %s179, 8
      %s181 = scalar_lea.vmem %s0, %s180
      %p182 = scmp.lt.s32.totalorder %s15, 2
      %s183 = scalar_select %p182, %s15, 2
      %s184 = smul.addr %s183, 8
      %s185 = scalar_lea.vmem %s1, %s184
      %p186 = scmp.lt.s32.totalorder %s15, 2
      %s187 = scalar_select %p186, %s15, 2
      %s188 = smul.addr %s187, 8
      %s189 = scalar_lea.vmem %s2, %s188
      %p190 = scmp.lt.s32.totalorder %s15, 2
      %s191 = scalar_select %p190, %s15, 2
      %s192 = smul.addr %s191, 8
      %s193 = scalar_lea.vmem %s3, %s192
      %v194 = vld [vmem:[%s181] sm:$0xff]
      %v195 = vld [vmem:[%s185] sm:$0xff]
      %v196 = vsub.f32 0.0, %v194
      %v197 = vmul.f32 %v196, 1.442695
      %v198 = vpow.pop %v197
      %v199 = vadd.f32 %v198, 1.0
      %v200 = vrcp.pop %v199
      %v201 = vmul.f32 %v199, %v200
      %v202 = vsub.f32 1.0, %v201
      %v203 = vmul.f32 %v200, %v202
      %v204 = vadd.f32 %v200, %v203
      %vm205 = vweird.f32 %v199
      %vm206 = vweird.f32 %v200
      %vm207 = vmor %vm205, %vm206
      %v208 = vsel %vm207, %v200, %v204
      %v209 = vand.u32 2147483647, %v199
      %vm210 = vcmp.eq.f32.partialorder %v209, 8.507059e+37
      %v211 = vand.u32 %v199, 2147483648
      %v212 = vor.u32 1.1754944e-38, %v211
      %v213 = vsel %vm210, %v212, %v208
      %v214 = vmul.f32 6.2831855, %v213
      %v215 = vand.u32 2147483647, %v214
      %vm216 = vcmp.le.f32.partialorder %v215, 0.7853982
      %vm217 = vcmp.lt.s32.totalorder %v214, 0
      %v218 = vand.u32 %v214, 2139095040
      %v219 = vshrl.u32 %v218, 23
      %v220 = vsub.s32 %v219, 127
      %v221 = vand.u32 2147483647, %v214
      %v222 = vand.u32 %v221, 8388607
      %v223 = vor.u32 %v222, 8388608
      %v224 = vsub.s32 0, %v223
      %v225 = vadd.s32 %v220, 1
      %vm226 = vcmp.gt.s32.totalorder %v225, 0
      %v227 = vsel %vm226, %v225, 0
      %v228 = vshrl.u32 %v227, 5
      %v229 = vand.u32 %v227, 31
      %v230 = vsub.s32 32, %v229
      %v231 = vshrl.u32 683565275, %v230
      %v232 = vshll.u32 683565275, %v229
      %v233 = vshrl.u32 2475754826, %v230
      %v234 = vor.u32 %v232, %v233
      %v235 = vshll.u32 2475754826, %v229
      %v236 = vshrl.u32 2131351028, %v230
      %v237 = vor.u32 %v235, %v236
      %v238 = vshll.u32 2131351028, %v229
      %v239 = vshrl.u32 2102212464, %v230
      %v240 = vor.u32 %v238, %v239
      %v241 = vshll.u32 2102212464, %v229
      %v242 = vshrl.u32 920167782, %v230
      %v243 = vor.u32 %v241, %v242
      %v244 = vshll.u32 920167782, %v229
      %v245 = vshrl.u32 1326507024, %v230
      %v246 = vor.u32 %v244, %v245
      %vm247 = vcmp.lt.s32.totalorder %v228, 1
      %vm248 = vcmp.lt.s32.totalorder %v228, 2
      %vm249 = vcmp.lt.s32.totalorder %v228, 3
      %vm250 = vcmp.lt.s32.totalorder %v228, 4
      %v251 = vsel %vm247, %v231, %v234
      %v252 = vsel %vm250, %v240, 2102212464
      %v253 = vsel %vm249, %v237, %v252
      %v254 = vsel %vm248, %v251, %v253
      %v255 = vsel %vm247, %v234, %v237
      %v256 = vsel %vm250, %v243, 920167782
      %v257 = vsel %vm249, %v240, %v256
      %v258 = vsel %vm248, %v255, %v257
      %v259 = vsel %vm247, %v237, %v240
      %v260 = vsel %vm250, %v246, 1326507024
      %v261 = vsel %vm249, %v243, %v260
      %v262 = vsel %vm248, %v259, %v261
      %v263 = vshll.u32 %v223, 8
      %v264 = vand.u32 %v263, 65535
      %v265 = vshrl.u32 %v263, 16
      %v266 = vand.u32 %v262, 65535
      %v267 = vshrl.u32 %v262, 16
      %v268 = vmul.u32 %v264, %v266
      %v269 = vmul.u32 %v264, %v267
      %v270 = vmul.u32 %v265, %v266
      %v271 = vmul.u32 %v265, %v267
      %v272 = vshll.u32 %v269, 16
      %v273 = vshrl.u32 %v269, 16
      %v274 = vshll.u32 %v270, 16
      %v275 = vshrl.u32 %v270, 16
      %vm276 = vc.u32 %v268, %v272
      %v277 = vsel %vm276, 1, 0
      %v278 = vadd.s32 %v268, %v272
      %v279 = vadd.s32 %v271, %v277
      %vm280 = vc.u32 %v278, %v274
      %v281 = vsel %vm280, 1, 0
      %v282 = vadd.s32 %v278, %v274
      %v283 = vadd.s32 %v279, %v281
      %v284 = vadd.s32 %v283, %v273
      %v285 = vadd.s32 %v284, %v275
      %v286 = vand.u32 %v263, 65535
      %v287 = vshrl.u32 %v263, 16
      %v288 = vand.u32 %v258, 65535
      %v289 = vshrl.u32 %v258, 16
      %v290 = vmul.u32 %v286, %v288
      %v291 = vmul.u32 %v286, %v289
      %v292 = vmul.u32 %v287, %v288
      %v293 = vmul.u32 %v287, %v289
      %v294 = vshll.u32 %v291, 16
      %v295 = vshrl.u32 %v291, 16
      %v296 = vshll.u32 %v292, 16
      %v297 = vshrl.u32 %v292, 16
      %vm298 = vc.u32 %v290, %v294
      %v299 = vsel %vm298, 1, 0
      %v300 = vadd.s32 %v290, %v294
      %v301 = vadd.s32 %v293, %v299
      %vm302 = vc.u32 %v300, %v296
      %v303 = vsel %vm302, 1, 0
      %v304 = vadd.s32 %v300, %v296
      %v305 = vadd.s32 %v301, %v303
      %v306 = vadd.s32 %v305, %v295
      %v307 = vadd.s32 %v306, %v297
      %v308 = vmul.u32 %v263, %v254
      %v309 = vadd.s32 %v285, %v304
      %vm310 = vc.u32 %v285, %v304
      %v311 = vadd.s32 %v307, 1
      %v312 = vsel %vm310, %v311, %v307
      %v313 = vadd.s32 %v308, %v312
      %v314 = vadd.s32 %v313, 536870912
      %v315 = vshrl.u32 %v314, 30
      %v316 = vshll.u32 %v315, 30
      %v317 = vsub.s32 %v313, %v316
      %vm318 = vcmp.lt.s32.totalorder %v317, 0
      %v319 = vsub.s32 0, %v317
      %v320 = vsel %vm318, %v319, %v317
      %v321 = vclz %v320
      %v322 = vsub.s32 %v321, 2
      %vm323 = vcmp.gt.s32.totalorder 0, %v322
      %v324 = vsel %vm323, 0, %v322
      %v325 = vsub.s32 32, %v324
      %v326 = vshll.u32 %v317, %v324
      %v327 = vshrl.u32 %v309, %v325
      %v328 = vor.u32 %v326, %v327
      %v329 = vsub.s32 4294967266, %v324
      %v330 = vadd.s32 %v329, 127
      %v331 = vshll.u32 %v330, 23
      %v332 = vor.u32 4788187, %v331
      %v333 = vand.u32 2147483647, %v332
      %v335 = vcvt.s32.f32 %v328
      %v336 = vmul.f32 %v335, %v333
      %v337 = vxor.u32 %v336, 2147483648
      %v338 = vsel %vm217, %v337, %v336
      %v339 = vsub.s32 4, %v315
      %v340 = vsel %vm217, %v339, %v315
      %v341 = vsel %vm216, %v214, %v338
      %v342 = vsel %vm216, 0, %v340
      %v343 = vmul.f32 %v341, %v341
      %v344 = vmul.f32 %v343, -0.001358992
      %v345 = vadd.f32 %v344, 0.041655596
      %v346 = vmul.f32 %v343, %v345
      %v347 = vadd.f32 %v346, -0.4999988
      %v348 = vmul.f32 %v343, %v347
      %v349 = vadd.f32 1.0, %v348
      %v350 = vmul.f32 %v341, %v341
      %v351 = vmul.f32 %v350, -0.00019511016
      %v352 = vadd.f32 %v351, 0.008332121
      %v353 = vmul.f32 %v350, %v352
      %v354 = vadd.f32 %v353, -0.16666654
      %v355 = vmul.f32 %v350, %v354
      %v356 = vadd.f32 %v355, 1.0
      %v357 = vmul.f32 %v356, %v341
      %vm358 = vweird.f32 %v214
      %v359 = vand.u32 %v342, 3
      %vm360 = vcmp.lt.s32.totalorder %v359, 2
      %vm361 = vcmp.eq.s32.totalorder %v359, 0
      %v362 = vxor.u32 %v357, 2147483648
      %v363 = vsel %vm361, %v349, %v362
      %vm364 = vcmp.eq.s32.totalorder %v359, 2
      %v365 = vxor.u32 %v349, 2147483648
      %v366 = vsel %vm364, %v365, %v357
      %v367 = vsel %vm360, %v363, %v366
      %v368 = vsel %vm358, nan, %v367
      %v369 = vand.u32 2147483647, %v214
      %vm370 = vcmp.le.f32.partialorder %v369, 0.7853982
      %vm371 = vcmp.lt.s32.totalorder %v214, 0
      %v372 = vand.u32 %v214, 2139095040
      %v373 = vshrl.u32 %v372, 23
      %v374 = vsub.s32 %v373, 127
      %v375 = vand.u32 2147483647, %v214
      %v376 = vand.u32 %v375, 8388607
      %v377 = vor.u32 %v376, 8388608
      %v378 = vsub.s32 0, %v377
      %v379 = vadd.s32 %v374, 1
      %vm380 = vcmp.gt.s32.totalorder %v379, 0
      %v381 = vsel %vm380, %v379, 0
      %v382 = vshrl.u32 %v381, 5
      %v383 = vand.u32 %v381, 31
      %v384 = vsub.s32 32, %v383
      %v385 = vshrl.u32 683565275, %v384
      %v386 = vshll.u32 683565275, %v383
      %v387 = vshrl.u32 2475754826, %v384
      %v388 = vor.u32 %v386, %v387
      %v389 = vshll.u32 2475754826, %v383
      %v390 = vshrl.u32 2131351028, %v384
      %v391 = vor.u32 %v389, %v390
      %v392 = vshll.u32 2131351028, %v383
      %v393 = vshrl.u32 2102212464, %v384
      %v394 = vor.u32 %v392, %v393
      %v395 = vshll.u32 2102212464, %v383
      %v396 = vshrl.u32 920167782, %v384
      %v397 = vor.u32 %v395, %v396
      %v398 = vshll.u32 920167782, %v383
      %v399 = vshrl.u32 1326507024, %v384
      %v400 = vor.u32 %v398, %v399
      %vm401 = vcmp.lt.s32.totalorder %v382, 1
      %vm402 = vcmp.lt.s32.totalorder %v382, 2
      %vm403 = vcmp.lt.s32.totalorder %v382, 3
      %vm404 = vcmp.lt.s32.totalorder %v382, 4
      %v405 = vsel %vm401, %v385, %v388
      %v406 = vsel %vm404, %v394, 2102212464
      %v407 = vsel %vm403, %v391, %v406
      %v408 = vsel %vm402, %v405, %v407
      %v409 = vsel %vm401, %v388, %v391
      %v410 = vsel %vm404, %v397, 920167782
      %v411 = vsel %vm403, %v394, %v410
      %v412 = vsel %vm402, %v409, %v411
      %v413 = vsel %vm401, %v391, %v394
      %v414 = vsel %vm404, %v400, 1326507024
      %v415 = vsel %vm403, %v397, %v414
      %v416 = vsel %vm402, %v413, %v415
      %v417 = vshll.u32 %v377, 8
      %v418 = vand.u32 %v417, 65535
      %v419 = vshrl.u32 %v417, 16
      %v420 = vand.u32 %v416, 65535
      %v421 = vshrl.u32 %v416, 16
      %v422 = vmul.u32 %v418, %v420
      %v423 = vmul.u32 %v418, %v421
      %v424 = vmul.u32 %v419, %v420
      %v425 = vmul.u32 %v419, %v421
      %v426 = vshll.u32 %v423, 16
      %v427 = vshrl.u32 %v423, 16
      %v428 = vshll.u32 %v424, 16
      %v429 = vshrl.u32 %v424, 16
      %vm430 = vc.u32 %v422, %v426
      %v431 = vsel %vm430, 1, 0
      %v432 = vadd.s32 %v422, %v426
      %v433 = vadd.s32 %v425, %v431
      %vm434 = vc.u32 %v432, %v428
      %v435 = vsel %vm434, 1, 0
      %v436 = vadd.s32 %v432, %v428
      %v437 = vadd.s32 %v433, %v435
      %v438 = vadd.s32 %v437, %v427
      %v439 = vadd.s32 %v438, %v429
      %v440 = vand.u32 %v417, 65535
      %v441 = vshrl.u32 %v417, 16
      %v442 = vand.u32 %v412, 65535
      %v443 = vshrl.u32 %v412, 16
      %v444 = vmul.u32 %v440, %v442
      %v445 = vmul.u32 %v440, %v443
      %v446 = vmul.u32 %v441, %v442
      %v447 = vmul.u32 %v441, %v443
      %v448 = vshll.u32 %v445, 16
      %v449 = vshrl.u32 %v445, 16
      %v450 = vshll.u32 %v446, 16
      %v451 = vshrl.u32 %v446, 16
      %vm452 = vc.u32 %v444, %v448
      %v453 = vsel %vm452, 1, 0
      %v454 = vadd.s32 %v444, %v448
      %v455 = vadd.s32 %v447, %v453
      %vm456 = vc.u32 %v454, %v450
      %v457 = vsel %vm456, 1, 0
      %v458 = vadd.s32 %v454, %v450
      %v459 = vadd.s32 %v455, %v457
      %v460 = vadd.s32 %v459, %v449
      %v461 = vadd.s32 %v460, %v451
      %v462 = vmul.u32 %v417, %v408
      %v463 = vadd.s32 %v439, %v458
      %vm464 = vc.u32 %v439, %v458
      %v465 = vadd.s32 %v461, 1
      %v466 = vsel %vm464, %v465, %v461
      %v467 = vadd.s32 %v462, %v466
      %v468 = vadd.s32 %v467, 536870912
      %v469 = vshrl.u32 %v468, 30
      %v470 = vshll.u32 %v469, 30
      %v471 = vsub.s32 %v467, %v470
      %vm472 = vcmp.lt.s32.totalorder %v471, 0
      %v473 = vsub.s32 0, %v471
      %v474 = vsel %vm472, %v473, %v471
      %v475 = vclz %v474
      %v476 = vsub.s32 %v475, 2
      %vm477 = vcmp.gt.s32.totalorder 0, %v476
      %v478 = vsel %vm477, 0, %v476
      %v479 = vsub.s32 32, %v478
      %v480 = vshll.u32 %v471, %v478
      %v481 = vshrl.u32 %v463, %v479
      %v482 = vor.u32 %v480, %v481
      %v483 = vsub.s32 4294967266, %v478
      %v484 = vadd.s32 %v483, 127
      %v485 = vshll.u32 %v484, 23
      %v486 = vor.u32 4788187, %v485
      %v487 = vand.u32 2147483647, %v486
      %v489 = vcvt.s32.f32 %v482
      %v490 = vmul.f32 %v489, %v487
      %v491 = vxor.u32 %v490, 2147483648
      %v492 = vsel %vm371, %v491, %v490
      %v493 = vsub.s32 4, %v469
      %v494 = vsel %vm371, %v493, %v469
      %v495 = vsel %vm370, %v214, %v492
      %v496 = vsel %vm370, 0, %v494
      %v497 = vmul.f32 %v495, %v495
      %v498 = vmul.f32 %v497, -0.001358992
      %v499 = vadd.f32 %v498, 0.041655596
      %v500 = vmul.f32 %v497, %v499
      %v501 = vadd.f32 %v500, -0.4999988
      %v502 = vmul.f32 %v497, %v501
      %v503 = vadd.f32 1.0, %v502
      %v504 = vmul.f32 %v495, %v495
      %v505 = vmul.f32 %v504, -0.00019511016
      %v506 = vadd.f32 %v505, 0.008332121
      %v507 = vmul.f32 %v504, %v506
      %v508 = vadd.f32 %v507, -0.16666654
      %v509 = vmul.f32 %v504, %v508
      %v510 = vadd.f32 %v509, 1.0
      %v511 = vmul.f32 %v510, %v495
      %vm512 = vweird.f32 %v214
      %v513 = vadd.s32 %v496, 3
      %v514 = vand.u32 %v513, 3
      %vm515 = vcmp.lt.s32.totalorder %v514, 2
      %vm516 = vcmp.eq.s32.totalorder %v514, 0
      %v517 = vxor.u32 %v511, 2147483648
      %v518 = vsel %vm516, %v503, %v517
      %vm519 = vcmp.eq.s32.totalorder %v514, 2
      %v520 = vxor.u32 %v503, 2147483648
      %v521 = vsel %vm519, %v520, %v511
      %v522 = vsel %vm515, %v518, %v521
      %v523 = vsel %vm512, nan, %v522
      %v524 = vmax.f32 %v195, 0.0
      %525 = vmax.xlane.f32.xlu0 %v524
      %v526 = vpop.xlane.xlu0 %525
      %v527 = vrot.slane %v526, 4
      %v528 = vmax.f32 %v526, %v527
      %v529 = vrot.slane %v528, 2
      %v530 = vmax.f32 %v528, %v529
      %v531 = vrot.slane %v530, 1
      %v532 = vmax.f32 %v530, %v531
      %s533 = vtos %v532
      %s534 = smax.f32 %s533, 1e-20
      %v535 = vstv %s534
      %v536 = vrcp.pop %v535
      %v537 = vmul.f32 %v535, %v536
      %v538 = vsub.f32 1.0, %v537
      %v539 = vmul.f32 %v536, %v538
      %v540 = vadd.f32 %v536, %v539
      %vm541 = vweird.f32 %v535
      %vm542 = vweird.f32 %v536
      %vm543 = vmor %vm541, %vm542
      %v544 = vsel %vm543, %v536, %v540
      %v545 = vand.u32 2147483647, %v535
      %vm546 = vcmp.eq.f32.partialorder %v545, 8.507059e+37
      %v547 = vand.u32 %v535, 2147483648
      %v548 = vor.u32 1.1754944e-38, %v547
      %v549 = vsel %vm546, %v548, %v544
      %v550 = vmul.f32 %v524, %v549
      %v551 = vmul.f32 %v550, %v368
      %552 = vst [vmem:[%s189] sm:$0xff] %v551
      %v553 = vmul.f32 %v550, %v523
      %554 = vst [vmem:[%s193] sm:$0xff] %v553
      %p555 = scmp.lt.s32.totalorder %s15, 2
      %s556 = scalar_select %p555, %s15, 2
      %s557 = smul.addr %s556, 8
      %s558 = scalar_lea.vmem %s2, %s557
      %p559 = scmp.lt.s32.totalorder %s15, 2
      %s560 = scalar_select %p559, %s15, 2
      %s561 = smul.addr %s560, 8
      %s562 = scalar_lea.vmem %s3, %s561
      // Predicated region
      $region29: #{fourier_dnn_forward.2} parent=27 // pred_check
        %p563 = pneg %p85
      $region30: #{fourier_dnn_forward.2} parent=27 // pred_check_branch
        %565 = sbr.rel (%p563) target = $region32
      $region31: #{fourier_dnn_forward.2} parent=27 // pred_region
        _
      $region32: #{fourier_dnn_forward.2} parent=27 // pred_fallthru
        _
      // Predicated region
      $region33: #{fourier_dnn_forward.2} parent=27 // pred_check
        %p566 = pneg %p111
      $region34: #{fourier_dnn_forward.2} parent=27 // pred_check_branch
        %568 = sbr.rel (%p566) target = $region36
      $region35: #{fourier_dnn_forward.2} parent=27 // pred_region
        _
      $region36: #{fourier_dnn_forward.2} parent=27 // pred_fallthru
        _
    $region28: #{fourier_dnn_forward.2} parent=5 // pred_fallthru
      _
    %p569 = scmp.le.s32.totalorder 2, %s10
    // Predicated region
    $region37: #{fourier_dnn_forward.2} parent=5 // pred_check
      %p570 = pneg %p569
    $region38: #{fourier_dnn_forward.2} parent=5 // pred_check_branch
      %572 = sbr.rel (%p570) target = $region40
    $region39: #{fourier_dnn_forward.2} parent=5 // pred_region
      %s573 = ssub.s32 %s10, 2
      // Predicated region
      $region41: #{fourier_dnn_forward.2} parent=39 // pred_check
        %p574 = pneg %p91
      $region42: #{fourier_dnn_forward.2} parent=39 // pred_check_branch
        %576 = sbr.rel (%p574) target = $region44
      $region43: #{fourier_dnn_forward.2} parent=39 // pred_region
        %p577 = scmp.lt.s32.totalorder %s16, 2
        %s578 = scalar_select %p577, %s16, 2
        %s579 = smul.addr %s578, 8
        %s580 = scalar_lea.vmem %s2, %s579
      $region44: #{fourier_dnn_forward.2} parent=39 // pred_fallthru
        _
      // Predicated region
      $region45: #{fourier_dnn_forward.2} parent=39 // pred_check
        %p581 = pneg %p117
      $region46: #{fourier_dnn_forward.2} parent=39 // pred_check_branch
        %583 = sbr.rel (%p581) target = $region48
      $region47: #{fourier_dnn_forward.2} parent=39 // pred_region
        %p584 = scmp.lt.s32.totalorder %s16, 2
        %s585 = scalar_select %p584, %s16, 2
        %s586 = smul.addr %s585, 8
        %s587 = scalar_lea.vmem %s3, %s586
      $region48: #{fourier_dnn_forward.2} parent=39 // pred_fallthru
        _
    $region40: #{fourier_dnn_forward.2} parent=5 // pred_fallthru
      _
  $region6: #{fourier_dnn_forward.2} parent=0 // loop_footer
    %s14 = sadd.s32 1, %s10
  $region7: #{fourier_dnn_forward.2} parent=0 // loop_footer_branch
    %9 = sbr.rel target = $region3
  $region8: #{fourier_dnn_forward.2} parent=0 // loop_exit
    _

// kernel: fourier_dnn_forward.3
$region0: #{fourier_dnn_forward.3}
  #allocation0 [shape = 'u32[]', space=smem, size = 0x4, offset = 0x4, fixed_abs, tag = 'smem constant byte address 0x4 - core index']
  #allocation1 [shape = 'u32[72,128]{1,0:T(1,128)}', space=vmem, size = 0x9000, scoped, tag = 'internal scratch']
  #allocation2 [shape = 'f32[2,128,128]{2,1,0:T(8,128)}', space=vmem, size = 0x20000, scoped, tag = 'scratch operand']
  #allocation3 [shape = 'f32[2,128,128]{2,1,0:T(8,128)}', space=vmem, size = 0x20000, scoped, tag = 'scratch operand']
  %s0 = inlined_call_operand.vmem [shape: bf16[128,128], index: 0, kind: input, shape index: {}]
  %s1 = inlined_call_operand.vmem [shape: bf16[128,128], index: 1, kind: input, shape index: {}]
  %s2 = inlined_call_operand.vmem [shape: bf16[128,128], index: 2, kind: input, shape index: {}]
  %s3 = inlined_call_operand.vmem [shape: bf16[128,128], index: 3, kind: input, shape index: {}]
  %s4 = inlined_call_operand.vmem [shape: bf16[128,128], index: 4, kind: input, shape index: {}]
  %s5 = inlined_call_operand.vmem [shape: bf16[128,128], index: 5, kind: input, shape index: {}]
  %s6 = inlined_call_operand.vmem [shape: f32[7,128,128], index: 6, kind: input, shape index: {}]
  %s7 = inlined_call_operand.vmem [shape: f32[7,128,128], index: 7, kind: input, shape index: {}]
  %s8 = inlined_call_operand.vmem [shape: f32[7,128,128], index: 8, kind: input, shape index: {}]
  %s9 = inlined_call_operand.vmem [shape: f32[7,128,128], index: 9, kind: input, shape index: {}]
  %s10 = inlined_call_operand.vmem [shape: f32[2,128,128], index: 10, kind: input, shape index: {}]
  %s11 = inlined_call_operand.vmem [shape: f32[2,128,128], index: 11, kind: input, shape index: {}]
  %s12 = inlined_call_operand.vmem [shape: f32[5,2,128,128], index: 12, kind: output, shape index: {0}]
  %s13 = inlined_call_operand.vmem [shape: f32[5,2,128,128], index: 13, kind: output, shape index: {1}]
  %s14 = inlined_call_operand.vmem [shape: f32[2,128,128], index: 14, kind: output, shape index: {2}]
  %15 = xla_tuple %s12, %s13, %s14
  %s16 = sld [smem:[#allocation0]]
  $region116: #{fourier_dnn_forward.3} parent=0
    _
  %s18 = ssub.s32 1, %s16
  %s19 = scalar_select 0, %s18, %s16
  loop: start=0, step=1, limit=9
  $region2: #{fourier_dnn_forward.3} parent=0 // loop_pre_header
    _
  $region3: #{fourier_dnn_forward.3} parent=0 // loop_header
    %s21 = sphi 0, %s25
    %p22 = scmp.ge.s32.totalorder %s21, 9
    %s28 = sphi 0, %s40
    %s29 = sphi 0, %s36
    %s30 = sphi 0, %s28
    %s31 = sphi 0, %s29
    %s32 = sphi 0, %s30
    %s33 = sphi 0, %s31
    %s41 = sphi 0, %s41
    %s43 = sphi 0, %s41
    %s44 = sphi 0, %s43
    %s58 = sphi 0, %s44
    %s62 = sphi 0, %s62
    %s64 = sphi 0, %s62
    %s65 = sphi 0, %s64
    %s79 = sphi 0, %s65
    %s83 = sphi 0, %s83
    %s85 = sphi 0, %s83
    %s86 = sphi 0, %s85
    %s100 = sphi 0, %s86
    %s104 = sphi 0, %s104
    %s106 = sphi 0, %s104
    %s107 = sphi 0, %s106
    %s121 = sphi 0, %s107
    %s125 = sphi 0, %s125
    %s127 = sphi 0, %s125
    %s128 = sphi 0, %s127
    %s142 = sphi 0, %s128
    %s146 = sphi 0, %s146
    %s148 = sphi 0, %s146
    %s149 = sphi 0, %s148
    %s163 = sphi 0, %s149
    %s169 = sphi 0, %s171
    %s172 = sphi 0, %s169
    %s173 = sphi 0, %s172
    %s189 = sphi 0, %s173
    %s195 = sphi 0, %s197
    %s198 = sphi 0, %s195
    %s199 = sphi 0, %s198
    %s215 = sphi 0, %s199
    %s221 = sphi 0, %s223
    %s224 = sphi 0, %s221
    %s225 = sphi 0, %s224
    %s241 = sphi 0, %s225
    %s247 = sphi 0, %s249
    %s250 = sphi 0, %s247
    %s251 = sphi 0, %s250
    %s267 = sphi 0, %s251
    %s273 = sphi 0, %s275
    %s276 = sphi 0, %s273
    %s277 = sphi 0, %s276
    %s293 = sphi 0, %s277
    %s299 = sphi 0, %s301
    %s302 = sphi 0, %s299
    %s303 = sphi 0, %s302
    %s319 = sphi 0, %s303
    %s337 = sphi 0, %s339
    %s340 = sphi 0, %s337
    %s341 = sphi 0, %s340
    %s357 = sphi 0, %s341
    %s375 = sphi 0, %s377
    %s378 = sphi 0, %s375
    %s379 = sphi 0, %s378
    %s395 = sphi 0, %s379
    %s401 = sphi 0, %s403
    %s404 = sphi 0, %s401
    %s405 = sphi 0, %s404
    %s421 = sphi 0, %s405
  $region4: #{fourier_dnn_forward.3} parent=0 // loop_header_branch
    %24 = sbr.rel (%p22) target = $region8
  $region5: #{fourier_dnn_forward.3} parent=0 // loop_body
    %s26 = ssub.s32 %s21, 1
    %s27 = ssub.s32 %s21, 2
    %s34 = sadd.s32 1, %s29
    %p35 = scmp.ge.s32.totalorder %s34, 7
    %s36 = scalar_select %p35, 0, %s34
    %s37 = sadd.s32 1, %s28
    %s38 = scalar_select %p35, %s37, %s28
    %p39 = scmp.ge.s32.totalorder %s38, 1
    %s40 = scalar_select %p39, 0, %s38
    %s42 = sadd.s32 %s41, 1
    %p45 = scmp.eq.s32.totalorder %s21, 6
    %p46 = scmp.ne.s32.totalorder %s41, %s43
    %p47 = scmp.eq.s32.totalorder %s21, 0
    %p48 = por %p46, %p47
    %p49 = scmp.ne.s32.totalorder %s41, %s43
    %p50 = scmp.eq.s32.totalorder %s26, 6
    %p51 = por %p49, %p50
    %p52 = scmp.ne.s32.totalorder %s43, %s44
    %p53 = scmp.eq.s32.totalorder %s26, 0
    %p54 = por %p52, %p53
    %p55 = scmp.ne.s32.totalorder %s43, %s44
    %p56 = scmp.eq.s32.totalorder %s27, 6
    %p57 = por %p55, %p56
    %p59 = scmp.ne.s32.totalorder %s44, %s58
    %p60 = scmp.eq.s32.totalorder %s27, 0
    %p61 = por %p59, %p60
    %s63 = sadd.s32 %s62, 1
    %p66 = scmp.eq.s32.totalorder %s21, 6
    %p67 = scmp.ne.s32.totalorder %s62, %s64
    %p68 = scmp.eq.s32.totalorder %s21, 0
    %p69 = por %p67, %p68
    %p70 = scmp.ne.s32.totalorder %s62, %s64
    %p71 = scmp.eq.s32.totalorder %s26, 6
    %p72 = por %p70, %p71
    %p73 = scmp.ne.s32.totalorder %s64, %s65
    %p74 = scmp.eq.s32.totalorder %s26, 0
    %p75 = por %p73, %p74
    %p76 = scmp.ne.s32.totalorder %s64, %s65
    %p77 = scmp.eq.s32.totalorder %s27, 6
    %p78 = por %p76, %p77
    %p80 = scmp.ne.s32.totalorder %s65, %s79
    %p81 = scmp.eq.s32.totalorder %s27, 0
    %p82 = por %p80, %p81
    %s84 = sadd.s32 %s83, 1
    %p87 = scmp.eq.s32.totalorder %s21, 6
    %p88 = scmp.ne.s32.totalorder %s83, %s85
    %p89 = scmp.eq.s32.totalorder %s21, 0
    %p90 = por %p88, %p89
    %p91 = scmp.ne.s32.totalorder %s83, %s85
    %p92 = scmp.eq.s32.totalorder %s26, 6
    %p93 = por %p91, %p92
    %p94 = scmp.ne.s32.totalorder %s85, %s86
    %p95 = scmp.eq.s32.totalorder %s26, 0
    %p96 = por %p94, %p95
    %p97 = scmp.ne.s32.totalorder %s85, %s86
    %p98 = scmp.eq.s32.totalorder %s27, 6
    %p99 = por %p97, %p98
    %p101 = scmp.ne.s32.totalorder %s86, %s100
    %p102 = scmp.eq.s32.totalorder %s27, 0
    %p103 = por %p101, %p102
    %s105 = sadd.s32 %s104, 1
    %p108 = scmp.eq.s32.totalorder %s21, 6
    %p109 = scmp.ne.s32.totalorder %s104, %s106
    %p110 = scmp.eq.s32.totalorder %s21, 0
    %p111 = por %p109, %p110
    %p112 = scmp.ne.s32.totalorder %s104, %s106
    %p113 = scmp.eq.s32.totalorder %s26, 6
    %p114 = por %p112, %p113
    %p115 = scmp.ne.s32.totalorder %s106, %s107
    %p116 = scmp.eq.s32.totalorder %s26, 0
    %p117 = por %p115, %p116
    %p118 = scmp.ne.s32.totalorder %s106, %s107
    %p119 = scmp.eq.s32.totalorder %s27, 6
    %p120 = por %p118, %p119
    %p122 = scmp.ne.s32.totalorder %s107, %s121
    %p123 = scmp.eq.s32.totalorder %s27, 0
    %p124 = por %p122, %p123
    %s126 = sadd.s32 %s125, 1
    %p129 = scmp.eq.s32.totalorder %s21, 6
    %p130 = scmp.ne.s32.totalorder %s125, %s127
    %p131 = scmp.eq.s32.totalorder %s21, 0
    %p132 = por %p130, %p131
    %p133 = scmp.ne.s32.totalorder %s125, %s127
    %p134 = scmp.eq.s32.totalorder %s26, 6
    %p135 = por %p133, %p134
    %p136 = scmp.ne.s32.totalorder %s127, %s128
    %p137 = scmp.eq.s32.totalorder %s26, 0
    %p138 = por %p136, %p137
    %p139 = scmp.ne.s32.totalorder %s127, %s128
    %p140 = scmp.eq.s32.totalorder %s27, 6
    %p141 = por %p139, %p140
    %p143 = scmp.ne.s32.totalorder %s128, %s142
    %p144 = scmp.eq.s32.totalorder %s27, 0
    %p145 = por %p143, %p144
    %s147 = sadd.s32 %s146, 1
    %p150 = scmp.eq.s32.totalorder %s21, 6
    %p151 = scmp.ne.s32.totalorder %s146, %s148
    %p152 = scmp.eq.s32.totalorder %s21, 0
    %p153 = por %p151, %p152
    %p154 = scmp.ne.s32.totalorder %s146, %s148
    %p155 = scmp.eq.s32.totalorder %s26, 6
    %p156 = por %p154, %p155
    %p157 = scmp.ne.s32.totalorder %s148, %s149
    %p158 = scmp.eq.s32.totalorder %s26, 0
    %p159 = por %p157, %p158
    %p160 = scmp.ne.s32.totalorder %s148, %s149
    %p161 = scmp.eq.s32.totalorder %s27, 6
    %p162 = por %p160, %p161
    %p164 = scmp.ne.s32.totalorder %s149, %s163
    %p165 = scmp.eq.s32.totalorder %s27, 0
    %p166 = por %p164, %p165
    %s167 = ssub.s32 %s29, %s36
    %p168 = scmp.eq.s32.totalorder %s167, 0
    %s170 = sadd.s32 %s169, 1
    %s171 = scalar_select %p168, %s169, %s170
    %p174 = pneg %p168
    %p175 = scmp.eq.s32.totalorder %s21, 6
    %p176 = por %p174, %p175
    %p177 = scmp.ne.s32.totalorder %s169, %s172
    %p178 = scmp.eq.s32.totalorder %s21, 0
    %p179 = por %p177, %p178
    %p180 = scmp.ne.s32.totalorder %s169, %s172
    %p181 = scmp.eq.s32.totalorder %s26, 6
    %p182 = por %p180, %p181
    %p183 = scmp.ne.s32.totalorder %s172, %s173
    %p184 = scmp.eq.s32.totalorder %s26, 0
    %p185 = por %p183, %p184
    %p186 = scmp.ne.s32.totalorder %s172, %s173
    %p187 = scmp.eq.s32.totalorder %s27, 6
    %p188 = por %p186, %p187
    %p190 = scmp.ne.s32.totalorder %s173, %s189
    %p191 = scmp.eq.s32.totalorder %s27, 0
    %p192 = por %p190, %p191
    %s193 = ssub.s32 %s29, %s36
    %p194 = scmp.eq.s32.totalorder %s193, 0
    %s196 = sadd.s32 %s195, 1
    %s197 = scalar_select %p194, %s195, %s196
    %p200 = pneg %p194
    %p201 = scmp.eq.s32.totalorder %s21, 6
    %p202 = por %p200, %p201
    %p203 = scmp.ne.s32.totalorder %s195, %s198
    %p204 = scmp.eq.s32.totalorder %s21, 0
    %p205 = por %p203, %p204
    %p206 = scmp.ne.s32.totalorder %s195, %s198
    %p207 = scmp.eq.s32.totalorder %s26, 6
    %p208 = por %p206, %p207
    %p209 = scmp.ne.s32.totalorder %s198, %s199
    %p210 = scmp.eq.s32.totalorder %s26, 0
    %p211 = por %p209, %p210
    %p212 = scmp.ne.s32.totalorder %s198, %s199
    %p213 = scmp.eq.s32.totalorder %s27, 6
    %p214 = por %p212, %p213
    %p216 = scmp.ne.s32.totalorder %s199, %s215
    %p217 = scmp.eq.s32.totalorder %s27, 0
    %p218 = por %p216, %p217
    %s219 = ssub.s32 %s29, %s36
    %p220 = scmp.eq.s32.totalorder %s219, 0
    %s222 = sadd.s32 %s221, 1
    %s223 = scalar_select %p220, %s221, %s222
    %p226 = pneg %p220
    %p227 = scmp.eq.s32.totalorder %s21, 6
    %p228 = por %p226, %p227
    %p229 = scmp.ne.s32.totalorder %s221, %s224
    %p230 = scmp.eq.s32.totalorder %s21, 0
    %p231 = por %p229, %p230
    %p232 = scmp.ne.s32.totalorder %s221, %s224
    %p233 = scmp.eq.s32.totalorder %s26, 6
    %p234 = por %p232, %p233
    %p235 = scmp.ne.s32.totalorder %s224, %s225
    %p236 = scmp.eq.s32.totalorder %s26, 0
    %p237 = por %p235, %p236
    %p238 = scmp.ne.s32.totalorder %s224, %s225
    %p239 = scmp.eq.s32.totalorder %s27, 6
    %p240 = por %p238, %p239
    %p242 = scmp.ne.s32.totalorder %s225, %s241
    %p243 = scmp.eq.s32.totalorder %s27, 0
    %p244 = por %p242, %p243
    %s245 = ssub.s32 %s29, %s36
    %p246 = scmp.eq.s32.totalorder %s245, 0
    %s248 = sadd.s32 %s247, 1
    %s249 = scalar_select %p246, %s247, %s248
    %p252 = pneg %p246
    %p253 = scmp.eq.s32.totalorder %s21, 6
    %p254 = por %p252, %p253
    %p255 = scmp.ne.s32.totalorder %s247, %s250
    %p256 = scmp.eq.s32.totalorder %s21, 0
    %p257 = por %p255, %p256
    %p258 = scmp.ne.s32.totalorder %s247, %s250
    %p259 = scmp.eq.s32.totalorder %s26, 6
    %p260 = por %p258, %p259
    %p261 = scmp.ne.s32.totalorder %s250, %s251
    %p262 = scmp.eq.s32.totalorder %s26, 0
    %p263 = por %p261, %p262
    %p264 = scmp.ne.s32.totalorder %s250, %s251
    %p265 = scmp.eq.s32.totalorder %s27, 6
    %p266 = por %p264, %p265
    %p268 = scmp.ne.s32.totalorder %s251, %s267
    %p269 = scmp.eq.s32.totalorder %s27, 0
    %p270 = por %p268, %p269
    %s271 = ssub.s32 %s28, %s40
    %p272 = scmp.eq.s32.totalorder %s271, 0
    %s274 = sadd.s32 %s273, 1
    %s275 = scalar_select %p272, %s273, %s274
    %p278 = pneg %p272
    %p279 = scmp.eq.s32.totalorder %s21, 6
    %p280 = por %p278, %p279
    %p281 = scmp.ne.s32.totalorder %s273, %s276
    %p282 = scmp.eq.s32.totalorder %s21, 0
    %p283 = por %p281, %p282
    %p284 = scmp.ne.s32.totalorder %s273, %s276
    %p285 = scmp.eq.s32.totalorder %s26, 6
    %p286 = por %p284, %p285
    %p287 = scmp.ne.s32.totalorder %s276, %s277
    %p288 = scmp.eq.s32.totalorder %s26, 0
    %p289 = por %p287, %p288
    %p290 = scmp.ne.s32.totalorder %s276, %s277
    %p291 = scmp.eq.s32.totalorder %s27, 6
    %p292 = por %p290, %p291
    %p294 = scmp.ne.s32.totalorder %s277, %s293
    %p295 = scmp.eq.s32.totalorder %s27, 0
    %p296 = por %p294, %p295
    %s297 = ssub.s32 %s28, %s40
    %p298 = scmp.eq.s32.totalorder %s297, 0
    %s300 = sadd.s32 %s299, 1
    %s301 = scalar_select %p298, %s299, %s300
    %p304 = pneg %p298
    %p305 = scmp.eq.s32.totalorder %s21, 6
    %p306 = por %p304, %p305
    %p307 = scmp.ne.s32.totalorder %s299, %s302
    %p308 = scmp.eq.s32.totalorder %s21, 0
    %p309 = por %p307, %p308
    %p310 = scmp.ne.s32.totalorder %s299, %s302
    %p311 = scmp.eq.s32.totalorder %s26, 6
    %p312 = por %p310, %p311
    %p313 = scmp.ne.s32.totalorder %s302, %s303
    %p314 = scmp.eq.s32.totalorder %s26, 0
    %p315 = por %p313, %p314
    %p316 = scmp.ne.s32.totalorder %s302, %s303
    %p317 = scmp.eq.s32.totalorder %s27, 6
    %p318 = por %p316, %p317
    %p320 = scmp.ne.s32.totalorder %s303, %s319
    %p321 = scmp.eq.s32.totalorder %s27, 0
    %p322 = por %p320, %p321
    %s323 = ssub.s32 %s29, 1
    %p324 = scmp.gt.s32.totalorder %s323, 0
    %s325 = scalar_select %p324, %s323, 0
    %p326 = scmp.lt.s32.totalorder %s325, 4
    %s327 = scalar_select %p326, %s325, 4
    %s328 = ssub.s32 %s36, 1
    %p329 = scmp.gt.s32.totalorder %s328, 0
    %s330 = scalar_select %p329, %s328, 0
    %p331 = scmp.lt.s32.totalorder %s330, 4
    %s332 = scalar_select %p331, %s330, 4
    %s333 = ssub.s32 %s327, %s332
    %s334 = ssub.s32 %s28, %s40
    %s335 = sor.u32 %s333, %s334
    %p336 = scmp.eq.s32.totalorder %s335, 0
    %s338 = sadd.s32 %s337, 1
    %s339 = scalar_select %p336, %s337, %s338
    %p342 = pneg %p336
    %p343 = scmp.eq.s32.totalorder %s21, 6
    %p344 = por %p342, %p343
    %p345 = scmp.ne.s32.totalorder %s337, %s340
    %p346 = scmp.eq.s32.totalorder %s21, 0
    %p347 = por %p345, %p346
    %p348 = scmp.ne.s32.totalorder %s337, %s340
    %p349 = scmp.eq.s32.totalorder %s26, 6
    %p350 = por %p348, %p349
    %p351 = scmp.ne.s32.totalorder %s340, %s341
    %p352 = scmp.eq.s32.totalorder %s26, 0
    %p353 = por %p351, %p352
    %p354 = scmp.ne.s32.totalorder %s340, %s341
    %p355 = scmp.eq.s32.totalorder %s27, 6
    %p356 = por %p354, %p355
    %p358 = scmp.ne.s32.totalorder %s341, %s357
    %p359 = scmp.eq.s32.totalorder %s27, 0
    %p360 = por %p358, %p359
    %s361 = ssub.s32 %s29, 1
    %p362 = scmp.gt.s32.totalorder %s361, 0
    %s363 = scalar_select %p362, %s361, 0
    %p364 = scmp.lt.s32.totalorder %s363, 4
    %s365 = scalar_select %p364, %s363, 4
    %s366 = ssub.s32 %s36, 1
    %p367 = scmp.gt.s32.totalorder %s366, 0
    %s368 = scalar_select %p367, %s366, 0
    %p369 = scmp.lt.s32.totalorder %s368, 4
    %s370 = scalar_select %p369, %s368, 4
    %s371 = ssub.s32 %s365, %s370
    %s372 = ssub.s32 %s28, %s40
    %s373 = sor.u32 %s371, %s372
    %p374 = scmp.eq.s32.totalorder %s373, 0
    %s376 = sadd.s32 %s375, 1
    %s377 = scalar_select %p374, %s375, %s376
    %p380 = pneg %p374
    %p381 = scmp.eq.s32.totalorder %s21, 6
    %p382 = por %p380, %p381
    %p383 = scmp.ne.s32.totalorder %s375, %s378
    %p384 = scmp.eq.s32.totalorder %s21, 0
    %p385 = por %p383, %p384
    %p386 = scmp.ne.s32.totalorder %s375, %s378
    %p387 = scmp.eq.s32.totalorder %s26, 6
    %p388 = por %p386, %p387
    %p389 = scmp.ne.s32.totalorder %s378, %s379
    %p390 = scmp.eq.s32.totalorder %s26, 0
    %p391 = por %p389, %p390
    %p392 = scmp.ne.s32.totalorder %s378, %s379
    %p393 = scmp.eq.s32.totalorder %s27, 6
    %p394 = por %p392, %p393
    %p396 = scmp.ne.s32.totalorder %s379, %s395
    %p397 = scmp.eq.s32.totalorder %s27, 0
    %p398 = por %p396, %p397
    %s399 = ssub.s32 %s28, %s40
    %p400 = scmp.eq.s32.totalorder %s399, 0
    %s402 = sadd.s32 %s401, 1
    %s403 = scalar_select %p400, %s401, %s402
    %p406 = pneg %p400
    %p407 = scmp.eq.s32.totalorder %s21, 6
    %p408 = por %p406, %p407
    %p409 = scmp.ne.s32.totalorder %s401, %s404
    %p410 = scmp.eq.s32.totalorder %s21, 0
    %p411 = por %p409, %p410
    %p412 = scmp.ne.s32.totalorder %s401, %s404
    %p413 = scmp.eq.s32.totalorder %s26, 6
    %p414 = por %p412, %p413
    %p415 = scmp.ne.s32.totalorder %s404, %s405
    %p416 = scmp.eq.s32.totalorder %s26, 0
    %p417 = por %p415, %p416
    %p418 = scmp.ne.s32.totalorder %s404, %s405
    %p419 = scmp.eq.s32.totalorder %s27, 6
    %p420 = por %p418, %p419
    %p422 = scmp.ne.s32.totalorder %s405, %s421
    %p423 = scmp.eq.s32.totalorder %s27, 0
    %p424 = por %p422, %p423
    %p425 = scmp.le.s32.totalorder 1, %s21
    %p426 = scmp.lt.s32.totalorder %s21, 8
    %p427 = pnand %p425, %p426
    %p428 = pneg %p427
    // Predicated region
    $region9: #{fourier_dnn_forward.3} parent=5 // pred_check
      _
    $region10: #{fourier_dnn_forward.3} parent=5 // pred_check_branch
      %430 = sbr.rel (%p427) target = $region12
    $region11: #{fourier_dnn_forward.3} parent=5 // pred_region
      %s431 = ssub.s32 %s21, 1
      // Predicated region
      $region13: #{fourier_dnn_forward.3} parent=11 // pred_check
        %p432 = pneg %p54
      $region14: #{fourier_dnn_forward.3} parent=11 // pred_check_branch
        %434 = sbr.rel (%p432) target = $region16
      $region15: #{fourier_dnn_forward.3} parent=11 // pred_region
        _
      $region16: #{fourier_dnn_forward.3} parent=11 // pred_fallthru
        _
      // Predicated region
      $region17: #{fourier_dnn_forward.3} parent=11 // pred_check
        %p435 = pneg %p75
      $region18: #{fourier_dnn_forward.3} parent=11 // pred_check_branch
        %437 = sbr.rel (%p435) target = $region20
      $region19: #{fourier_dnn_forward.3} parent=11 // pred_region
        _
      $region20: #{fourier_dnn_forward.3} parent=11 // pred_fallthru
        _
      // Predicated region
      $region21: #{fourier_dnn_forward.3} parent=11 // pred_check
        %p438 = pneg %p96
      $region22: #{fourier_dnn_forward.3} parent=11 // pred_check_branch
        %440 = sbr.rel (%p438) target = $region24
      $region23: #{fourier_dnn_forward.3} parent=11 // pred_region
        _
      $region24: #{fourier_dnn_forward.3} parent=11 // pred_fallthru
        _
      // Predicated region
      $region25: #{fourier_dnn_forward.3} parent=11 // pred_check
        %p441 = pneg %p117
      $region26: #{fourier_dnn_forward.3} parent=11 // pred_check_branch
        %443 = sbr.rel (%p441) target = $region28
      $region27: #{fourier_dnn_forward.3} parent=11 // pred_region
        _
      $region28: #{fourier_dnn_forward.3} parent=11 // pred_fallthru
        _
      // Predicated region
      $region29: #{fourier_dnn_forward.3} parent=11 // pred_check
        %p444 = pneg %p138
      $region30: #{fourier_dnn_forward.3} parent=11 // pred_check_branch
        %446 = sbr.rel (%p444) target = $region32
      $region31: #{fourier_dnn_forward.3} parent=11 // pred_region
        _
      $region32: #{fourier_dnn_forward.3} parent=11 // pred_fallthru
        _
      // Predicated region
      $region33: #{fourier_dnn_forward.3} parent=11 // pred_check
        %p447 = pneg %p159
      $region34: #{fourier_dnn_forward.3} parent=11 // pred_check_branch
        %449 = sbr.rel (%p447) target = $region36
      $region35: #{fourier_dnn_forward.3} parent=11 // pred_region
        _
      $region36: #{fourier_dnn_forward.3} parent=11 // pred_fallthru
        _
      // Predicated region
      $region37: #{fourier_dnn_forward.3} parent=11 // pred_check
        %p450 = pneg %p289
      $region38: #{fourier_dnn_forward.3} parent=11 // pred_check_branch
        %452 = sbr.rel (%p450) target = $region40
      $region39: #{fourier_dnn_forward.3} parent=11 // pred_region
        %s453 = smul.u32 2, %s30
        %p454 = scmp.lt.s32.totalorder %s453, 1
        %s455 = scalar_select %p454, %s453, 1
        %s456 = smul.addr %s455, 16
        %s457 = smul.addr %s456, 8
        %s458 = scalar_lea.vmem %s10, %s457
        %s459 = smul.u32 2, %s30
      $region40: #{fourier_dnn_forward.3} parent=11 // pred_fallthru
        _
      // Predicated region
      $region41: #{fourier_dnn_forward.3} parent=11 // pred_check
        %p460 = pneg %p315
      $region42: #{fourier_dnn_forward.3} parent=11 // pred_check_branch
        %462 = sbr.rel (%p460) target = $region44
      $region43: #{fourier_dnn_forward.3} parent=11 // pred_region
        %s463 = smul.u32 2, %s30
        %p464 = scmp.lt.s32.totalorder %s463, 1
        %s465 = scalar_select %p464, %s463, 1
        %s466 = smul.addr %s465, 16
        %s467 = smul.addr %s466, 8
        %s468 = scalar_lea.vmem %s11, %s467
        %s469 = smul.u32 2, %s30
      $region44: #{fourier_dnn_forward.3} parent=11 // pred_fallthru
        _
    $region12: #{fourier_dnn_forward.3} parent=5 // pred_fallthru
      _
    %p470 = scmp.lt.s32.totalorder %s21, 7
    // Predicated region
    $region45: #{fourier_dnn_forward.3} parent=5 // pred_check
      %p471 = pneg %p470
    $region46: #{fourier_dnn_forward.3} parent=5 // pred_check_branch
      %473 = sbr.rel (%p471) target = $region48
    $region47: #{fourier_dnn_forward.3} parent=5 // pred_region
      // Predicated region
      $region49: #{fourier_dnn_forward.3} parent=47 // pred_check
        %p474 = pneg %p179
      $region50: #{fourier_dnn_forward.3} parent=47 // pred_check_branch
        %476 = sbr.rel (%p474) target = $region52
      $region51: #{fourier_dnn_forward.3} parent=47 // pred_region
        %p477 = scmp.lt.s32.totalorder %s29, 6
        %s478 = scalar_select %p477, %s29, 6
        %s479 = smul.addr %s478, 16
        %s480 = smul.addr %s479, 8
        %s481 = scalar_lea.vmem %s6, %s480
      $region52: #{fourier_dnn_forward.3} parent=47 // pred_fallthru
        _
      // Predicated region
      $region53: #{fourier_dnn_forward.3} parent=47 // pred_check
        %p482 = pneg %p205
      $region54: #{fourier_dnn_forward.3} parent=47 // pred_check_branch
        %484 = sbr.rel (%p482) target = $region56
      $region55: #{fourier_dnn_forward.3} parent=47 // pred_region
        %p485 = scmp.lt.s32.totalorder %s29, 6
        %s486 = scalar_select %p485, %s29, 6
        %s487 = smul.addr %s486, 16
        %s488 = smul.addr %s487, 8
        %s489 = scalar_lea.vmem %s7, %s488
      $region56: #{fourier_dnn_forward.3} parent=47 // pred_fallthru
        _
      // Predicated region
      $region57: #{fourier_dnn_forward.3} parent=47 // pred_check
        %p490 = pneg %p231
      $region58: #{fourier_dnn_forward.3} parent=47 // pred_check_branch
        %492 = sbr.rel (%p490) target = $region60
      $region59: #{fourier_dnn_forward.3} parent=47 // pred_region
        %p493 = scmp.lt.s32.totalorder %s29, 6
        %s494 = scalar_select %p493, %s29, 6
        %s495 = smul.addr %s494, 16
        %s496 = smul.addr %s495, 8
        %s497 = scalar_lea.vmem %s8, %s496
      $region60: #{fourier_dnn_forward.3} parent=47 // pred_fallthru
        _
      // Predicated region
      $region61: #{fourier_dnn_forward.3} parent=47 // pred_check
        %p498 = pneg %p257
      $region62: #{fourier_dnn_forward.3} parent=47 // pred_check_branch
        %500 = sbr.rel (%p498) target = $region64
      $region63: #{fourier_dnn_forward.3} parent=47 // pred_region
        %p501 = scmp.lt.s32.totalorder %s29, 6
        %s502 = scalar_select %p501, %s29, 6
        %s503 = smul.addr %s502, 16
        %s504 = smul.addr %s503, 8
        %s505 = scalar_lea.vmem %s9, %s504
      $region64: #{fourier_dnn_forward.3} parent=47 // pred_fallthru
        _
    $region48: #{fourier_dnn_forward.3} parent=5 // pred_fallthru
      _
    %p506 = scmp.le.s32.totalorder 1, %s21
    %p507 = scmp.lt.s32.totalorder %s21, 8
    %p508 = pnand %p506, %p507
    %p509 = pneg %p508
    // Predicated region
    $region65: #{fourier_dnn_forward.3} parent=5 // pred_check
      _
    $region66: #{fourier_dnn_forward.3} parent=5 // pred_check_branch
      %511 = sbr.rel (%p508) target = $region68
    $region67: #{fourier_dnn_forward.3} parent=5 // pred_region
      %s512 = ssub.s32 %s21, 1
      %p513 = pneg %p54
      %p514 = pneg %p51
      %p515 = pneg %p75
      %p516 = pneg %p72
      %p517 = pneg %p96
      %p518 = pneg %p93
      %p519 = pneg %p117
      %p520 = pneg %p114
      %p521 = pneg %p138
      %p522 = pneg %p135
      %p523 = pneg %p159
      %p524 = pneg %p156
      %p525 = scmp.lt.s32.totalorder %s31, 6
      %s526 = scalar_select %p525, %s31, 6
      %s527 = smul.addr %s526, 16
      %s528 = smul.addr %s527, 8
      %s529 = scalar_lea.vmem %s6, %s528
      %p530 = pneg %p185
      %p531 = pneg %p182
      %p532 = scmp.lt.s32.totalorder %s31, 6
      %s533 = scalar_select %p532, %s31, 6
      %s534 = smul.addr %s533, 16
      %s535 = smul.addr %s534, 8
      %s536 = scalar_lea.vmem %s7, %s535
      %p537 = pneg %p211
      %p538 = pneg %p208
      %p539 = scmp.lt.s32.totalorder %s31, 6
      %s540 = scalar_select %p539, %s31, 6
      %s541 = smul.addr %s540, 16
      %s542 = smul.addr %s541, 8
      %s543 = scalar_lea.vmem %s8, %s542
      %p544 = pneg %p237
      %p545 = pneg %p234
      %p546 = scmp.lt.s32.totalorder %s31, 6
      %s547 = scalar_select %p546, %s31, 6
      %s548 = smul.addr %s547, 16
      %s549 = smul.addr %s548, 8
      %s550 = scalar_lea.vmem %s9, %s549
      %p551 = pneg %p263
      %p552 = pneg %p260
      %s553 = smul.u32 2, %s30
      %p554 = scmp.lt.s32.totalorder %s553, 1
      %s555 = scalar_select %p554, %s553, 1
      %s556 = smul.addr %s555, 16
      %s557 = smul.addr %s556, 8
      %s558 = scalar_lea.vmem %s10, %s557
      %p559 = pneg %p289
      %p560 = pneg %p286
      %s561 = smul.u32 2, %s30
      %p562 = scmp.lt.s32.totalorder %s561, 1
      %s563 = scalar_select %p562, %s561, 1
      %s564 = smul.addr %s563, 16
      %s565 = smul.addr %s564, 8
      %s566 = scalar_lea.vmem %s11, %s565
      %p567 = pneg %p315
      %p568 = pneg %p312
      %p569 = pneg %p353
      %p570 = pneg %p350
      %s571 = ssub.s32 %s31, 1
      %p572 = scmp.gt.s32.totalorder %s571, 0
      %s573 = scalar_select %p572, %s571, 0
      %p574 = scmp.lt.s32.totalorder %s573, 4
      %s575 = scalar_select %p574, %s573, 4
      %s576 = smul.u32 2, %s30
      %p577 = scmp.lt.s32.totalorder %s575, 4
      %s578 = scalar_select %p577, %s575, 4
      %p579 = scmp.lt.s32.totalorder %s576, 1
      %s580 = scalar_select %p579, %s576, 1
      %s581 = smul.addr %s580, 16
      %s582 = smul.addr %s578, 32
      %s583 = sadd.s32 %s581, %s582
      %s584 = smul.addr %s583, 8
      %s585 = scalar_lea.vmem %s12, %s584
      %p586 = pneg %p391
      %p587 = pneg %p388
      %s588 = ssub.s32 %s31, 1
      %p589 = scmp.gt.s32.totalorder %s588, 0
      %s590 = scalar_select %p589, %s588, 0
      %p591 = scmp.lt.s32.totalorder %s590, 4
      %s592 = scalar_select %p591, %s590, 4
      %s593 = smul.u32 2, %s30
      %p594 = scmp.lt.s32.totalorder %s592, 4
      %s595 = scalar_select %p594, %s592, 4
      %p596 = scmp.lt.s32.totalorder %s593, 1
      %s597 = scalar_select %p596, %s593, 1
      %s598 = smul.addr %s597, 16
      %s599 = smul.addr %s595, 32
      %s600 = sadd.s32 %s598, %s599
      %s601 = smul.addr %s600, 8
      %s602 = scalar_lea.vmem %s13, %s601
      %p603 = pneg %p417
      %p604 = pneg %p414
      %s605 = smul.u32 2, %s30
      %p606 = scmp.lt.s32.totalorder %s605, 1
      %s607 = scalar_select %p606, %s605, 1
      %s608 = smul.addr %s607, 16
      %s609 = smul.addr %s608, 8
      %s610 = scalar_lea.vmem %s14, %s609
      %p611 = scmp.lt.s32.totalorder %s31, 6
      %s612 = scalar_select %p611, %s31, 6
      %s613 = smul.addr %s612, 16
      %s614 = smul.addr %s613, 8
      %s615 = scalar_lea.vmem %s6, %s614
      %p616 = scmp.lt.s32.totalorder %s31, 6
      %s617 = scalar_select %p616, %s31, 6
      %s618 = smul.addr %s617, 16
      %s619 = smul.addr %s618, 8
      %s620 = scalar_lea.vmem %s7, %s619
      %p621 = scmp.lt.s32.totalorder %s31, 6
      %s622 = scalar_select %p621, %s31, 6
      %s623 = smul.addr %s622, 16
      %s624 = smul.addr %s623, 8
      %s625 = scalar_lea.vmem %s8, %s624
      %p626 = scmp.lt.s32.totalorder %s31, 6
      %s627 = scalar_select %p626, %s31, 6
      %s628 = smul.addr %s627, 16
      %s629 = smul.addr %s628, 8
      %s630 = scalar_lea.vmem %s9, %s629
      %s631 = smul.u32 2, %s30
      %p632 = scmp.lt.s32.totalorder %s631, 1
      %s633 = scalar_select %p632, %s631, 1
      %s634 = smul.addr %s633, 16
      %s635 = smul.addr %s634, 8
      %s636 = scalar_lea.vmem %s10, %s635
      %s637 = smul.u32 2, %s30
      %s638 = smul.u32 2, %s30
      %p639 = scmp.lt.s32.totalorder %s638, 1
      %s640 = scalar_select %p639, %s638, 1
      %s641 = smul.addr %s640, 16
      %s642 = smul.addr %s641, 8
      %s643 = scalar_lea.vmem %s11, %s642
      %s644 = smul.u32 2, %s30
      %s645 = ssub.s32 %s31, 1
      %p646 = scmp.gt.s32.totalorder %s645, 0
      %s647 = scalar_select %p646, %s645, 0
      %p648 = scmp.lt.s32.totalorder %s647, 4
      %s649 = scalar_select %p648, %s647, 4
      %s650 = smul.u32 2, %s30
      %p651 = scmp.lt.s32.totalorder %s649, 4
      %s652 = scalar_select %p651, %s649, 4
      %p653 = scmp.lt.s32.totalorder %s650, 1
      %s654 = scalar_select %p653, %s650, 1
      %s655 = smul.addr %s654, 16
      %s656 = smul.addr %s652, 32
      %s657 = sadd.s32 %s655, %s656
      %s658 = smul.addr %s657, 8
      %s659 = scalar_lea.vmem %s12, %s658
      %s660 = ssub.s32 %s31, 1
      %p661 = scmp.gt.s32.totalorder %s660, 0
      %s662 = scalar_select %p661, %s660, 0
      %p663 = scmp.lt.s32.totalorder %s662, 4
      %s664 = scalar_select %p663, %s662, 4
      %s665 = smul.u32 2, %s30
      %s666 = ssub.s32 %s31, 1
      %p667 = scmp.gt.s32.totalorder %s666, 0
      %s668 = scalar_select %p667, %s666, 0
      %p669 = scmp.lt.s32.totalorder %s668, 4
      %s670 = scalar_select %p669, %s668, 4
      %s671 = smul.u32 2, %s30
      %p672 = scmp.lt.s32.totalorder %s670, 4
      %s673 = scalar_select %p672, %s670, 4
      %p674 = scmp.lt.s32.totalorder %s671, 1
      %s675 = scalar_select %p674, %s671, 1
      %s676 = smul.addr %s675, 16
      %s677 = smul.addr %s673, 32
      %s678 = sadd.s32 %s676, %s677
      %s679 = smul.addr %s678, 8
      %s680 = scalar_lea.vmem %s13, %s679
      %s681 = ssub.s32 %s31, 1
      %p682 = scmp.gt.s32.totalorder %s681, 0
      %s683 = scalar_select %p682, %s681, 0
      %p684 = scmp.lt.s32.totalorder %s683, 4
      %s685 = scalar_select %p684, %s683, 4
      %s686 = smul.u32 2, %s30
      %s687 = smul.u32 2, %s30
      %p688 = scmp.lt.s32.totalorder %s687, 1
      %s689 = scalar_select %p688, %s687, 1
      %s690 = smul.addr %s689, 16
      %s691 = smul.addr %s690, 8
      %s692 = scalar_lea.vmem %s14, %s691
      %s693 = smul.u32 2, %s30
      %p694 = scmp.eq.s32.totalorder %s31, 0
      // Predicated region
      $region69: #{fourier_dnn_forward.3} parent=67 // pred_check
        %p695 = pneg %p694
      $region70: #{fourier_dnn_forward.3} parent=67 // pred_check_branch
        %697 = sbr.rel (%p695) target = $region72
      $region71: #{fourier_dnn_forward.3} parent=67 // pred_region
        %v698 = vld [vmem:[%s636] sm:$0xff]
        %v699 = vld [vmem:[%s636 + $0x8] sm:$0xff]
        %v700 = vld [vmem:[%s636 + $0x10] sm:$0xff]
        %v701 = vld [vmem:[%s636 + $0x18] sm:$0xff]
        %v702 = vld [vmem:[%s636 + $0x20] sm:$0xff]
        %v703 = vld [vmem:[%s636 + $0x28] sm:$0xff]
        %v704 = vld [vmem:[%s636 + $0x30] sm:$0xff]
        %v705 = vld [vmem:[%s636 + $0x38] sm:$0xff]
        %v706 = vld [vmem:[%s636 + $0x40] sm:$0xff]
        %v707 = vld [vmem:[%s636 + $0x48] sm:$0xff]
        %v708 = vld [vmem:[%s636 + $0x50] sm:$0xff]
        %v709 = vld [vmem:[%s636 + $0x58] sm:$0xff]
        %v710 = vld [vmem:[%s636 + $0x60] sm:$0xff]
        %v711 = vld [vmem:[%s636 + $0x68] sm:$0xff]
        %v712 = vld [vmem:[%s636 + $0x70] sm:$0xff]
        %v713 = vld [vmem:[%s636 + $0x78] sm:$0xff]
        %v714 = vld [vmem:[%s636 + $0x80] sm:$0xff]
        %v715 = vld [vmem:[%s636 + $0x88] sm:$0xff]
        %v716 = vld [vmem:[%s636 + $0x90] sm:$0xff]
        %v717 = vld [vmem:[%s636 + $0x98] sm:$0xff]
        %v718 = vld [vmem:[%s636 + $0xa0] sm:$0xff]
        %v719 = vld [vmem:[%s636 + $0xa8] sm:$0xff]
        %v720 = vld [vmem:[%s636 + $0xb0] sm:$0xff]
        %v721 = vld [vmem:[%s636 + $0xb8] sm:$0xff]
        %v722 = vld [vmem:[%s636 + $0xc0] sm:$0xff]
        %v723 = vld [vmem:[%s636 + $0xc8] sm:$0xff]
        %v724 = vld [vmem:[%s636 + $0xd0] sm:$0xff]
        %v725 = vld [vmem:[%s636 + $0xd8] sm:$0xff]
        %v726 = vld [vmem:[%s636 + $0xe0] sm:$0xff]
        %v727 = vld [vmem:[%s636 + $0xe8] sm:$0xff]
        %v728 = vld [vmem:[%s636 + $0xf0] sm:$0xff]
        %v729 = vld [vmem:[%s636 + $0xf8] sm:$0xff]
        %730 = vst [vmem:[#allocation2] sm:$0xff] %v698
        %731 = vst [vmem:[#allocation2 + $0x8] sm:$0xff] %v699
        %732 = vst [vmem:[#allocation2 + $0x10] sm:$0xff] %v700
        %733 = vst [vmem:[#allocation2 + $0x18] sm:$0xff] %v701
        %734 = vst [vmem:[#allocation2 + $0x20] sm:$0xff] %v702
        %735 = vst [vmem:[#allocation2 + $0x28] sm:$0xff] %v703
        %736 = vst [vmem:[#allocation2 + $0x30] sm:$0xff] %v704
        %737 = vst [vmem:[#allocation2 + $0x38] sm:$0xff] %v705
        %738 = vst [vmem:[#allocation2 + $0x40] sm:$0xff] %v706
        %739 = vst [vmem:[#allocation2 + $0x48] sm:$0xff] %v707
        %740 = vst [vmem:[#allocation2 + $0x50] sm:$0xff] %v708
        %741 = vst [vmem:[#allocation2 + $0x58] sm:$0xff] %v709
        %742 = vst [vmem:[#allocation2 + $0x60] sm:$0xff] %v710
        %743 = vst [vmem:[#allocation2 + $0x68] sm:$0xff] %v711
        %744 = vst [vmem:[#allocation2 + $0x70] sm:$0xff] %v712
        %745 = vst [vmem:[#allocation2 + $0x78] sm:$0xff] %v713
        %746 = vst [vmem:[#allocation2 + $0x80] sm:$0xff] %v714
        %747 = vst [vmem:[#allocation2 + $0x88] sm:$0xff] %v715
        %748 = vst [vmem:[#allocation2 + $0x90] sm:$0xff] %v716
        %749 = vst [vmem:[#allocation2 + $0x98] sm:$0xff] %v717
        %750 = vst [vmem:[#allocation2 + $0xa0] sm:$0xff] %v718
        %751 = vst [vmem:[#allocation2 + $0xa8] sm:$0xff] %v719
        %752 = vst [vmem:[#allocation2 + $0xb0] sm:$0xff] %v720
        %753 = vst [vmem:[#allocation2 + $0xb8] sm:$0xff] %v721
        %754 = vst [vmem:[#allocation2 + $0xc0] sm:$0xff] %v722
        %755 = vst [vmem:[#allocation2 + $0xc8] sm:$0xff] %v723
        %756 = vst [vmem:[#allocation2 + $0xd0] sm:$0xff] %v724
        %757 = vst [vmem:[#allocation2 + $0xd8] sm:$0xff] %v725
        %758 = vst [vmem:[#allocation2 + $0xe0] sm:$0xff] %v726
        %759 = vst [vmem:[#allocation2 + $0xe8] sm:$0xff] %v727
        %760 = vst [vmem:[#allocation2 + $0xf0] sm:$0xff] %v728
        %761 = vst [vmem:[#allocation2 + $0xf8] sm:$0xff] %v729
        %v762 = vld [vmem:[%s643] sm:$0xff]
        %v763 = vld [vmem:[%s643 + $0x8] sm:$0xff]
        %v764 = vld [vmem:[%s643 + $0x10] sm:$0xff]
        %v765 = vld [vmem:[%s643 + $0x18] sm:$0xff]
        %v766 = vld [vmem:[%s643 + $0x20] sm:$0xff]
        %v767 = vld [vmem:[%s643 + $0x28] sm:$0xff]
        %v768 = vld [vmem:[%s643 + $0x30] sm:$0xff]
        %v769 = vld [vmem:[%s643 + $0x38] sm:$0xff]
        %v770 = vld [vmem:[%s643 + $0x40] sm:$0xff]
        %v771 = vld [vmem:[%s643 + $0x48] sm:$0xff]
        %v772 = vld [vmem:[%s643 + $0x50] sm:$0xff]
        %v773 = vld [vmem:[%s643 + $0x58] sm:$0xff]
        %v774 = vld [vmem:[%s643 + $0x60] sm:$0xff]
        %v775 = vld [vmem:[%s643 + $0x68] sm:$0xff]
        %v776 = vld [vmem:[%s643 + $0x70] sm:$0xff]
        %v777 = vld [vmem:[%s643 + $0x78] sm:$0xff]
        %v778 = vld [vmem:[%s643 + $0x80] sm:$0xff]
        %v779 = vld [vmem:[%s643 + $0x88] sm:$0xff]
        %v780 = vld [vmem:[%s643 + $0x90] sm:$0xff]
        %v781 = vld [vmem:[%s643 + $0x98] sm:$0xff]
        %v782 = vld [vmem:[%s643 + $0xa0] sm:$0xff]
        %v783 = vld [vmem:[%s643 + $0xa8] sm:$0xff]
        %v784 = vld [vmem:[%s643 + $0xb0] sm:$0xff]
        %v785 = vld [vmem:[%s643 + $0xb8] sm:$0xff]
        %v786 = vld [vmem:[%s643 + $0xc0] sm:$0xff]
        %v787 = vld [vmem:[%s643 + $0xc8] sm:$0xff]
        %v788 = vld [vmem:[%s643 + $0xd0] sm:$0xff]
        %v789 = vld [vmem:[%s643 + $0xd8] sm:$0xff]
        %v790 = vld [vmem:[%s643 + $0xe0] sm:$0xff]
        %v791 = vld [vmem:[%s643 + $0xe8] sm:$0xff]
        %v792 = vld [vmem:[%s643 + $0xf0] sm:$0xff]
        %v793 = vld [vmem:[%s643 + $0xf8] sm:$0xff]
        %794 = vst [vmem:[#allocation3] sm:$0xff] %v762
        %795 = vst [vmem:[#allocation3 + $0x8] sm:$0xff] %v763
        %796 = vst [vmem:[#allocation3 + $0x10] sm:$0xff] %v764
        %797 = vst [vmem:[#allocation3 + $0x18] sm:$0xff] %v765
        %798 = vst [vmem:[#allocation3 + $0x20] sm:$0xff] %v766
        %799 = vst [vmem:[#allocation3 + $0x28] sm:$0xff] %v767
        %800 = vst [vmem:[#allocation3 + $0x30] sm:$0xff] %v768
        %801 = vst [vmem:[#allocation3 + $0x38] sm:$0xff] %v769
        %802 = vst [vmem:[#allocation3 + $0x40] sm:$0xff] %v770
        %803 = vst [vmem:[#allocation3 + $0x48] sm:$0xff] %v771
        %804 = vst [vmem:[#allocation3 + $0x50] sm:$0xff] %v772
        %805 = vst [vmem:[#allocation3 + $0x58] sm:$0xff] %v773
        %806 = vst [vmem:[#allocation3 + $0x60] sm:$0xff] %v774
        %807 = vst [vmem:[#allocation3 + $0x68] sm:$0xff] %v775
        %808 = vst [vmem:[#allocation3 + $0x70] sm:$0xff] %v776
        %809 = vst [vmem:[#allocation3 + $0x78] sm:$0xff] %v777
        %810 = vst [vmem:[#allocation3 + $0x80] sm:$0xff] %v778
        %811 = vst [vmem:[#allocation3 + $0x88] sm:$0xff] %v779
        %812 = vst [vmem:[#allocation3 + $0x90] sm:$0xff] %v780
        %813 = vst [vmem:[#allocation3 + $0x98] sm:$0xff] %v781
        %814 = vst [vmem:[#allocation3 + $0xa0] sm:$0xff] %v782
        %815 = vst [vmem:[#allocation3 + $0xa8] sm:$0xff] %v783
        %816 = vst [vmem:[#allocation3 + $0xb0] sm:$0xff] %v784
        %817 = vst [vmem:[#allocation3 + $0xb8] sm:$0xff] %v785
        %818 = vst [vmem:[#allocation3 + $0xc0] sm:$0xff] %v786
        %819 = vst [vmem:[#allocation3 + $0xc8] sm:$0xff] %v787
        %820 = vst [vmem:[#allocation3 + $0xd0] sm:$0xff] %v788
        %821 = vst [vmem:[#allocation3 + $0xd8] sm:$0xff] %v789
        %822 = vst [vmem:[#allocation3 + $0xe0] sm:$0xff] %v790
        %823 = vst [vmem:[#allocation3 + $0xe8] sm:$0xff] %v791
        %824 = vst [vmem:[#allocation3 + $0xf0] sm:$0xff] %v792
        %825 = vst [vmem:[#allocation3 + $0xf8] sm:$0xff] %v793
      $region72: #{fourier_dnn_forward.3} parent=67 // pred_fallthru
        _
      %v826 = vld [vmem:[%s0] sm:$0xf]
      %v827 = vld [vmem:[%s0 + $0x4] sm:$0xf]
      %v828 = vld [vmem:[%s0 + $0x8] sm:$0xf]
      %v829 = vld [vmem:[%s0 + $0xc] sm:$0xf]
      %v830 = vld [vmem:[%s0 + $0x10] sm:$0xf]
      %v831 = vld [vmem:[%s0 + $0x14] sm:$0xf]
      %v832 = vld [vmem:[%s0 + $0x18] sm:$0xf]
      %v833 = vld [vmem:[%s0 + $0x1c] sm:$0xf]
      %v834 = vld [vmem:[%s0 + $0x20] sm:$0xf]
      %v835 = vld [vmem:[%s0 + $0x24] sm:$0xf]
      %v836 = vld [vmem:[%s0 + $0x28] sm:$0xf]
      %v837 = vld [vmem:[%s0 + $0x2c] sm:$0xf]
      %v838 = vld [vmem:[%s0 + $0x30] sm:$0xf]
      %v839 = vld [vmem:[%s0 + $0x34] sm:$0xf]
      %v840 = vld [vmem:[%s0 + $0x38] sm:$0xf]
      %v841 = vld [vmem:[%s0 + $0x3c] sm:$0xf]
      %v842 = vld [vmem:[%s1] sm:$0xf]
      %v843 = vld [vmem:[%s1 + $0x4] sm:$0xf]
      %v844 = vld [vmem:[%s1 + $0x8] sm:$0xf]
      %v845 = vld [vmem:[%s1 + $0xc] sm:$0xf]
      %v846 = vld [vmem:[%s1 + $0x10] sm:$0xf]
      %v847 = vld [vmem:[%s1 + $0x14] sm:$0xf]
      %v848 = vld [vmem:[%s1 + $0x18] sm:$0xf]
      %v849 = vld [vmem:[%s1 + $0x1c] sm:$0xf]
      %v850 = vld [vmem:[%s1 + $0x20] sm:$0xf]
      %v851 = vld [vmem:[%s1 + $0x24] sm:$0xf]
      %v852 = vld [vmem:[%s1 + $0x28] sm:$0xf]
      %v853 = vld [vmem:[%s1 + $0x2c] sm:$0xf]
      %v854 = vld [vmem:[%s1 + $0x30] sm:$0xf]
      %v855 = vld [vmem:[%s1 + $0x34] sm:$0xf]
      %v856 = vld [vmem:[%s1 + $0x38] sm:$0xf]
      %v857 = vld [vmem:[%s1 + $0x3c] sm:$0xf]
      %v858 = vld [vmem:[%s2] sm:$0xf]
      %v859 = vld [vmem:[%s2 + $0x4] sm:$0xf]
      %v860 = vld [vmem:[%s2 + $0x8] sm:$0xf]
      %v861 = vld [vmem:[%s2 + $0xc] sm:$0xf]
      %v862 = vld [vmem:[%s2 + $0x10] sm:$0xf]
      %v863 = vld [vmem:[%s2 + $0x14] sm:$0xf]
      %v864 = vld [vmem:[%s2 + $0x18] sm:$0xf]
      %v865 = vld [vmem:[%s2 + $0x1c] sm:$0xf]
      %v866 = vld [vmem:[%s2 + $0x20] sm:$0xf]
      %v867 = vld [vmem:[%s2 + $0x24] sm:$0xf]
      %v868 = vld [vmem:[%s2 + $0x28] sm:$0xf]
      %v869 = vld [vmem:[%s2 + $0x2c] sm:$0xf]
      %v870 = vld [vmem:[%s2 + $0x30] sm:$0xf]
      %v871 = vld [vmem:[%s2 + $0x34] sm:$0xf]
      %v872 = vld [vmem:[%s2 + $0x38] sm:$0xf]
      %v873 = vld [vmem:[%s2 + $0x3c] sm:$0xf]
      %v874 = vld [vmem:[%s3] sm:$0xf]
      %v875 = vld [vmem:[%s3 + $0x4] sm:$0xf]
      %v876 = vld [vmem:[%s3 + $0x8] sm:$0xf]
      %v877 = vld [vmem:[%s3 + $0xc] sm:$0xf]
      %v878 = vld [vmem:[%s3 + $0x10] sm:$0xf]
      %v879 = vld [vmem:[%s3 + $0x14] sm:$0xf]
      %v880 = vld [vmem:[%s3 + $0x18] sm:$0xf]
      %v881 = vld [vmem:[%s3 + $0x1c] sm:$0xf]
      %v882 = vld [vmem:[%s3 + $0x20] sm:$0xf]
      %v883 = vld [vmem:[%s3 + $0x24] sm:$0xf]
      %v884 = vld [vmem:[%s3 + $0x28] sm:$0xf]
      %v885 = vld [vmem:[%s3 + $0x2c] sm:$0xf]
      %v886 = vld [vmem:[%s3 + $0x30] sm:$0xf]
      %v887 = vld [vmem:[%s3 + $0x34] sm:$0xf]
      %v888 = vld [vmem:[%s3 + $0x38] sm:$0xf]
      %v889 = vld [vmem:[%s3 + $0x3c] sm:$0xf]
      %v890 = vld [vmem:[%s4] sm:$0xf]
      %v891 = vld [vmem:[%s4 + $0x4] sm:$0xf]
      %v892 = vld [vmem:[%s4 + $0x8] sm:$0xf]
      %v893 = vld [vmem:[%s4 + $0xc] sm:$0xf]
      %v894 = vld [vmem:[%s4 + $0x10] sm:$0xf]
      %v895 = vld [vmem:[%s4 + $0x14] sm:$0xf]
      %v896 = vld [vmem:[%s4 + $0x18] sm:$0xf]
      %v897 = vld [vmem:[%s4 + $0x1c] sm:$0xf]
      %v898 = vld [vmem:[%s4 + $0x20] sm:$0xf]
      %v899 = vld [vmem:[%s4 + $0x24] sm:$0xf]
      %v900 = vld [vmem:[%s4 + $0x28] sm:$0xf]
      %v901 = vld [vmem:[%s4 + $0x2c] sm:$0xf]
      %v902 = vld [vmem:[%s4 + $0x30] sm:$0xf]
      %v903 = vld [vmem:[%s4 + $0x34] sm:$0xf]
      %v904 = vld [vmem:[%s4 + $0x38] sm:$0xf]
      %v905 = vld [vmem:[%s4 + $0x3c] sm:$0xf]
      %v906 = vld [vmem:[%s5] sm:$0xf]
      %v907 = vld [vmem:[%s5 + $0x4] sm:$0xf]
      %v908 = vld [vmem:[%s5 + $0x8] sm:$0xf]
      %v909 = vld [vmem:[%s5 + $0xc] sm:$0xf]
      %v910 = vld [vmem:[%s5 + $0x10] sm:$0xf]
      %v911 = vld [vmem:[%s5 + $0x14] sm:$0xf]
      %v912 = vld [vmem:[%s5 + $0x18] sm:$0xf]
      %v913 = vld [vmem:[%s5 + $0x1c] sm:$0xf]
      %v914 = vld [vmem:[%s5 + $0x20] sm:$0xf]
      %v915 = vld [vmem:[%s5 + $0x24] sm:$0xf]
      %v916 = vld [vmem:[%s5 + $0x28] sm:$0xf]
      %v917 = vld [vmem:[%s5 + $0x2c] sm:$0xf]
      %v918 = vld [vmem:[%s5 + $0x30] sm:$0xf]
      %v919 = vld [vmem:[%s5 + $0x34] sm:$0xf]
      %v920 = vld [vmem:[%s5 + $0x38] sm:$0xf]
      %v921 = vld [vmem:[%s5 + $0x3c] sm:$0xf]
      %v922 = vld [vmem:[%s615] sm:$0xff]
      %v923 = vld [vmem:[%s615 + $0x8] sm:$0xff]
      %v924 = vld [vmem:[%s615 + $0x10] sm:$0xff]
      %v925 = vld [vmem:[%s615 + $0x18] sm:$0xff]
      %v926 = vld [vmem:[%s615 + $0x20] sm:$0xff]
      %v927 = vld [vmem:[%s615 + $0x28] sm:$0xff]
      %v928 = vld [vmem:[%s615 + $0x30] sm:$0xff]
      %v929 = vld [vmem:[%s615 + $0x38] sm:$0xff]
      %v930 = vld [vmem:[%s615 + $0x40] sm:$0xff]
      %v931 = vld [vmem:[%s615 + $0x48] sm:$0xff]
      %v932 = vld [vmem:[%s615 + $0x50] sm:$0xff]
      %v933 = vld [vmem:[%s615 + $0x58] sm:$0xff]
      %v934 = vld [vmem:[%s615 + $0x60] sm:$0xff]
      %v935 = vld [vmem:[%s615 + $0x68] sm:$0xff]
      %v936 = vld [vmem:[%s615 + $0x70] sm:$0xff]
      %v937 = vld [vmem:[%s615 + $0x78] sm:$0xff]
      %v938 = vld [vmem:[%s620] sm:$0xff]
      %v939 = vld [vmem:[%s620 + $0x8] sm:$0xff]
      %v940 = vld [vmem:[%s620 + $0x10] sm:$0xff]
      %v941 = vld [vmem:[%s620 + $0x18] sm:$0xff]
      %v942 = vld [vmem:[%s620 + $0x20] sm:$0xff]
      %v943 = vld [vmem:[%s620 + $0x28] sm:$0xff]
      %v944 = vld [vmem:[%s620 + $0x30] sm:$0xff]
      %v945 = vld [vmem:[%s620 + $0x38] sm:$0xff]
      %v946 = vld [vmem:[%s620 + $0x40] sm:$0xff]
      %v947 = vld [vmem:[%s620 + $0x48] sm:$0xff]
      %v948 = vld [vmem:[%s620 + $0x50] sm:$0xff]
      %v949 = vld [vmem:[%s620 + $0x58] sm:$0xff]
      %v950 = vld [vmem:[%s620 + $0x60] sm:$0xff]
      %v951 = vld [vmem:[%s620 + $0x68] sm:$0xff]
      %v952 = vld [vmem:[%s620 + $0x70] sm:$0xff]
      %v953 = vld [vmem:[%s620 + $0x78] sm:$0xff]
      %v954 = vld [vmem:[%s625] sm:$0xff]
      %v955 = vld [vmem:[%s625 + $0x8] sm:$0xff]
      %v956 = vld [vmem:[%s625 + $0x10] sm:$0xff]
      %v957 = vld [vmem:[%s625 + $0x18] sm:$0xff]
      %v958 = vld [vmem:[%s625 + $0x20] sm:$0xff]
      %v959 = vld [vmem:[%s625 + $0x28] sm:$0xff]
      %v960 = vld [vmem:[%s625 + $0x30] sm:$0xff]
      %v961 = vld [vmem:[%s625 + $0x38] sm:$0xff]
      %v962 = vld [vmem:[%s625 + $0x40] sm:$0xff]
      %v963 = vld [vmem:[%s625 + $0x48] sm:$0xff]
      %v964 = vld [vmem:[%s625 + $0x50] sm:$0xff]
      %v965 = vld [vmem:[%s625 + $0x58] sm:$0xff]
      %v966 = vld [vmem:[%s625 + $0x60] sm:$0xff]
      %v967 = vld [vmem:[%s625 + $0x68] sm:$0xff]
      %v968 = vld [vmem:[%s625 + $0x70] sm:$0xff]
      %v969 = vld [vmem:[%s625 + $0x78] sm:$0xff]
      %v970 = vld [vmem:[%s630] sm:$0xff]
      %v971 = vld [vmem:[%s630 + $0x8] sm:$0xff]
      %v972 = vld [vmem:[%s630 + $0x10] sm:$0xff]
      %v973 = vld [vmem:[%s630 + $0x18] sm:$0xff]
      %v974 = vld [vmem:[%s630 + $0x20] sm:$0xff]
      %v975 = vld [vmem:[%s630 + $0x28] sm:$0xff]
      %v976 = vld [vmem:[%s630 + $0x30] sm:$0xff]
      %v977 = vld [vmem:[%s630 + $0x38] sm:$0xff]
      %v978 = vld [vmem:[%s630 + $0x40] sm:$0xff]
      %v979 = vld [vmem:[%s630 + $0x48] sm:$0xff]
      %v980 = vld [vmem:[%s630 + $0x50] sm:$0xff]
      %v981 = vld [vmem:[%s630 + $0x58] sm:$0xff]
      %v982 = vld [vmem:[%s630 + $0x60] sm:$0xff]
      %v983 = vld [vmem:[%s630 + $0x68] sm:$0xff]
      %v984 = vld [vmem:[%s630 + $0x70] sm:$0xff]
      %v985 = vld [vmem:[%s630 + $0x78] sm:$0xff]
      %p986 = scmp.eq.s32.totalorder %s31, 6
      %p987 = scmp.ge.s32.totalorder %s31, 1
      %p988 = scmp.lt.s32.totalorder %s31, 6
      %p989 = pnand %p987, %p988
      %p990 = pneg %p989
      loop: start=0, step=1, limit=2
      $region73: #{fourier_dnn_forward.3} parent=67 // loop_pre_header
        _
      $region74: #{fourier_dnn_forward.3} parent=67 // loop_header
        %s992 = sphi 0, %s996
        %p993 = scmp.ge.s32.totalorder %s992, 2
      $region75: #{fourier_dnn_forward.3} parent=67 // loop_header_branch
        %995 = sbr.rel (%p993) target = $region79
      $region76: #{fourier_dnn_forward.3} parent=67 // loop_body
        %s997 = smul.u32 %s992, 128
        %s998 = scalar_lea.vmem [#allocation2], %s997
        %v999 = vld [vmem:[%s998] sm:$0xff]
        %v1000 = vld [vmem:[%s998 + $0x8] sm:$0xff]
        %v1001 = vld [vmem:[%s998 + $0x10] sm:$0xff]
        %v1002 = vld [vmem:[%s998 + $0x18] sm:$0xff]
        %v1003 = vld [vmem:[%s998 + $0x20] sm:$0xff]
        %v1004 = vld [vmem:[%s998 + $0x28] sm:$0xff]
        %v1005 = vld [vmem:[%s998 + $0x30] sm:$0xff]
        %v1006 = vld [vmem:[%s998 + $0x38] sm:$0xff]
        %v1007 = vld [vmem:[%s998 + $0x40] sm:$0xff]
        %v1008 = vld [vmem:[%s998 + $0x48] sm:$0xff]
        %v1009 = vld [vmem:[%s998 + $0x50] sm:$0xff]
        %v1010 = vld [vmem:[%s998 + $0x58] sm:$0xff]
        %v1011 = vld [vmem:[%s998 + $0x60] sm:$0xff]
        %v1012 = vld [vmem:[%s998 + $0x68] sm:$0xff]
        %v1013 = vld [vmem:[%s998 + $0x70] sm:$0xff]
        %v1014 = vld [vmem:[%s998 + $0x78] sm:$0xff]
        %s1015 = scalar_lea.vmem [#allocation3], %s997
        %v1016 = vld [vmem:[%s1015] sm:$0xff]
        %v1017 = vld [vmem:[%s1015 + $0x8] sm:$0xff]
        %v1018 = vld [vmem:[%s1015 + $0x10] sm:$0xff]
        %v1019 = vld [vmem:[%s1015 + $0x18] sm:$0xff]
        %v1020 = vld [vmem:[%s1015 + $0x20] sm:$0xff]
        %v1021 = vld [vmem:[%s1015 + $0x28] sm:$0xff]
        %v1022 = vld [vmem:[%s1015 + $0x30] sm:$0xff]
        %v1023 = vld [vmem:[%s1015 + $0x38] sm:$0xff]
        %v1024 = vld [vmem:[%s1015 + $0x40] sm:$0xff]
        %v1025 = vld [vmem:[%s1015 + $0x48] sm:$0xff]
        %v1026 = vld [vmem:[%s1015 + $0x50] sm:$0xff]
        %v1027 = vld [vmem:[%s1015 + $0x58] sm:$0xff]
        %v1028 = vld [vmem:[%s1015 + $0x60] sm:$0xff]
        %v1029 = vld [vmem:[%s1015 + $0x68] sm:$0xff]
        %v1030 = vld [vmem:[%s1015 + $0x70] sm:$0xff]
        %v1031 = vld [vmem:[%s1015 + $0x78] sm:$0xff]
        %v1032 = vpack.c.bf16 %v1000, %v999
        %v1033 = vpack.c.bf16 %v1002, %v1001
        %v1034 = vpack.c.bf16 %v1004, %v1003
        %v1035 = vpack.c.bf16 %v1006, %v1005
        %v1036 = vpack.c.bf16 %v1008, %v1007
        %v1037 = vpack.c.bf16 %v1010, %v1009
        %v1038 = vpack.c.bf16 %v1012, %v1011
        %v1039 = vpack.c.bf16 %v1014, %v1013
        %v1040 = vpack.c.bf16 %v1017, %v1016
        %v1041 = vpack.c.bf16 %v1019, %v1018
        %v1042 = vpack.c.bf16 %v1021, %v1020
        %v1043 = vpack.c.bf16 %v1023, %v1022
        %v1044 = vpack.c.bf16 %v1025, %v1024
        %v1045 = vpack.c.bf16 %v1027, %v1026
        %v1046 = vpack.c.bf16 %v1029, %v1028
        %v1047 = vpack.c.bf16 %v1031, %v1030
        %v1048 = vadd.f32 %v999, %v1016
        %v1049 = vadd.f32 %v1000, %v1017
        %v1050 = vadd.f32 %v1001, %v1018
        %v1051 = vadd.f32 %v1002, %v1019
        %v1052 = vadd.f32 %v1003, %v1020
        %v1053 = vadd.f32 %v1004, %v1021
        %v1054 = vadd.f32 %v1005, %v1022
        %v1055 = vadd.f32 %v1006, %v1023
        %v1056 = vadd.f32 %v1007, %v1024
        %v1057 = vadd.f32 %v1008, %v1025
        %v1058 = vadd.f32 %v1009, %v1026
        %v1059 = vadd.f32 %v1010, %v1027
        %v1060 = vadd.f32 %v1011, %v1028
        %v1061 = vadd.f32 %v1012, %v1029
        %v1062 = vadd.f32 %v1013, %v1030
        %v1063 = vadd.f32 %v1014, %v1031
        %v1064 = vpack.c.bf16 %v1049, %v1048
        %v1065 = vpack.c.bf16 %v1051, %v1050
        %v1066 = vpack.c.bf16 %v1053, %v1052
        %v1067 = vpack.c.bf16 %v1055, %v1054
        %v1068 = vpack.c.bf16 %v1057, %v1056
        %v1069 = vpack.c.bf16 %v1059, %v1058
        %v1070 = vpack.c.bf16 %v1061, %v1060
        %v1071 = vpack.c.bf16 %v1063, %v1062
        %v1088 = vunpack.c.l.b16 %v826
        %v1089 = vunpack.c.l.b16 %v827
        %v1090 = vunpack.c.l.b16 %v828
        %v1091 = vunpack.c.l.b16 %v829
        %v1092 = vunpack.c.l.b16 %v830
        %v1093 = vunpack.c.l.b16 %v831
        %v1094 = vunpack.c.l.b16 %v832
        %v1095 = vunpack.c.l.b16 %v833
        %v1096 = vunpack.c.l.b16 %v834
        %v1097 = vunpack.c.l.b16 %v835
        %v1098 = vunpack.c.l.b16 %v836
        %v1099 = vunpack.c.l.b16 %v837
        %v1100 = vunpack.c.l.b16 %v838
        %v1101 = vunpack.c.l.b16 %v839
        %v1102 = vunpack.c.l.b16 %v840
        %v1103 = vunpack.c.l.b16 %v841
        %v1104 = vpack.c.b16 %v1089, %v1088
        %v1105 = vpack.c.b16 %v1091, %v1090
        %v1106 = vpack.c.b16 %v1093, %v1092
        %v1107 = vpack.c.b16 %v1095, %v1094
        %v1108 = vpack.c.b16 %v1097, %v1096
        %v1109 = vpack.c.b16 %v1099, %v1098
        %v1110 = vpack.c.b16 %v1101, %v1100
        %v1111 = vpack.c.b16 %v1103, %v1102
        %1120 = vmatpush.bf16.msra.mxu0 %v1111
        %1121 = vmatpush.bf16.msra.mxu0 %v1110
        %1122 = vmatpush.bf16.msra.mxu0 %v1109
        %1123 = vmatpush.bf16.msra.mxu0 %v1108
        %1124 = vmatpush.bf16.msra.mxu0 %v1107
        %1125 = vmatpush.bf16.msra.mxu0 %v1106
        %1126 = vmatpush.bf16.msra.mxu0 %v1105
        %1127 = vmatpush.bf16.msra.mxu0 %v1104
        %1128 = vmatmul.bf16.gmra.mxu0 %v1032
        %v1129 = vpop.f32.mrf.mxu0
        %v1130 = vadd.f32 0.0, %v1129
        %v1131 = vpop.f32.mrf.mxu0
        %v1132 = vadd.f32 0.0, %v1131
        %1133 = vmatmul.bf16.gmra.mxu0 %v1033
        %v1134 = vpop.f32.mrf.mxu0
        %v1135 = vadd.f32 0.0, %v1134
        %v1136 = vpop.f32.mrf.mxu0
        %v1137 = vadd.f32 0.0, %v1136
        %1138 = vmatmul.bf16.gmra.mxu0 %v1034
        %v1139 = vpop.f32.mrf.mxu0
        %v1140 = vadd.f32 0.0, %v1139
        %v1141 = vpop.f32.mrf.mxu0
        %v1142 = vadd.f32 0.0, %v1141
        %1143 = vmatmul.bf16.gmra.mxu0 %v1035
        %v1144 = vpop.f32.mrf.mxu0
        %v1145 = vadd.f32 0.0, %v1144
        %v1146 = vpop.f32.mrf.mxu0
        %v1147 = vadd.f32 0.0, %v1146
        %1148 = vmatmul.bf16.gmra.mxu0 %v1036
        %v1149 = vpop.f32.mrf.mxu0
        %v1150 = vadd.f32 0.0, %v1149
        %v1151 = vpop.f32.mrf.mxu0
        %v1152 = vadd.f32 0.0, %v1151
        %1153 = vmatmul.bf16.gmra.mxu0 %v1037
        %v1154 = vpop.f32.mrf.mxu0
        %v1155 = vadd.f32 0.0, %v1154
        %v1156 = vpop.f32.mrf.mxu0
        %v1157 = vadd.f32 0.0, %v1156
        %1158 = vmatmul.bf16.gmra.mxu0 %v1038
        %v1159 = vpop.f32.mrf.mxu0
        %v1160 = vadd.f32 0.0, %v1159
        %v1161 = vpop.f32.mrf.mxu0
        %v1162 = vadd.f32 0.0, %v1161
        %1163 = vmatmul.bf16.gmra.mxu0 %v1039
        %v1164 = vpop.f32.mrf.mxu0
        %v1165 = vadd.f32 0.0, %v1164
        %v1166 = vpop.f32.mrf.mxu0
        %v1167 = vadd.f32 0.0, %v1166
        %1168 = vdwg.mxu0
        %v1185 = vunpack.c.l.b16 %v842
        %v1186 = vunpack.c.l.b16 %v843
        %v1187 = vunpack.c.l.b16 %v844
        %v1188 = vunpack.c.l.b16 %v845
        %v1189 = vunpack.c.l.b16 %v846
        %v1190 = vunpack.c.l.b16 %v847
        %v1191 = vunpack.c.l.b16 %v848
        %v1192 = vunpack.c.l.b16 %v849
        %v1193 = vunpack.c.l.b16 %v850
        %v1194 = vunpack.c.l.b16 %v851
        %v1195 = vunpack.c.l.b16 %v852
        %v1196 = vunpack.c.l.b16 %v853
        %v1197 = vunpack.c.l.b16 %v854
        %v1198 = vunpack.c.l.b16 %v855
        %v1199 = vunpack.c.l.b16 %v856
        %v1200 = vunpack.c.l.b16 %v857
        %v1201 = vpack.c.b16 %v1186, %v1185
        %v1202 = vpack.c.b16 %v1188, %v1187
        %v1203 = vpack.c.b16 %v1190, %v1189
        %v1204 = vpack.c.b16 %v1192, %v1191
        %v1205 = vpack.c.b16 %v1194, %v1193
        %v1206 = vpack.c.b16 %v1196, %v1195
        %v1207 = vpack.c.b16 %v1198, %v1197
        %v1208 = vpack.c.b16 %v1200, %v1199
        %1217 = vmatpush.bf16.msra.mxu0 %v1208
        %1218 = vmatpush.bf16.msra.mxu0 %v1207
        %1219 = vmatpush.bf16.msra.mxu0 %v1206
        %1220 = vmatpush.bf16.msra.mxu0 %v1205
        %1221 = vmatpush.bf16.msra.mxu0 %v1204
        %1222 = vmatpush.bf16.msra.mxu0 %v1203
        %1223 = vmatpush.bf16.msra.mxu0 %v1202
        %1224 = vmatpush.bf16.msra.mxu0 %v1201
        %1225 = vmatmul.bf16.gmra.mxu0 %v1040
        %v1226 = vpop.f32.mrf.mxu0
        %v1227 = vadd.f32 0.0, %v1226
        %v1228 = vpop.f32.mrf.mxu0
        %v1229 = vadd.f32 0.0, %v1228
        %1230 = vmatmul.bf16.gmra.mxu0 %v1041
        %v1231 = vpop.f32.mrf.mxu0
        %v1232 = vadd.f32 0.0, %v1231
        %v1233 = vpop.f32.mrf.mxu0
        %v1234 = vadd.f32 0.0, %v1233
        %1235 = vmatmul.bf16.gmra.mxu0 %v1042
        %v1236 = vpop.f32.mrf.mxu0
        %v1237 = vadd.f32 0.0, %v1236
        %v1238 = vpop.f32.mrf.mxu0
        %v1239 = vadd.f32 0.0, %v1238
        %1240 = vmatmul.bf16.gmra.mxu0 %v1043
        %v1241 = vpop.f32.mrf.mxu0
        %v1242 = vadd.f32 0.0, %v1241
        %v1243 = vpop.f32.mrf.mxu0
        %v1244 = vadd.f32 0.0, %v1243
        %1245 = vmatmul.bf16.gmra.mxu0 %v1044
        %v1246 = vpop.f32.mrf.mxu0
        %v1247 = vadd.f32 0.0, %v1246
        %v1248 = vpop.f32.mrf.mxu0
        %v1249 = vadd.f32 0.0, %v1248
        %1250 = vmatmul.bf16.gmra.mxu0 %v1045
        %v1251 = vpop.f32.mrf.mxu0
        %v1252 = vadd.f32 0.0, %v1251
        %v1253 = vpop.f32.mrf.mxu0
        %v1254 = vadd.f32 0.0, %v1253
        %1255 = vmatmul.bf16.gmra.mxu0 %v1046
        %v1256 = vpop.f32.mrf.mxu0
        %v1257 = vadd.f32 0.0, %v1256
        %v1258 = vpop.f32.mrf.mxu0
        %v1259 = vadd.f32 0.0, %v1258
        %1260 = vmatmul.bf16.gmra.mxu0 %v1047
        %v1261 = vpop.f32.mrf.mxu0
        %v1262 = vadd.f32 0.0, %v1261
        %v1263 = vpop.f32.mrf.mxu0
        %v1264 = vadd.f32 0.0, %v1263
        %1265 = vdwg.mxu0
        %v1282 = vunpack.c.l.b16 %v858
        %v1283 = vunpack.c.l.b16 %v859
        %v1284 = vunpack.c.l.b16 %v860
        %v1285 = vunpack.c.l.b16 %v861
        %v1286 = vunpack.c.l.b16 %v862
        %v1287 = vunpack.c.l.b16 %v863
        %v1288 = vunpack.c.l.b16 %v864
        %v1289 = vunpack.c.l.b16 %v865
        %v1290 = vunpack.c.l.b16 %v866
        %v1291 = vunpack.c.l.b16 %v867
        %v1292 = vunpack.c.l.b16 %v868
        %v1293 = vunpack.c.l.b16 %v869
        %v1294 = vunpack.c.l.b16 %v870
        %v1295 = vunpack.c.l.b16 %v871
        %v1296 = vunpack.c.l.b16 %v872
        %v1297 = vunpack.c.l.b16 %v873
        %v1298 = vpack.c.b16 %v1283, %v1282
        %v1299 = vpack.c.b16 %v1285, %v1284
        %v1300 = vpack.c.b16 %v1287, %v1286
        %v1301 = vpack.c.b16 %v1289, %v1288
        %v1302 = vpack.c.b16 %v1291, %v1290
        %v1303 = vpack.c.b16 %v1293, %v1292
        %v1304 = vpack.c.b16 %v1295, %v1294
        %v1305 = vpack.c.b16 %v1297, %v1296
        %1314 = vmatpush.bf16.msra.mxu0 %v1305
        %1315 = vmatpush.bf16.msra.mxu0 %v1304
        %1316 = vmatpush.bf16.msra.mxu0 %v1303
        %1317 = vmatpush.bf16.msra.mxu0 %v1302
        %1318 = vmatpush.bf16.msra.mxu0 %v1301
        %1319 = vmatpush.bf16.msra.mxu0 %v1300
        %1320 = vmatpush.bf16.msra.mxu0 %v1299
        %1321 = vmatpush.bf16.msra.mxu0 %v1298
        %1322 = vmatmul.bf16.gmra.mxu0 %v1064
        %v1323 = vpop.f32.mrf.mxu0
        %v1324 = vadd.f32 0.0, %v1323
        %v1325 = vpop.f32.mrf.mxu0
        %v1326 = vadd.f32 0.0, %v1325
        %1327 = vmatmul.bf16.gmra.mxu0 %v1065
        %v1328 = vpop.f32.mrf.mxu0
        %v1329 = vadd.f32 0.0, %v1328
        %v1330 = vpop.f32.mrf.mxu0
        %v1331 = vadd.f32 0.0, %v1330
        %1332 = vmatmul.bf16.gmra.mxu0 %v1066
        %v1333 = vpop.f32.mrf.mxu0
        %v1334 = vadd.f32 0.0, %v1333
        %v1335 = vpop.f32.mrf.mxu0
        %v1336 = vadd.f32 0.0, %v1335
        %1337 = vmatmul.bf16.gmra.mxu0 %v1067
        %v1338 = vpop.f32.mrf.mxu0
        %v1339 = vadd.f32 0.0, %v1338
        %v1340 = vpop.f32.mrf.mxu0
        %v1341 = vadd.f32 0.0, %v1340
        %1342 = vmatmul.bf16.gmra.mxu0 %v1068
        %v1343 = vpop.f32.mrf.mxu0
        %v1344 = vadd.f32 0.0, %v1343
        %v1345 = vpop.f32.mrf.mxu0
        %v1346 = vadd.f32 0.0, %v1345
        %1347 = vmatmul.bf16.gmra.mxu0 %v1069
        %v1348 = vpop.f32.mrf.mxu0
        %v1349 = vadd.f32 0.0, %v1348
        %v1350 = vpop.f32.mrf.mxu0
        %v1351 = vadd.f32 0.0, %v1350
        %1352 = vmatmul.bf16.gmra.mxu0 %v1070
        %v1353 = vpop.f32.mrf.mxu0
        %v1354 = vadd.f32 0.0, %v1353
        %v1355 = vpop.f32.mrf.mxu0
        %v1356 = vadd.f32 0.0, %v1355
        %1357 = vmatmul.bf16.gmra.mxu0 %v1071
        %v1358 = vpop.f32.mrf.mxu0
        %v1359 = vadd.f32 0.0, %v1358
        %v1360 = vpop.f32.mrf.mxu0
        %v1361 = vadd.f32 0.0, %v1360
        %1362 = vdwg.mxu0
        %v1363 = vsub.f32 %v1130, %v1227
        %v1364 = vsub.f32 %v1132, %v1229
        %v1365 = vsub.f32 %v1135, %v1232
        %v1366 = vsub.f32 %v1137, %v1234
        %v1367 = vsub.f32 %v1140, %v1237
        %v1368 = vsub.f32 %v1142, %v1239
        %v1369 = vsub.f32 %v1145, %v1242
        %v1370 = vsub.f32 %v1147, %v1244
        %v1371 = vsub.f32 %v1150, %v1247
        %v1372 = vsub.f32 %v1152, %v1249
        %v1373 = vsub.f32 %v1155, %v1252
        %v1374 = vsub.f32 %v1157, %v1254
        %v1375 = vsub.f32 %v1160, %v1257
        %v1376 = vsub.f32 %v1162, %v1259
        %v1377 = vsub.f32 %v1165, %v1262
        %v1378 = vsub.f32 %v1167, %v1264
        %v1379 = vsub.f32 %v1324, %v1130
        %v1380 = vsub.f32 %v1326, %v1132
        %v1381 = vsub.f32 %v1329, %v1135
        %v1382 = vsub.f32 %v1331, %v1137
        %v1383 = vsub.f32 %v1334, %v1140
        %v1384 = vsub.f32 %v1336, %v1142
        %v1385 = vsub.f32 %v1339, %v1145
        %v1386 = vsub.f32 %v1341, %v1147
        %v1387 = vsub.f32 %v1344, %v1150
        %v1388 = vsub.f32 %v1346, %v1152
        %v1389 = vsub.f32 %v1349, %v1155
        %v1390 = vsub.f32 %v1351, %v1157
        %v1391 = vsub.f32 %v1354, %v1160
        %v1392 = vsub.f32 %v1356, %v1162
        %v1393 = vsub.f32 %v1359, %v1165
        %v1394 = vsub.f32 %v1361, %v1167
        %v1395 = vsub.f32 %v1379, %v1227
        %v1396 = vsub.f32 %v1380, %v1229
        %v1397 = vsub.f32 %v1381, %v1232
        %v1398 = vsub.f32 %v1382, %v1234
        %v1399 = vsub.f32 %v1383, %v1237
        %v1400 = vsub.f32 %v1384, %v1239
        %v1401 = vsub.f32 %v1385, %v1242
        %v1402 = vsub.f32 %v1386, %v1244
        %v1403 = vsub.f32 %v1387, %v1247
        %v1404 = vsub.f32 %v1388, %v1249
        %v1405 = vsub.f32 %v1389, %v1252
        %v1406 = vsub.f32 %v1390, %v1254
        %v1407 = vsub.f32 %v1391, %v1257
        %v1408 = vsub.f32 %v1392, %v1259
        %v1409 = vsub.f32 %v1393, %v1262
        %v1410 = vsub.f32 %v1394, %v1264
        %v1411 = vpack.c.bf16 %v1364, %v1363
        %v1412 = vpack.c.bf16 %v1366, %v1365
        %v1413 = vpack.c.bf16 %v1368, %v1367
        %v1414 = vpack.c.bf16 %v1370, %v1369
        %v1415 = vpack.c.bf16 %v1372, %v1371
        %v1416 = vpack.c.bf16 %v1374, %v1373
        %v1417 = vpack.c.bf16 %v1376, %v1375
        %v1418 = vpack.c.bf16 %v1378, %v1377
        %v1419 = vpack.c.bf16 %v1396, %v1395
        %v1420 = vpack.c.bf16 %v1398, %v1397
        %v1421 = vpack.c.bf16 %v1400, %v1399
        %v1422 = vpack.c.bf16 %v1402, %v1401
        %v1423 = vpack.c.bf16 %v1404, %v1403
        %v1424 = vpack.c.bf16 %v1406, %v1405
        %v1425 = vpack.c.bf16 %v1408, %v1407
        %v1426 = vpack.c.bf16 %v1410, %v1409
        %v1427 = vadd.f32 %v1363, %v1395
        %v1428 = vadd.f32 %v1364, %v1396
        %v1429 = vadd.f32 %v1365, %v1397
        %v1430 = vadd.f32 %v1366, %v1398
        %v1431 = vadd.f32 %v1367, %v1399
        %v1432 = vadd.f32 %v1368, %v1400
        %v1433 = vadd.f32 %v1369, %v1401
        %v1434 = vadd.f32 %v1370, %v1402
        %v1435 = vadd.f32 %v1371, %v1403
        %v1436 = vadd.f32 %v1372, %v1404
        %v1437 = vadd.f32 %v1373, %v1405
        %v1438 = vadd.f32 %v1374, %v1406
        %v1439 = vadd.f32 %v1375, %v1407
        %v1440 = vadd.f32 %v1376, %v1408
        %v1441 = vadd.f32 %v1377, %v1409
        %v1442 = vadd.f32 %v1378, %v1410
        %v1443 = vpack.c.bf16 %v1428, %v1427
        %v1444 = vpack.c.bf16 %v1430, %v1429
        %v1445 = vpack.c.bf16 %v1432, %v1431
        %v1446 = vpack.c.bf16 %v1434, %v1433
        %v1447 = vpack.c.bf16 %v1436, %v1435
        %v1448 = vpack.c.bf16 %v1438, %v1437
        %v1449 = vpack.c.bf16 %v1440, %v1439
        %v1450 = vpack.c.bf16 %v1442, %v1441
        %1451 = vmatpush.bf16.msra.mxu0 %v1418
        %1452 = vmatpush.bf16.msra.mxu0 %v1417
        %1453 = vmatpush.bf16.msra.mxu0 %v1416
        %1454 = vmatpush.bf16.msra.mxu0 %v1415
        %1455 = vmatpush.bf16.msra.mxu0 %v1414
        %1456 = vmatpush.bf16.msra.mxu0 %v1413
        %1457 = vmatpush.bf16.msra.mxu0 %v1412
        %1458 = vmatpush.bf16.msra.mxu0 %v1411
        %1459 = vmatmul.bf16.gmra.mxu0 %v1104
        %v1460 = vpop.f32.mrf.mxu0
        %v1461 = vadd.f32 0.0, %v1460
        %v1462 = vpop.f32.mrf.mxu0
        %v1463 = vadd.f32 0.0, %v1462
        %1464 = vmatmul.bf16.gmra.mxu0 %v1105
        %v1465 = vpop.f32.mrf.mxu0
        %v1466 = vadd.f32 0.0, %v1465
        %v1467 = vpop.f32.mrf.mxu0
        %v1468 = vadd.f32 0.0, %v1467
        %1469 = vmatmul.bf16.gmra.mxu0 %v1106
        %v1470 = vpop.f32.mrf.mxu0
        %v1471 = vadd.f32 0.0, %v1470
        %v1472 = vpop.f32.mrf.mxu0
        %v1473 = vadd.f32 0.0, %v1472
        %1474 = vmatmul.bf16.gmra.mxu0 %v1107
        %v1475 = vpop.f32.mrf.mxu0
        %v1476 = vadd.f32 0.0, %v1475
        %v1477 = vpop.f32.mrf.mxu0
        %v1478 = vadd.f32 0.0, %v1477
        %1479 = vmatmul.bf16.gmra.mxu0 %v1108
        %v1480 = vpop.f32.mrf.mxu0
        %v1481 = vadd.f32 0.0, %v1480
        %v1482 = vpop.f32.mrf.mxu0
        %v1483 = vadd.f32 0.0, %v1482
        %1484 = vmatmul.bf16.gmra.mxu0 %v1109
        %v1485 = vpop.f32.mrf.mxu0
        %v1486 = vadd.f32 0.0, %v1485
        %v1487 = vpop.f32.mrf.mxu0
        %v1488 = vadd.f32 0.0, %v1487
        %1489 = vmatmul.bf16.gmra.mxu0 %v1110
        %v1490 = vpop.f32.mrf.mxu0
        %v1491 = vadd.f32 0.0, %v1490
        %v1492 = vpop.f32.mrf.mxu0
        %v1493 = vadd.f32 0.0, %v1492
        %1494 = vmatmul.bf16.gmra.mxu0 %v1111
        %v1495 = vpop.f32.mrf.mxu0
        %v1496 = vadd.f32 0.0, %v1495
        %v1497 = vpop.f32.mrf.mxu0
        %v1498 = vadd.f32 0.0, %v1497
        %1499 = vdwg.mxu0
        %1500 = vmatpush.bf16.msra.mxu0 %v1426
        %1501 = vmatpush.bf16.msra.mxu0 %v1425
        %1502 = vmatpush.bf16.msra.mxu0 %v1424
        %1503 = vmatpush.bf16.msra.mxu0 %v1423
        %1504 = vmatpush.bf16.msra.mxu0 %v1422
        %1505 = vmatpush.bf16.msra.mxu0 %v1421
        %1506 = vmatpush.bf16.msra.mxu0 %v1420
        %1507 = vmatpush.bf16.msra.mxu0 %v1419
        %1508 = vmatmul.bf16.gmra.mxu0 %v1201
        %v1509 = vpop.f32.mrf.mxu0
        %v1510 = vadd.f32 0.0, %v1509
        %v1511 = vpop.f32.mrf.mxu0
        %v1512 = vadd.f32 0.0, %v1511
        %1513 = vmatmul.bf16.gmra.mxu0 %v1202
        %v1514 = vpop.f32.mrf.mxu0
        %v1515 = vadd.f32 0.0, %v1514
        %v1516 = vpop.f32.mrf.mxu0
        %v1517 = vadd.f32 0.0, %v1516
        %1518 = vmatmul.bf16.gmra.mxu0 %v1203
        %v1519 = vpop.f32.mrf.mxu0
        %v1520 = vadd.f32 0.0, %v1519
        %v1521 = vpop.f32.mrf.mxu0
        %v1522 = vadd.f32 0.0, %v1521
        %1523 = vmatmul.bf16.gmra.mxu0 %v1204
        %v1524 = vpop.f32.mrf.mxu0
        %v1525 = vadd.f32 0.0, %v1524
        %v1526 = vpop.f32.mrf.mxu0
        %v1527 = vadd.f32 0.0, %v1526
        %1528 = vmatmul.bf16.gmra.mxu0 %v1205
        %v1529 = vpop.f32.mrf.mxu0
        %v1530 = vadd.f32 0.0, %v1529
        %v1531 = vpop.f32.mrf.mxu0
        %v1532 = vadd.f32 0.0, %v1531
        %1533 = vmatmul.bf16.gmra.mxu0 %v1206
        %v1534 = vpop.f32.mrf.mxu0
        %v1535 = vadd.f32 0.0, %v1534
        %v1536 = vpop.f32.mrf.mxu0
        %v1537 = vadd.f32 0.0, %v1536
        %1538 = vmatmul.bf16.gmra.mxu0 %v1207
        %v1539 = vpop.f32.mrf.mxu0
        %v1540 = vadd.f32 0.0, %v1539
        %v1541 = vpop.f32.mrf.mxu0
        %v1542 = vadd.f32 0.0, %v1541
        %1543 = vmatmul.bf16.gmra.mxu0 %v1208
        %v1544 = vpop.f32.mrf.mxu0
        %v1545 = vadd.f32 0.0, %v1544
        %v1546 = vpop.f32.mrf.mxu0
        %v1547 = vadd.f32 0.0, %v1546
        %1548 = vdwg.mxu0
        %1549 = vmatpush.bf16.msra.mxu0 %v1450
        %1550 = vmatpush.bf16.msra.mxu0 %v1449
        %1551 = vmatpush.bf16.msra.mxu0 %v1448
        %1552 = vmatpush.bf16.msra.mxu0 %v1447
        %1553 = vmatpush.bf16.msra.mxu0 %v1446
        %1554 = vmatpush.bf16.msra.mxu0 %v1445
        %1555 = vmatpush.bf16.msra.mxu0 %v1444
        %1556 = vmatpush.bf16.msra.mxu0 %v1443
        %1557 = vmatmul.bf16.gmra.mxu0 %v1298
        %v1558 = vpop.f32.mrf.mxu0
        %v1559 = vadd.f32 0.0, %v1558
        %v1560 = vpop.f32.mrf.mxu0
        %v1561 = vadd.f32 0.0, %v1560
        %1562 = vmatmul.bf16.gmra.mxu0 %v1299
        %v1563 = vpop.f32.mrf.mxu0
        %v1564 = vadd.f32 0.0, %v1563
        %v1565 = vpop.f32.mrf.mxu0
        %v1566 = vadd.f32 0.0, %v1565
        %1567 = vmatmul.bf16.gmra.mxu0 %v1300
        %v1568 = vpop.f32.mrf.mxu0
        %v1569 = vadd.f32 0.0, %v1568
        %v1570 = vpop.f32.mrf.mxu0
        %v1571 = vadd.f32 0.0, %v1570
        %1572 = vmatmul.bf16.gmra.mxu0 %v1301
        %v1573 = vpop.f32.mrf.mxu0
        %v1574 = vadd.f32 0.0, %v1573
        %v1575 = vpop.f32.mrf.mxu0
        %v1576 = vadd.f32 0.0, %v1575
        %1577 = vmatmul.bf16.gmra.mxu0 %v1302
        %v1578 = vpop.f32.mrf.mxu0
        %v1579 = vadd.f32 0.0, %v1578
        %v1580 = vpop.f32.mrf.mxu0
        %v1581 = vadd.f32 0.0, %v1580
        %1582 = vmatmul.bf16.gmra.mxu0 %v1303
        %v1583 = vpop.f32.mrf.mxu0
        %v1584 = vadd.f32 0.0, %v1583
        %v1585 = vpop.f32.mrf.mxu0
        %v1586 = vadd.f32 0.0, %v1585
        %1587 = vmatmul.bf16.gmra.mxu0 %v1304
        %v1588 = vpop.f32.mrf.mxu0
        %v1589 = vadd.f32 0.0, %v1588
        %v1590 = vpop.f32.mrf.mxu0
        %v1591 = vadd.f32 0.0, %v1590
        %1592 = vmatmul.bf16.gmra.mxu0 %v1305
        %v1593 = vpop.f32.mrf.mxu0
        %v1594 = vadd.f32 0.0, %v1593
        %v1595 = vpop.f32.mrf.mxu0
        %v1596 = vadd.f32 0.0, %v1595
        %1597 = vdwg.mxu0
        %v1598 = vsub.f32 %v1461, %v1510
        %v1599 = vsub.f32 %v1463, %v1512
        %v1600 = vsub.f32 %v1466, %v1515
        %v1601 = vsub.f32 %v1468, %v1517
        %v1602 = vsub.f32 %v1471, %v1520
        %v1603 = vsub.f32 %v1473, %v1522
        %v1604 = vsub.f32 %v1476, %v1525
        %v1605 = vsub.f32 %v1478, %v1527
        %v1606 = vsub.f32 %v1481, %v1530
        %v1607 = vsub.f32 %v1483, %v1532
        %v1608 = vsub.f32 %v1486, %v1535
        %v1609 = vsub.f32 %v1488, %v1537
        %v1610 = vsub.f32 %v1491, %v1540
        %v1611 = vsub.f32 %v1493, %v1542
        %v1612 = vsub.f32 %v1496, %v1545
        %v1613 = vsub.f32 %v1498, %v1547
        %v1614 = vsub.f32 %v1559, %v1461
        %v1615 = vsub.f32 %v1561, %v1463
        %v1616 = vsub.f32 %v1564, %v1466
        %v1617 = vsub.f32 %v1566, %v1468
        %v1618 = vsub.f32 %v1569, %v1471
        %v1619 = vsub.f32 %v1571, %v1473
        %v1620 = vsub.f32 %v1574, %v1476
        %v1621 = vsub.f32 %v1576, %v1478
        %v1622 = vsub.f32 %v1579, %v1481
        %v1623 = vsub.f32 %v1581, %v1483
        %v1624 = vsub.f32 %v1584, %v1486
        %v1625 = vsub.f32 %v1586, %v1488
        %v1626 = vsub.f32 %v1589, %v1491
        %v1627 = vsub.f32 %v1591, %v1493
        %v1628 = vsub.f32 %v1594, %v1496
        %v1629 = vsub.f32 %v1596, %v1498
        %v1630 = vsub.f32 %v1614, %v1510
        %v1631 = vsub.f32 %v1615, %v1512
        %v1632 = vsub.f32 %v1616, %v1515
        %v1633 = vsub.f32 %v1617, %v1517
        %v1634 = vsub.f32 %v1618, %v1520
        %v1635 = vsub.f32 %v1619, %v1522
        %v1636 = vsub.f32 %v1620, %v1525
        %v1637 = vsub.f32 %v1621, %v1527
        %v1638 = vsub.f32 %v1622, %v1530
        %v1639 = vsub.f32 %v1623, %v1532
        %v1640 = vsub.f32 %v1624, %v1535
        %v1641 = vsub.f32 %v1625, %v1537
        %v1642 = vsub.f32 %v1626, %v1540
        %v1643 = vsub.f32 %v1627, %v1542
        %v1644 = vsub.f32 %v1628, %v1545
        %v1645 = vsub.f32 %v1629, %v1547
        %v1646 = vmul.f32 %v1598, %v922
        %v1647 = vmul.f32 %v1599, %v923
        %v1648 = vmul.f32 %v1600, %v924
        %v1649 = vmul.f32 %v1601, %v925
        %v1650 = vmul.f32 %v1602, %v926
        %v1651 = vmul.f32 %v1603, %v927
        %v1652 = vmul.f32 %v1604, %v928
        %v1653 = vmul.f32 %v1605, %v929
        %v1654 = vmul.f32 %v1606, %v930
        %v1655 = vmul.f32 %v1607, %v931
        %v1656 = vmul.f32 %v1608, %v932
        %v1657 = vmul.f32 %v1609, %v933
        %v1658 = vmul.f32 %v1610, %v934
        %v1659 = vmul.f32 %v1611, %v935
        %v1660 = vmul.f32 %v1612, %v936
        %v1661 = vmul.f32 %v1613, %v937
        %v1662 = vmul.f32 %v1630, %v938
        %v1663 = vmul.f32 %v1631, %v939
        %v1664 = vmul.f32 %v1632, %v940
        %v1665 = vmul.f32 %v1633, %v941
        %v1666 = vmul.f32 %v1634, %v942
        %v1667 = vmul.f32 %v1635, %v943
        %v1668 = vmul.f32 %v1636, %v944
        %v1669 = vmul.f32 %v1637, %v945
        %v1670 = vmul.f32 %v1638, %v946
        %v1671 = vmul.f32 %v1639, %v947
        %v1672 = vmul.f32 %v1640, %v948
        %v1673 = vmul.f32 %v1641, %v949
        %v1674 = vmul.f32 %v1642, %v950
        %v1675 = vmul.f32 %v1643, %v951
        %v1676 = vmul.f32 %v1644, %v952
        %v1677 = vmul.f32 %v1645, %v953
        %v1678 = vsub.f32 %v1646, %v1662
        %v1679 = vsub.f32 %v1647, %v1663
        %v1680 = vsub.f32 %v1648, %v1664
        %v1681 = vsub.f32 %v1649, %v1665
        %v1682 = vsub.f32 %v1650, %v1666
        %v1683 = vsub.f32 %v1651, %v1667
        %v1684 = vsub.f32 %v1652, %v1668
        %v1685 = vsub.f32 %v1653, %v1669
        %v1686 = vsub.f32 %v1654, %v1670
        %v1687 = vsub.f32 %v1655, %v1671
        %v1688 = vsub.f32 %v1656, %v1672
        %v1689 = vsub.f32 %v1657, %v1673
        %v1690 = vsub.f32 %v1658, %v1674
        %v1691 = vsub.f32 %v1659, %v1675
        %v1692 = vsub.f32 %v1660, %v1676
        %v1693 = vsub.f32 %v1661, %v1677
        %v1694 = vmul.f32 %v1598, %v938
        %v1695 = vmul.f32 %v1599, %v939
        %v1696 = vmul.f32 %v1600, %v940
        %v1697 = vmul.f32 %v1601, %v941
        %v1698 = vmul.f32 %v1602, %v942
        %v1699 = vmul.f32 %v1603, %v943
        %v1700 = vmul.f32 %v1604, %v944
        %v1701 = vmul.f32 %v1605, %v945
        %v1702 = vmul.f32 %v1606, %v946
        %v1703 = vmul.f32 %v1607, %v947
        %v1704 = vmul.f32 %v1608, %v948
        %v1705 = vmul.f32 %v1609, %v949
        %v1706 = vmul.f32 %v1610, %v950
        %v1707 = vmul.f32 %v1611, %v951
        %v1708 = vmul.f32 %v1612, %v952
        %v1709 = vmul.f32 %v1613, %v953
        %v1710 = vmul.f32 %v1630, %v922
        %v1711 = vmul.f32 %v1631, %v923
        %v1712 = vmul.f32 %v1632, %v924
        %v1713 = vmul.f32 %v1633, %v925
        %v1714 = vmul.f32 %v1634, %v926
        %v1715 = vmul.f32 %v1635, %v927
        %v1716 = vmul.f32 %v1636, %v928
        %v1717 = vmul.f32 %v1637, %v929
        %v1718 = vmul.f32 %v1638, %v930
        %v1719 = vmul.f32 %v1639, %v931
        %v1720 = vmul.f32 %v1640, %v932
        %v1721 = vmul.f32 %v1641, %v933
        %v1722 = vmul.f32 %v1642, %v934
        %v1723 = vmul.f32 %v1643, %v935
        %v1724 = vmul.f32 %v1644, %v936
        %v1725 = vmul.f32 %v1645, %v937
        %v1726 = vadd.f32 %v1694, %v1710
        %v1727 = vadd.f32 %v1695, %v1711
        %v1728 = vadd.f32 %v1696, %v1712
        %v1729 = vadd.f32 %v1697, %v1713
        %v1730 = vadd.f32 %v1698, %v1714
        %v1731 = vadd.f32 %v1699, %v1715
        %v1732 = vadd.f32 %v1700, %v1716
        %v1733 = vadd.f32 %v1701, %v1717
        %v1734 = vadd.f32 %v1702, %v1718
        %v1735 = vadd.f32 %v1703, %v1719
        %v1736 = vadd.f32 %v1704, %v1720
        %v1737 = vadd.f32 %v1705, %v1721
        %v1738 = vadd.f32 %v1706, %v1722
        %v1739 = vadd.f32 %v1707, %v1723
        %v1740 = vadd.f32 %v1708, %v1724
        %v1741 = vadd.f32 %v1709, %v1725
        %v1742 = vpack.c.bf16 %v1679, %v1678
        %v1743 = vpack.c.bf16 %v1681, %v1680
        %v1744 = vpack.c.bf16 %v1683, %v1682
        %v1745 = vpack.c.bf16 %v1685, %v1684
        %v1746 = vpack.c.bf16 %v1687, %v1686
        %v1747 = vpack.c.bf16 %v1689, %v1688
        %v1748 = vpack.c.bf16 %v1691, %v1690
        %v1749 = vpack.c.bf16 %v1693, %v1692
        %v1750 = vpack.c.bf16 %v1727, %v1726
        %v1751 = vpack.c.bf16 %v1729, %v1728
        %v1752 = vpack.c.bf16 %v1731, %v1730
        %v1753 = vpack.c.bf16 %v1733, %v1732
        %v1754 = vpack.c.bf16 %v1735, %v1734
        %v1755 = vpack.c.bf16 %v1737, %v1736
        %v1756 = vpack.c.bf16 %v1739, %v1738
        %v1757 = vpack.c.bf16 %v1741, %v1740
        %v1758 = vadd.f32 %v1678, %v1726
        %v1759 = vadd.f32 %v1679, %v1727
        %v1760 = vadd.f32 %v1680, %v1728
        %v1761 = vadd.f32 %v1681, %v1729
        %v1762 = vadd.f32 %v1682, %v1730
        %v1763 = vadd.f32 %v1683, %v1731
        %v1764 = vadd.f32 %v1684, %v1732
        %v1765 = vadd.f32 %v1685, %v1733
        %v1766 = vadd.f32 %v1686, %v1734
        %v1767 = vadd.f32 %v1687, %v1735
        %v1768 = vadd.f32 %v1688, %v1736
        %v1769 = vadd.f32 %v1689, %v1737
        %v1770 = vadd.f32 %v1690, %v1738
        %v1771 = vadd.f32 %v1691, %v1739
        %v1772 = vadd.f32 %v1692, %v1740
        %v1773 = vadd.f32 %v1693, %v1741
        %v1774 = vpack.c.bf16 %v1759, %v1758
        %v1775 = vpack.c.bf16 %v1761, %v1760
        %v1776 = vpack.c.bf16 %v1763, %v1762
        %v1777 = vpack.c.bf16 %v1765, %v1764
        %v1778 = vpack.c.bf16 %v1767, %v1766
        %v1779 = vpack.c.bf16 %v1769, %v1768
        %v1780 = vpack.c.bf16 %v1771, %v1770
        %v1781 = vpack.c.bf16 %v1773, %v1772
        %v1798 = vunpack.c.l.b16 %v874
        %v1799 = vunpack.c.l.b16 %v875
        %v1800 = vunpack.c.l.b16 %v876
        %v1801 = vunpack.c.l.b16 %v877
        %v1802 = vunpack.c.l.b16 %v878
        %v1803 = vunpack.c.l.b16 %v879
        %v1804 = vunpack.c.l.b16 %v880
        %v1805 = vunpack.c.l.b16 %v881
        %v1806 = vunpack.c.l.b16 %v882
        %v1807 = vunpack.c.l.b16 %v883
        %v1808 = vunpack.c.l.b16 %v884
        %v1809 = vunpack.c.l.b16 %v885
        %v1810 = vunpack.c.l.b16 %v886
        %v1811 = vunpack.c.l.b16 %v887
        %v1812 = vunpack.c.l.b16 %v888
        %v1813 = vunpack.c.l.b16 %v889
        %v1814 = vpack.c.b16 %v1799, %v1798
        %v1815 = vpack.c.b16 %v1801, %v1800
        %v1816 = vpack.c.b16 %v1803, %v1802
        %v1817 = vpack.c.b16 %v1805, %v1804
        %v1818 = vpack.c.b16 %v1807, %v1806
        %v1819 = vpack.c.b16 %v1809, %v1808
        %v1820 = vpack.c.b16 %v1811, %v1810
        %v1821 = vpack.c.b16 %v1813, %v1812
        %1830 = vmatpush.bf16.msra.mxu0 %v1821
        %1831 = vmatpush.bf16.msra.mxu0 %v1820
        %1832 = vmatpush.bf16.msra.mxu0 %v1819
        %1833 = vmatpush.bf16.msra.mxu0 %v1818
        %1834 = vmatpush.bf16.msra.mxu0 %v1817
        %1835 = vmatpush.bf16.msra.mxu0 %v1816
        %1836 = vmatpush.bf16.msra.mxu0 %v1815
        %1837 = vmatpush.bf16.msra.mxu0 %v1814
        %1838 = vmatmul.bf16.gmra.mxu0 %v1742
        %v1839 = vpop.f32.mrf.mxu0
        %v1840 = vadd.f32 0.0, %v1839
        %v1841 = vpop.f32.mrf.mxu0
        %v1842 = vadd.f32 0.0, %v1841
        %1843 = vmatmul.bf16.gmra.mxu0 %v1743
        %v1844 = vpop.f32.mrf.mxu0
        %v1845 = vadd.f32 0.0, %v1844
        %v1846 = vpop.f32.mrf.mxu0
        %v1847 = vadd.f32 0.0, %v1846
        %1848 = vmatmul.bf16.gmra.mxu0 %v1744
        %v1849 = vpop.f32.mrf.mxu0
        %v1850 = vadd.f32 0.0, %v1849
        %v1851 = vpop.f32.mrf.mxu0
        %v1852 = vadd.f32 0.0, %v1851
        %1853 = vmatmul.bf16.gmra.mxu0 %v1745
        %v1854 = vpop.f32.mrf.mxu0
        %v1855 = vadd.f32 0.0, %v1854
        %v1856 = vpop.f32.mrf.mxu0
        %v1857 = vadd.f32 0.0, %v1856
        %1858 = vmatmul.bf16.gmra.mxu0 %v1746
        %v1859 = vpop.f32.mrf.mxu0
        %v1860 = vadd.f32 0.0, %v1859
        %v1861 = vpop.f32.mrf.mxu0
        %v1862 = vadd.f32 0.0, %v1861
        %1863 = vmatmul.bf16.gmra.mxu0 %v1747
        %v1864 = vpop.f32.mrf.mxu0
        %v1865 = vadd.f32 0.0, %v1864
        %v1866 = vpop.f32.mrf.mxu0
        %v1867 = vadd.f32 0.0, %v1866
        %1868 = vmatmul.bf16.gmra.mxu0 %v1748
        %v1869 = vpop.f32.mrf.mxu0
        %v1870 = vadd.f32 0.0, %v1869
        %v1871 = vpop.f32.mrf.mxu0
        %v1872 = vadd.f32 0.0, %v1871
        %1873 = vmatmul.bf16.gmra.mxu0 %v1749
        %v1874 = vpop.f32.mrf.mxu0
        %v1875 = vadd.f32 0.0, %v1874
        %v1876 = vpop.f32.mrf.mxu0
        %v1877 = vadd.f32 0.0, %v1876
        %1878 = vdwg.mxu0
        %v1895 = vunpack.c.l.b16 %v890
        %v1896 = vunpack.c.l.b16 %v891
        %v1897 = vunpack.c.l.b16 %v892
        %v1898 = vunpack.c.l.b16 %v893
        %v1899 = vunpack.c.l.b16 %v894
        %v1900 = vunpack.c.l.b16 %v895
        %v1901 = vunpack.c.l.b16 %v896
        %v1902 = vunpack.c.l.b16 %v897
        %v1903 = vunpack.c.l.b16 %v898
        %v1904 = vunpack.c.l.b16 %v899
        %v1905 = vunpack.c.l.b16 %v900
        %v1906 = vunpack.c.l.b16 %v901
        %v1907 = vunpack.c.l.b16 %v902
        %v1908 = vunpack.c.l.b16 %v903
        %v1909 = vunpack.c.l.b16 %v904
        %v1910 = vunpack.c.l.b16 %v905
        %v1911 = vpack.c.b16 %v1896, %v1895
        %v1912 = vpack.c.b16 %v1898, %v1897
        %v1913 = vpack.c.b16 %v1900, %v1899
        %v1914 = vpack.c.b16 %v1902, %v1901
        %v1915 = vpack.c.b16 %v1904, %v1903
        %v1916 = vpack.c.b16 %v1906, %v1905
        %v1917 = vpack.c.b16 %v1908, %v1907
        %v1918 = vpack.c.b16 %v1910, %v1909
        %1927 = vmatpush.bf16.msra.mxu0 %v1918
        %1928 = vmatpush.bf16.msra.mxu0 %v1917
        %1929 = vmatpush.bf16.msra.mxu0 %v1916
        %1930 = vmatpush.bf16.msra.mxu0 %v1915
        %1931 = vmatpush.bf16.msra.mxu0 %v1914
        %1932 = vmatpush.bf16.msra.mxu0 %v1913
        %1933 = vmatpush.bf16.msra.mxu0 %v1912
        %1934 = vmatpush.bf16.msra.mxu0 %v1911
        %1935 = vmatmul.bf16.gmra.mxu0 %v1750
        %v1936 = vpop.f32.mrf.mxu0
        %v1937 = vadd.f32 0.0, %v1936
        %v1938 = vpop.f32.mrf.mxu0
        %v1939 = vadd.f32 0.0, %v1938
        %1940 = vmatmul.bf16.gmra.mxu0 %v1751
        %v1941 = vpop.f32.mrf.mxu0
        %v1942 = vadd.f32 0.0, %v1941
        %v1943 = vpop.f32.mrf.mxu0
        %v1944 = vadd.f32 0.0, %v1943
        %1945 = vmatmul.bf16.gmra.mxu0 %v1752
        %v1946 = vpop.f32.mrf.mxu0
        %v1947 = vadd.f32 0.0, %v1946
        %v1948 = vpop.f32.mrf.mxu0
        %v1949 = vadd.f32 0.0, %v1948
        %1950 = vmatmul.bf16.gmra.mxu0 %v1753
        %v1951 = vpop.f32.mrf.mxu0
        %v1952 = vadd.f32 0.0, %v1951
        %v1953 = vpop.f32.mrf.mxu0
        %v1954 = vadd.f32 0.0, %v1953
        %1955 = vmatmul.bf16.gmra.mxu0 %v1754
        %v1956 = vpop.f32.mrf.mxu0
        %v1957 = vadd.f32 0.0, %v1956
        %v1958 = vpop.f32.mrf.mxu0
        %v1959 = vadd.f32 0.0, %v1958
        %1960 = vmatmul.bf16.gmra.mxu0 %v1755
        %v1961 = vpop.f32.mrf.mxu0
        %v1962 = vadd.f32 0.0, %v1961
        %v1963 = vpop.f32.mrf.mxu0
        %v1964 = vadd.f32 0.0, %v1963
        %1965 = vmatmul.bf16.gmra.mxu0 %v1756
        %v1966 = vpop.f32.mrf.mxu0
        %v1967 = vadd.f32 0.0, %v1966
        %v1968 = vpop.f32.mrf.mxu0
        %v1969 = vadd.f32 0.0, %v1968
        %1970 = vmatmul.bf16.gmra.mxu0 %v1757
        %v1971 = vpop.f32.mrf.mxu0
        %v1972 = vadd.f32 0.0, %v1971
        %v1973 = vpop.f32.mrf.mxu0
        %v1974 = vadd.f32 0.0, %v1973
        %1975 = vdwg.mxu0
        %v1992 = vunpack.c.l.b16 %v906
        %v1993 = vunpack.c.l.b16 %v907
        %v1994 = vunpack.c.l.b16 %v908
        %v1995 = vunpack.c.l.b16 %v909
        %v1996 = vunpack.c.l.b16 %v910
        %v1997 = vunpack.c.l.b16 %v911
        %v1998 = vunpack.c.l.b16 %v912
        %v1999 = vunpack.c.l.b16 %v913
        %v2000 = vunpack.c.l.b16 %v914
        %v2001 = vunpack.c.l.b16 %v915
        %v2002 = vunpack.c.l.b16 %v916
        %v2003 = vunpack.c.l.b16 %v917
        %v2004 = vunpack.c.l.b16 %v918
        %v2005 = vunpack.c.l.b16 %v919
        %v2006 = vunpack.c.l.b16 %v920
        %v2007 = vunpack.c.l.b16 %v921
        %v2008 = vpack.c.b16 %v1993, %v1992
        %v2009 = vpack.c.b16 %v1995, %v1994
        %v2010 = vpack.c.b16 %v1997, %v1996
        %v2011 = vpack.c.b16 %v1999, %v1998
        %v2012 = vpack.c.b16 %v2001, %v2000
        %v2013 = vpack.c.b16 %v2003, %v2002
        %v2014 = vpack.c.b16 %v2005, %v2004
        %v2015 = vpack.c.b16 %v2007, %v2006
        %2024 = vmatpush.bf16.msra.mxu0 %v2015
        %2025 = vmatpush.bf16.msra.mxu0 %v2014
        %2026 = vmatpush.bf16.msra.mxu0 %v2013
        %2027 = vmatpush.bf16.msra.mxu0 %v2012
        %2028 = vmatpush.bf16.msra.mxu0 %v2011
        %2029 = vmatpush.bf16.msra.mxu0 %v2010
        %2030 = vmatpush.bf16.msra.mxu0 %v2009
        %2031 = vmatpush.bf16.msra.mxu0 %v2008
        %2032 = vmatmul.bf16.gmra.mxu0 %v1774
        %v2033 = vpop.f32.mrf.mxu0
        %v2034 = vadd.f32 0.0, %v2033
        %v2035 = vpop.f32.mrf.mxu0
        %v2036 = vadd.f32 0.0, %v2035
        %2037 = vmatmul.bf16.gmra.mxu0 %v1775
        %v2038 = vpop.f32.mrf.mxu0
        %v2039 = vadd.f32 0.0, %v2038
        %v2040 = vpop.f32.mrf.mxu0
        %v2041 = vadd.f32 0.0, %v2040
        %2042 = vmatmul.bf16.gmra.mxu0 %v1776
        %v2043 = vpop.f32.mrf.mxu0
        %v2044 = vadd.f32 0.0, %v2043
        %v2045 = vpop.f32.mrf.mxu0
        %v2046 = vadd.f32 0.0, %v2045
        %2047 = vmatmul.bf16.gmra.mxu0 %v1777
        %v2048 = vpop.f32.mrf.mxu0
        %v2049 = vadd.f32 0.0, %v2048
        %v2050 = vpop.f32.mrf.mxu0
        %v2051 = vadd.f32 0.0, %v2050
        %2052 = vmatmul.bf16.gmra.mxu0 %v1778
        %v2053 = vpop.f32.mrf.mxu0
        %v2054 = vadd.f32 0.0, %v2053
        %v2055 = vpop.f32.mrf.mxu0
        %v2056 = vadd.f32 0.0, %v2055
        %2057 = vmatmul.bf16.gmra.mxu0 %v1779
        %v2058 = vpop.f32.mrf.mxu0
        %v2059 = vadd.f32 0.0, %v2058
        %v2060 = vpop.f32.mrf.mxu0
        %v2061 = vadd.f32 0.0, %v2060
        %2062 = vmatmul.bf16.gmra.mxu0 %v1780
        %v2063 = vpop.f32.mrf.mxu0
        %v2064 = vadd.f32 0.0, %v2063
        %v2065 = vpop.f32.mrf.mxu0
        %v2066 = vadd.f32 0.0, %v2065
        %2067 = vmatmul.bf16.gmra.mxu0 %v1781
        %v2068 = vpop.f32.mrf.mxu0
        %v2069 = vadd.f32 0.0, %v2068
        %v2070 = vpop.f32.mrf.mxu0
        %v2071 = vadd.f32 0.0, %v2070
        %2072 = vdwg.mxu0
        %v2073 = vsub.f32 %v1840, %v1937
        %v2074 = vsub.f32 %v1842, %v1939
        %v2075 = vsub.f32 %v1845, %v1942
        %v2076 = vsub.f32 %v1847, %v1944
        %v2077 = vsub.f32 %v1850, %v1947
        %v2078 = vsub.f32 %v1852, %v1949
        %v2079 = vsub.f32 %v1855, %v1952
        %v2080 = vsub.f32 %v1857, %v1954
        %v2081 = vsub.f32 %v1860, %v1957
        %v2082 = vsub.f32 %v1862, %v1959
        %v2083 = vsub.f32 %v1865, %v1962
        %v2084 = vsub.f32 %v1867, %v1964
        %v2085 = vsub.f32 %v1870, %v1967
        %v2086 = vsub.f32 %v1872, %v1969
        %v2087 = vsub.f32 %v1875, %v1972
        %v2088 = vsub.f32 %v1877, %v1974
        %v2089 = vsub.f32 %v2034, %v1840
        %v2090 = vsub.f32 %v2036, %v1842
        %v2091 = vsub.f32 %v2039, %v1845
        %v2092 = vsub.f32 %v2041, %v1847
        %v2093 = vsub.f32 %v2044, %v1850
        %v2094 = vsub.f32 %v2046, %v1852
        %v2095 = vsub.f32 %v2049, %v1855
        %v2096 = vsub.f32 %v2051, %v1857
        %v2097 = vsub.f32 %v2054, %v1860
        %v2098 = vsub.f32 %v2056, %v1862
        %v2099 = vsub.f32 %v2059, %v1865
        %v2100 = vsub.f32 %v2061, %v1867
        %v2101 = vsub.f32 %v2064, %v1870
        %v2102 = vsub.f32 %v2066, %v1872
        %v2103 = vsub.f32 %v2069, %v1875
        %v2104 = vsub.f32 %v2071, %v1877
        %v2105 = vsub.f32 %v2089, %v1937
        %v2106 = vsub.f32 %v2090, %v1939
        %v2107 = vsub.f32 %v2091, %v1942
        %v2108 = vsub.f32 %v2092, %v1944
        %v2109 = vsub.f32 %v2093, %v1947
        %v2110 = vsub.f32 %v2094, %v1949
        %v2111 = vsub.f32 %v2095, %v1952
        %v2112 = vsub.f32 %v2096, %v1954
        %v2113 = vsub.f32 %v2097, %v1957
        %v2114 = vsub.f32 %v2098, %v1959
        %v2115 = vsub.f32 %v2099, %v1962
        %v2116 = vsub.f32 %v2100, %v1964
        %v2117 = vsub.f32 %v2101, %v1967
        %v2118 = vsub.f32 %v2102, %v1969
        %v2119 = vsub.f32 %v2103, %v1972
        %v2120 = vsub.f32 %v2104, %v1974
        %v2121 = vpack.c.bf16 %v2074, %v2073
        %v2122 = vpack.c.bf16 %v2076, %v2075
        %v2123 = vpack.c.bf16 %v2078, %v2077
        %v2124 = vpack.c.bf16 %v2080, %v2079
        %v2125 = vpack.c.bf16 %v2082, %v2081
        %v2126 = vpack.c.bf16 %v2084, %v2083
        %v2127 = vpack.c.bf16 %v2086, %v2085
        %v2128 = vpack.c.bf16 %v2088, %v2087
        %v2129 = vpack.c.bf16 %v2106, %v2105
        %v2130 = vpack.c.bf16 %v2108, %v2107
        %v2131 = vpack.c.bf16 %v2110, %v2109
        %v2132 = vpack.c.bf16 %v2112, %v2111
        %v2133 = vpack.c.bf16 %v2114, %v2113
        %v2134 = vpack.c.bf16 %v2116, %v2115
        %v2135 = vpack.c.bf16 %v2118, %v2117
        %v2136 = vpack.c.bf16 %v2120, %v2119
        %v2137 = vadd.f32 %v2073, %v2105
        %v2138 = vadd.f32 %v2074, %v2106
        %v2139 = vadd.f32 %v2075, %v2107
        %v2140 = vadd.f32 %v2076, %v2108
        %v2141 = vadd.f32 %v2077, %v2109
        %v2142 = vadd.f32 %v2078, %v2110
        %v2143 = vadd.f32 %v2079, %v2111
        %v2144 = vadd.f32 %v2080, %v2112
        %v2145 = vadd.f32 %v2081, %v2113
        %v2146 = vadd.f32 %v2082, %v2114
        %v2147 = vadd.f32 %v2083, %v2115
        %v2148 = vadd.f32 %v2084, %v2116
        %v2149 = vadd.f32 %v2085, %v2117
        %v2150 = vadd.f32 %v2086, %v2118
        %v2151 = vadd.f32 %v2087, %v2119
        %v2152 = vadd.f32 %v2088, %v2120
        %v2153 = vpack.c.bf16 %v2138, %v2137
        %v2154 = vpack.c.bf16 %v2140, %v2139
        %v2155 = vpack.c.bf16 %v2142, %v2141
        %v2156 = vpack.c.bf16 %v2144, %v2143
        %v2157 = vpack.c.bf16 %v2146, %v2145
        %v2158 = vpack.c.bf16 %v2148, %v2147
        %v2159 = vpack.c.bf16 %v2150, %v2149
        %v2160 = vpack.c.bf16 %v2152, %v2151
        %2161 = vmatpush.bf16.msra.mxu0 %v2128
        %2162 = vmatpush.bf16.msra.mxu0 %v2127
        %2163 = vmatpush.bf16.msra.mxu0 %v2126
        %2164 = vmatpush.bf16.msra.mxu0 %v2125
        %2165 = vmatpush.bf16.msra.mxu0 %v2124
        %2166 = vmatpush.bf16.msra.mxu0 %v2123
        %2167 = vmatpush.bf16.msra.mxu0 %v2122
        %2168 = vmatpush.bf16.msra.mxu0 %v2121
        %2169 = vmatmul.bf16.gmra.mxu0 %v1814
        %v2170 = vpop.f32.mrf.mxu0
        %v2171 = vadd.f32 0.0, %v2170
        %v2172 = vpop.f32.mrf.mxu0
        %v2173 = vadd.f32 0.0, %v2172
        %2174 = vmatmul.bf16.gmra.mxu0 %v1815
        %v2175 = vpop.f32.mrf.mxu0
        %v2176 = vadd.f32 0.0, %v2175
        %v2177 = vpop.f32.mrf.mxu0
        %v2178 = vadd.f32 0.0, %v2177
        %2179 = vmatmul.bf16.gmra.mxu0 %v1816
        %v2180 = vpop.f32.mrf.mxu0
        %v2181 = vadd.f32 0.0, %v2180
        %v2182 = vpop.f32.mrf.mxu0
        %v2183 = vadd.f32 0.0, %v2182
        %2184 = vmatmul.bf16.gmra.mxu0 %v1817
        %v2185 = vpop.f32.mrf.mxu0
        %v2186 = vadd.f32 0.0, %v2185
        %v2187 = vpop.f32.mrf.mxu0
        %v2188 = vadd.f32 0.0, %v2187
        %2189 = vmatmul.bf16.gmra.mxu0 %v1818
        %v2190 = vpop.f32.mrf.mxu0
        %v2191 = vadd.f32 0.0, %v2190
        %v2192 = vpop.f32.mrf.mxu0
        %v2193 = vadd.f32 0.0, %v2192
        %2194 = vmatmul.bf16.gmra.mxu0 %v1819
        %v2195 = vpop.f32.mrf.mxu0
        %v2196 = vadd.f32 0.0, %v2195
        %v2197 = vpop.f32.mrf.mxu0
        %v2198 = vadd.f32 0.0, %v2197
        %2199 = vmatmul.bf16.gmra.mxu0 %v1820
        %v2200 = vpop.f32.mrf.mxu0
        %v2201 = vadd.f32 0.0, %v2200
        %v2202 = vpop.f32.mrf.mxu0
        %v2203 = vadd.f32 0.0, %v2202
        %2204 = vmatmul.bf16.gmra.mxu0 %v1821
        %v2205 = vpop.f32.mrf.mxu0
        %v2206 = vadd.f32 0.0, %v2205
        %v2207 = vpop.f32.mrf.mxu0
        %v2208 = vadd.f32 0.0, %v2207
        %2209 = vdwg.mxu0
        %2210 = vmatpush.bf16.msra.mxu0 %v2136
        %2211 = vmatpush.bf16.msra.mxu0 %v2135
        %2212 = vmatpush.bf16.msra.mxu0 %v2134
        %2213 = vmatpush.bf16.msra.mxu0 %v2133
        %2214 = vmatpush.bf16.msra.mxu0 %v2132
        %2215 = vmatpush.bf16.msra.mxu0 %v2131
        %2216 = vmatpush.bf16.msra.mxu0 %v2130
        %2217 = vmatpush.bf16.msra.mxu0 %v2129
        %2218 = vmatmul.bf16.gmra.mxu0 %v1911
        %v2219 = vpop.f32.mrf.mxu0
        %v2220 = vadd.f32 0.0, %v2219
        %v2221 = vpop.f32.mrf.mxu0
        %v2222 = vadd.f32 0.0, %v2221
        %2223 = vmatmul.bf16.gmra.mxu0 %v1912
        %v2224 = vpop.f32.mrf.mxu0
        %v2225 = vadd.f32 0.0, %v2224
        %v2226 = vpop.f32.mrf.mxu0
        %v2227 = vadd.f32 0.0, %v2226
        %2228 = vmatmul.bf16.gmra.mxu0 %v1913
        %v2229 = vpop.f32.mrf.mxu0
        %v2230 = vadd.f32 0.0, %v2229
        %v2231 = vpop.f32.mrf.mxu0
        %v2232 = vadd.f32 0.0, %v2231
        %2233 = vmatmul.bf16.gmra.mxu0 %v1914
        %v2234 = vpop.f32.mrf.mxu0
        %v2235 = vadd.f32 0.0, %v2234
        %v2236 = vpop.f32.mrf.mxu0
        %v2237 = vadd.f32 0.0, %v2236
        %2238 = vmatmul.bf16.gmra.mxu0 %v1915
        %v2239 = vpop.f32.mrf.mxu0
        %v2240 = vadd.f32 0.0, %v2239
        %v2241 = vpop.f32.mrf.mxu0
        %v2242 = vadd.f32 0.0, %v2241
        %2243 = vmatmul.bf16.gmra.mxu0 %v1916
        %v2244 = vpop.f32.mrf.mxu0
        %v2245 = vadd.f32 0.0, %v2244
        %v2246 = vpop.f32.mrf.mxu0
        %v2247 = vadd.f32 0.0, %v2246
        %2248 = vmatmul.bf16.gmra.mxu0 %v1917
        %v2249 = vpop.f32.mrf.mxu0
        %v2250 = vadd.f32 0.0, %v2249
        %v2251 = vpop.f32.mrf.mxu0
        %v2252 = vadd.f32 0.0, %v2251
        %2253 = vmatmul.bf16.gmra.mxu0 %v1918
        %v2254 = vpop.f32.mrf.mxu0
        %v2255 = vadd.f32 0.0, %v2254
        %v2256 = vpop.f32.mrf.mxu0
        %v2257 = vadd.f32 0.0, %v2256
        %2258 = vdwg.mxu0
        %2259 = vmatpush.bf16.msra.mxu0 %v2160
        %2260 = vmatpush.bf16.msra.mxu0 %v2159
        %2261 = vmatpush.bf16.msra.mxu0 %v2158
        %2262 = vmatpush.bf16.msra.mxu0 %v2157
        %2263 = vmatpush.bf16.msra.mxu0 %v2156
        %2264 = vmatpush.bf16.msra.mxu0 %v2155
        %2265 = vmatpush.bf16.msra.mxu0 %v2154
        %2266 = vmatpush.bf16.msra.mxu0 %v2153
        %2267 = vmatmul.bf16.gmra.mxu0 %v2008
        %v2268 = vpop.f32.mrf.mxu0
        %v2269 = vadd.f32 0.0, %v2268
        %v2270 = vpop.f32.mrf.mxu0
        %v2271 = vadd.f32 0.0, %v2270
        %2272 = vmatmul.bf16.gmra.mxu0 %v2009
        %v2273 = vpop.f32.mrf.mxu0
        %v2274 = vadd.f32 0.0, %v2273
        %v2275 = vpop.f32.mrf.mxu0
        %v2276 = vadd.f32 0.0, %v2275
        %2277 = vmatmul.bf16.gmra.mxu0 %v2010
        %v2278 = vpop.f32.mrf.mxu0
        %v2279 = vadd.f32 0.0, %v2278
        %v2280 = vpop.f32.mrf.mxu0
        %v2281 = vadd.f32 0.0, %v2280
        %2282 = vmatmul.bf16.gmra.mxu0 %v2011
        %v2283 = vpop.f32.mrf.mxu0
        %v2284 = vadd.f32 0.0, %v2283
        %v2285 = vpop.f32.mrf.mxu0
        %v2286 = vadd.f32 0.0, %v2285
        %2287 = vmatmul.bf16.gmra.mxu0 %v2012
        %v2288 = vpop.f32.mrf.mxu0
        %v2289 = vadd.f32 0.0, %v2288
        %v2290 = vpop.f32.mrf.mxu0
        %v2291 = vadd.f32 0.0, %v2290
        %2292 = vmatmul.bf16.gmra.mxu0 %v2013
        %v2293 = vpop.f32.mrf.mxu0
        %v2294 = vadd.f32 0.0, %v2293
        %v2295 = vpop.f32.mrf.mxu0
        %v2296 = vadd.f32 0.0, %v2295
        %2297 = vmatmul.bf16.gmra.mxu0 %v2014
        %v2298 = vpop.f32.mrf.mxu0
        %v2299 = vadd.f32 0.0, %v2298
        %v2300 = vpop.f32.mrf.mxu0
        %v2301 = vadd.f32 0.0, %v2300
        %2302 = vmatmul.bf16.gmra.mxu0 %v2015
        %v2303 = vpop.f32.mrf.mxu0
        %v2304 = vadd.f32 0.0, %v2303
        %v2305 = vpop.f32.mrf.mxu0
        %v2306 = vadd.f32 0.0, %v2305
        %2307 = vdwg.mxu0
        %v2308 = vsub.f32 %v2171, %v2220
        %v2309 = vsub.f32 %v2173, %v2222
        %v2310 = vsub.f32 %v2176, %v2225
        %v2311 = vsub.f32 %v2178, %v2227
        %v2312 = vsub.f32 %v2181, %v2230
        %v2313 = vsub.f32 %v2183, %v2232
        %v2314 = vsub.f32 %v2186, %v2235
        %v2315 = vsub.f32 %v2188, %v2237
        %v2316 = vsub.f32 %v2191, %v2240
        %v2317 = vsub.f32 %v2193, %v2242
        %v2318 = vsub.f32 %v2196, %v2245
        %v2319 = vsub.f32 %v2198, %v2247
        %v2320 = vsub.f32 %v2201, %v2250
        %v2321 = vsub.f32 %v2203, %v2252
        %v2322 = vsub.f32 %v2206, %v2255
        %v2323 = vsub.f32 %v2208, %v2257
        %v2324 = vsub.f32 %v2269, %v2171
        %v2325 = vsub.f32 %v2271, %v2173
        %v2326 = vsub.f32 %v2274, %v2176
        %v2327 = vsub.f32 %v2276, %v2178
        %v2328 = vsub.f32 %v2279, %v2181
        %v2329 = vsub.f32 %v2281, %v2183
        %v2330 = vsub.f32 %v2284, %v2186
        %v2331 = vsub.f32 %v2286, %v2188
        %v2332 = vsub.f32 %v2289, %v2191
        %v2333 = vsub.f32 %v2291, %v2193
        %v2334 = vsub.f32 %v2294, %v2196
        %v2335 = vsub.f32 %v2296, %v2198
        %v2336 = vsub.f32 %v2299, %v2201
        %v2337 = vsub.f32 %v2301, %v2203
        %v2338 = vsub.f32 %v2304, %v2206
        %v2339 = vsub.f32 %v2306, %v2208
        %v2340 = vsub.f32 %v2324, %v2220
        %v2341 = vsub.f32 %v2325, %v2222
        %v2342 = vsub.f32 %v2326, %v2225
        %v2343 = vsub.f32 %v2327, %v2227
        %v2344 = vsub.f32 %v2328, %v2230
        %v2345 = vsub.f32 %v2329, %v2232
        %v2346 = vsub.f32 %v2330, %v2235
        %v2347 = vsub.f32 %v2331, %v2237
        %v2348 = vsub.f32 %v2332, %v2240
        %v2349 = vsub.f32 %v2333, %v2242
        %v2350 = vsub.f32 %v2334, %v2245
        %v2351 = vsub.f32 %v2335, %v2247
        %v2352 = vsub.f32 %v2336, %v2250
        %v2353 = vsub.f32 %v2337, %v2252
        %v2354 = vsub.f32 %v2338, %v2255
        %v2355 = vsub.f32 %v2339, %v2257
        %v2356 = vmul.f32 %v2308, %v954
        %v2357 = vmul.f32 %v2309, %v955
        %v2358 = vmul.f32 %v2310, %v956
        %v2359 = vmul.f32 %v2311, %v957
        %v2360 = vmul.f32 %v2312, %v958
        %v2361 = vmul.f32 %v2313, %v959
        %v2362 = vmul.f32 %v2314, %v960
        %v2363 = vmul.f32 %v2315, %v961
        %v2364 = vmul.f32 %v2316, %v962
        %v2365 = vmul.f32 %v2317, %v963
        %v2366 = vmul.f32 %v2318, %v964
        %v2367 = vmul.f32 %v2319, %v965
        %v2368 = vmul.f32 %v2320, %v966
        %v2369 = vmul.f32 %v2321, %v967
        %v2370 = vmul.f32 %v2322, %v968
        %v2371 = vmul.f32 %v2323, %v969
        %v2372 = vmul.f32 %v2340, %v970
        %v2373 = vmul.f32 %v2341, %v971
        %v2374 = vmul.f32 %v2342, %v972
        %v2375 = vmul.f32 %v2343, %v973
        %v2376 = vmul.f32 %v2344, %v974
        %v2377 = vmul.f32 %v2345, %v975
        %v2378 = vmul.f32 %v2346, %v976
        %v2379 = vmul.f32 %v2347, %v977
        %v2380 = vmul.f32 %v2348, %v978
        %v2381 = vmul.f32 %v2349, %v979
        %v2382 = vmul.f32 %v2350, %v980
        %v2383 = vmul.f32 %v2351, %v981
        %v2384 = vmul.f32 %v2352, %v982
        %v2385 = vmul.f32 %v2353, %v983
        %v2386 = vmul.f32 %v2354, %v984
        %v2387 = vmul.f32 %v2355, %v985
        %v2388 = vsub.f32 %v2356, %v2372
        %v2389 = vsub.f32 %v2357, %v2373
        %v2390 = vsub.f32 %v2358, %v2374
        %v2391 = vsub.f32 %v2359, %v2375
        %v2392 = vsub.f32 %v2360, %v2376
        %v2393 = vsub.f32 %v2361, %v2377
        %v2394 = vsub.f32 %v2362, %v2378
        %v2395 = vsub.f32 %v2363, %v2379
        %v2396 = vsub.f32 %v2364, %v2380
        %v2397 = vsub.f32 %v2365, %v2381
        %v2398 = vsub.f32 %v2366, %v2382
        %v2399 = vsub.f32 %v2367, %v2383
        %v2400 = vsub.f32 %v2368, %v2384
        %v2401 = vsub.f32 %v2369, %v2385
        %v2402 = vsub.f32 %v2370, %v2386
        %v2403 = vsub.f32 %v2371, %v2387
        %v2404 = vmul.f32 %v2308, %v970
        %v2405 = vmul.f32 %v2309, %v971
        %v2406 = vmul.f32 %v2310, %v972
        %v2407 = vmul.f32 %v2311, %v973
        %v2408 = vmul.f32 %v2312, %v974
        %v2409 = vmul.f32 %v2313, %v975
        %v2410 = vmul.f32 %v2314, %v976
        %v2411 = vmul.f32 %v2315, %v977
        %v2412 = vmul.f32 %v2316, %v978
        %v2413 = vmul.f32 %v2317, %v979
        %v2414 = vmul.f32 %v2318, %v980
        %v2415 = vmul.f32 %v2319, %v981
        %v2416 = vmul.f32 %v2320, %v982
        %v2417 = vmul.f32 %v2321, %v983
        %v2418 = vmul.f32 %v2322, %v984
        %v2419 = vmul.f32 %v2323, %v985
        %v2420 = vmul.f32 %v2340, %v954
        %v2421 = vmul.f32 %v2341, %v955
        %v2422 = vmul.f32 %v2342, %v956
        %v2423 = vmul.f32 %v2343, %v957
        %v2424 = vmul.f32 %v2344, %v958
        %v2425 = vmul.f32 %v2345, %v959
        %v2426 = vmul.f32 %v2346, %v960
        %v2427 = vmul.f32 %v2347, %v961
        %v2428 = vmul.f32 %v2348, %v962
        %v2429 = vmul.f32 %v2349, %v963
        %v2430 = vmul.f32 %v2350, %v964
        %v2431 = vmul.f32 %v2351, %v965
        %v2432 = vmul.f32 %v2352, %v966
        %v2433 = vmul.f32 %v2353, %v967
        %v2434 = vmul.f32 %v2354, %v968
        %v2435 = vmul.f32 %v2355, %v969
        %v2436 = vadd.f32 %v2404, %v2420
        %v2437 = vadd.f32 %v2405, %v2421
        %v2438 = vadd.f32 %v2406, %v2422
        %v2439 = vadd.f32 %v2407, %v2423
        %v2440 = vadd.f32 %v2408, %v2424
        %v2441 = vadd.f32 %v2409, %v2425
        %v2442 = vadd.f32 %v2410, %v2426
        %v2443 = vadd.f32 %v2411, %v2427
        %v2444 = vadd.f32 %v2412, %v2428
        %v2445 = vadd.f32 %v2413, %v2429
        %v2446 = vadd.f32 %v2414, %v2430
        %v2447 = vadd.f32 %v2415, %v2431
        %v2448 = vadd.f32 %v2416, %v2432
        %v2449 = vadd.f32 %v2417, %v2433
        %v2450 = vadd.f32 %v2418, %v2434
        %v2451 = vadd.f32 %v2419, %v2435
        %2452 = vst [vmem:[%s998] sm:$0xff] %v2388
        %2453 = vst [vmem:[%s998 + $0x8] sm:$0xff] %v2389
        %2454 = vst [vmem:[%s998 + $0x10] sm:$0xff] %v2390
        %2455 = vst [vmem:[%s998 + $0x18] sm:$0xff] %v2391
        %2456 = vst [vmem:[%s998 + $0x20] sm:$0xff] %v2392
        %2457 = vst [vmem:[%s998 + $0x28] sm:$0xff] %v2393
        %2458 = vst [vmem:[%s998 + $0x30] sm:$0xff] %v2394
        %2459 = vst [vmem:[%s998 + $0x38] sm:$0xff] %v2395
        %2460 = vst [vmem:[%s998 + $0x40] sm:$0xff] %v2396
        %2461 = vst [vmem:[%s998 + $0x48] sm:$0xff] %v2397
        %2462 = vst [vmem:[%s998 + $0x50] sm:$0xff] %v2398
        %2463 = vst [vmem:[%s998 + $0x58] sm:$0xff] %v2399
        %2464 = vst [vmem:[%s998 + $0x60] sm:$0xff] %v2400
        %2465 = vst [vmem:[%s998 + $0x68] sm:$0xff] %v2401
        %2466 = vst [vmem:[%s998 + $0x70] sm:$0xff] %v2402
        %2467 = vst [vmem:[%s998 + $0x78] sm:$0xff] %v2403
        %2468 = vst [vmem:[%s1015] sm:$0xff] %v2436
        %2469 = vst [vmem:[%s1015 + $0x8] sm:$0xff] %v2437
        %2470 = vst [vmem:[%s1015 + $0x10] sm:$0xff] %v2438
        %2471 = vst [vmem:[%s1015 + $0x18] sm:$0xff] %v2439
        %2472 = vst [vmem:[%s1015 + $0x20] sm:$0xff] %v2440
        %2473 = vst [vmem:[%s1015 + $0x28] sm:$0xff] %v2441
        %2474 = vst [vmem:[%s1015 + $0x30] sm:$0xff] %v2442
        %2475 = vst [vmem:[%s1015 + $0x38] sm:$0xff] %v2443
        %2476 = vst [vmem:[%s1015 + $0x40] sm:$0xff] %v2444
        %2477 = vst [vmem:[%s1015 + $0x48] sm:$0xff] %v2445
        %2478 = vst [vmem:[%s1015 + $0x50] sm:$0xff] %v2446
        %2479 = vst [vmem:[%s1015 + $0x58] sm:$0xff] %v2447
        %2480 = vst [vmem:[%s1015 + $0x60] sm:$0xff] %v2448
        %2481 = vst [vmem:[%s1015 + $0x68] sm:$0xff] %v2449
        %2482 = vst [vmem:[%s1015 + $0x70] sm:$0xff] %v2450
        %2483 = vst [vmem:[%s1015 + $0x78] sm:$0xff] %v2451
        // Predicated region
        $region80: #{fourier_dnn_forward.3} parent=76 // pred_check
          _
        $region81: #{fourier_dnn_forward.3} parent=76 // pred_check_branch
          %2485 = sbr.rel (%p989) target = $region83
        $region82: #{fourier_dnn_forward.3} parent=76 // pred_region
          %s2486 = scalar_lea.vmem %s659, %s997
          %2487 = vst [vmem:[%s2486] sm:$0xff] %v2388
          %2488 = vst [vmem:[%s2486 + $0x8] sm:$0xff] %v2389
          %2489 = vst [vmem:[%s2486 + $0x10] sm:$0xff] %v2390
          %2490 = vst [vmem:[%s2486 + $0x18] sm:$0xff] %v2391
          %2491 = vst [vmem:[%s2486 + $0x20] sm:$0xff] %v2392
          %2492 = vst [vmem:[%s2486 + $0x28] sm:$0xff] %v2393
          %2493 = vst [vmem:[%s2486 + $0x30] sm:$0xff] %v2394
          %2494 = vst [vmem:[%s2486 + $0x38] sm:$0xff] %v2395
          %2495 = vst [vmem:[%s2486 + $0x40] sm:$0xff] %v2396
          %2496 = vst [vmem:[%s2486 + $0x48] sm:$0xff] %v2397
          %2497 = vst [vmem:[%s2486 + $0x50] sm:$0xff] %v2398
          %2498 = vst [vmem:[%s2486 + $0x58] sm:$0xff] %v2399
          %2499 = vst [vmem:[%s2486 + $0x60] sm:$0xff] %v2400
          %2500 = vst [vmem:[%s2486 + $0x68] sm:$0xff] %v2401
          %2501 = vst [vmem:[%s2486 + $0x70] sm:$0xff] %v2402
          %2502 = vst [vmem:[%s2486 + $0x78] sm:$0xff] %v2403
          %s2503 = scalar_lea.vmem %s680, %s997
          %2504 = vst [vmem:[%s2503] sm:$0xff] %v2436
          %2505 = vst [vmem:[%s2503 + $0x8] sm:$0xff] %v2437
          %2506 = vst [vmem:[%s2503 + $0x10] sm:$0xff] %v2438
          %2507 = vst [vmem:[%s2503 + $0x18] sm:$0xff] %v2439
          %2508 = vst [vmem:[%s2503 + $0x20] sm:$0xff] %v2440
          %2509 = vst [vmem:[%s2503 + $0x28] sm:$0xff] %v2441
          %2510 = vst [vmem:[%s2503 + $0x30] sm:$0xff] %v2442
          %2511 = vst [vmem:[%s2503 + $0x38] sm:$0xff] %v2443
          %2512 = vst [vmem:[%s2503 + $0x40] sm:$0xff] %v2444
          %2513 = vst [vmem:[%s2503 + $0x48] sm:$0xff] %v2445
          %2514 = vst [vmem:[%s2503 + $0x50] sm:$0xff] %v2446
          %2515 = vst [vmem:[%s2503 + $0x58] sm:$0xff] %v2447
          %2516 = vst [vmem:[%s2503 + $0x60] sm:$0xff] %v2448
          %2517 = vst [vmem:[%s2503 + $0x68] sm:$0xff] %v2449
          %2518 = vst [vmem:[%s2503 + $0x70] sm:$0xff] %v2450
          %2519 = vst [vmem:[%s2503 + $0x78] sm:$0xff] %v2451
        $region83: #{fourier_dnn_forward.3} parent=76 // pred_fallthru
          _
        // Predicated region
        $region84: #{fourier_dnn_forward.3} parent=76 // pred_check
          %p2520 = pneg %p986
        $region85: #{fourier_dnn_forward.3} parent=76 // pred_check_branch
          %2522 = sbr.rel (%p2520) target = $region87
        $region86: #{fourier_dnn_forward.3} parent=76 // pred_region
          %v2523 = vmul.f32 %v2308, %v2308
          %v2524 = vmul.f32 %v2309, %v2309
          %v2525 = vmul.f32 %v2310, %v2310
          %v2526 = vmul.f32 %v2311, %v2311
          %v2527 = vmul.f32 %v2312, %v2312
          %v2528 = vmul.f32 %v2313, %v2313
          %v2529 = vmul.f32 %v2314, %v2314
          %v2530 = vmul.f32 %v2315, %v2315
          %v2531 = vmul.f32 %v2316, %v2316
          %v2532 = vmul.f32 %v2317, %v2317
          %v2533 = vmul.f32 %v2318, %v2318
          %v2534 = vmul.f32 %v2319, %v2319
          %v2535 = vmul.f32 %v2320, %v2320
          %v2536 = vmul.f32 %v2321, %v2321
          %v2537 = vmul.f32 %v2322, %v2322
          %v2538 = vmul.f32 %v2323, %v2323
          %v2539 = vmul.f32 %v2340, %v2340
          %v2540 = vmul.f32 %v2341, %v2341
          %v2541 = vmul.f32 %v2342, %v2342
          %v2542 = vmul.f32 %v2343, %v2343
          %v2543 = vmul.f32 %v2344, %v2344
          %v2544 = vmul.f32 %v2345, %v2345
          %v2545 = vmul.f32 %v2346, %v2346
          %v2546 = vmul.f32 %v2347, %v2347
          %v2547 = vmul.f32 %v2348, %v2348
          %v2548 = vmul.f32 %v2349, %v2349
          %v2549 = vmul.f32 %v2350, %v2350
          %v2550 = vmul.f32 %v2351, %v2351
          %v2551 = vmul.f32 %v2352, %v2352
          %v2552 = vmul.f32 %v2353, %v2353
          %v2553 = vmul.f32 %v2354, %v2354
          %v2554 = vmul.f32 %v2355, %v2355
          %v2555 = vadd.f32 %v2523, %v2539
          %v2556 = vadd.f32 %v2524, %v2540
          %v2557 = vadd.f32 %v2525, %v2541
          %v2558 = vadd.f32 %v2526, %v2542
          %v2559 = vadd.f32 %v2527, %v2543
          %v2560 = vadd.f32 %v2528, %v2544
          %v2561 = vadd.f32 %v2529, %v2545
          %v2562 = vadd.f32 %v2530, %v2546
          %v2563 = vadd.f32 %v2531, %v2547
          %v2564 = vadd.f32 %v2532, %v2548
          %v2565 = vadd.f32 %v2533, %v2549
          %v2566 = vadd.f32 %v2534, %v2550
          %v2567 = vadd.f32 %v2535, %v2551
          %v2568 = vadd.f32 %v2536, %v2552
          %v2569 = vadd.f32 %v2537, %v2553
          %v2570 = vadd.f32 %v2538, %v2554
          %s2571 = scalar_lea.vmem %s692, %s997
          %2572 = vst [vmem:[%s2571] sm:$0xff] %v2555
          %2573 = vst [vmem:[%s2571 + $0x8] sm:$0xff] %v2556
          %2574 = vst [vmem:[%s2571 + $0x10] sm:$0xff] %v2557
          %2575 = vst [vmem:[%s2571 + $0x18] sm:$0xff] %v2558
          %2576 = vst [vmem:[%s2571 + $0x20] sm:$0xff] %v2559
          %2577 = vst [vmem:[%s2571 + $0x28] sm:$0xff] %v2560
          %2578 = vst [vmem:[%s2571 + $0x30] sm:$0xff] %v2561
          %2579 = vst [vmem:[%s2571 + $0x38] sm:$0xff] %v2562
          %2580 = vst [vmem:[%s2571 + $0x40] sm:$0xff] %v2563
          %2581 = vst [vmem:[%s2571 + $0x48] sm:$0xff] %v2564
          %2582 = vst [vmem:[%s2571 + $0x50] sm:$0xff] %v2565
          %2583 = vst [vmem:[%s2571 + $0x58] sm:$0xff] %v2566
          %2584 = vst [vmem:[%s2571 + $0x60] sm:$0xff] %v2567
          %2585 = vst [vmem:[%s2571 + $0x68] sm:$0xff] %v2568
          %2586 = vst [vmem:[%s2571 + $0x70] sm:$0xff] %v2569
          %2587 = vst [vmem:[%s2571 + $0x78] sm:$0xff] %v2570
        $region87: #{fourier_dnn_forward.3} parent=76 // pred_fallthru
          _
      $region77: #{fourier_dnn_forward.3} parent=67 // loop_footer
        %s996 = sadd.s32 1, %s992
      $region78: #{fourier_dnn_forward.3} parent=67 // loop_footer_branch
        %991 = sbr.rel target = $region74
      $region79: #{fourier_dnn_forward.3} parent=67 // loop_exit
        _
      %s2588 = ssub.s32 %s31, 1
      %p2589 = scmp.gt.s32.totalorder %s2588, 0
      %s2590 = scalar_select %p2589, %s2588, 0
      %p2591 = scmp.lt.s32.totalorder %s2590, 4
      %s2592 = scalar_select %p2591, %s2590, 4
      %s2593 = smul.u32 2, %s30
      %p2594 = scmp.lt.s32.totalorder %s2592, 4
      %s2595 = scalar_select %p2594, %s2592, 4
      %p2596 = scmp.lt.s32.totalorder %s2593, 1
      %s2597 = scalar_select %p2596, %s2593, 1
      %s2598 = smul.addr %s2597, 16
      %s2599 = smul.addr %s2595, 32
      %s2600 = sadd.s32 %s2598, %s2599
      %s2601 = smul.addr %s2600, 8
      %s2602 = scalar_lea.vmem %s12, %s2601
      %s2603 = ssub.s32 %s31, 1
      %p2604 = scmp.gt.s32.totalorder %s2603, 0
      %s2605 = scalar_select %p2604, %s2603, 0
      %p2606 = scmp.lt.s32.totalorder %s2605, 4
      %s2607 = scalar_select %p2606, %s2605, 4
      %s2608 = smul.u32 2, %s30
      %p2609 = scmp.lt.s32.totalorder %s2607, 4
      %s2610 = scalar_select %p2609, %s2607, 4
      %p2611 = scmp.lt.s32.totalorder %s2608, 1
      %s2612 = scalar_select %p2611, %s2608, 1
      %s2613 = smul.addr %s2612, 16
      %s2614 = smul.addr %s2610, 32
      %s2615 = sadd.s32 %s2613, %s2614
      %s2616 = smul.addr %s2615, 8
      %s2617 = scalar_lea.vmem %s13, %s2616
      %s2618 = smul.u32 2, %s30
      %p2619 = scmp.lt.s32.totalorder %s2618, 1
      %s2620 = scalar_select %p2619, %s2618, 1
      %s2621 = smul.addr %s2620, 16
      %s2622 = smul.addr %s2621, 8
      %s2623 = scalar_lea.vmem %s14, %s2622
      // Predicated region
      $region88: #{fourier_dnn_forward.3} parent=67 // pred_check
        %p2624 = pneg %p350
      $region89: #{fourier_dnn_forward.3} parent=67 // pred_check_branch
        %2626 = sbr.rel (%p2624) target = $region91
      $region90: #{fourier_dnn_forward.3} parent=67 // pred_region
        %s2627 = ssub.s32 %s31, 1
        %p2628 = scmp.gt.s32.totalorder %s2627, 0
        %s2629 = scalar_select %p2628, %s2627, 0
        %p2630 = scmp.lt.s32.totalorder %s2629, 4
        %s2631 = scalar_select %p2630, %s2629, 4
        %s2632 = smul.u32 2, %s30
      $region91: #{fourier_dnn_forward.3} parent=67 // pred_fallthru
        _
      // Predicated region
      $region92: #{fourier_dnn_forward.3} parent=67 // pred_check
        %p2633 = pneg %p388
      $region93: #{fourier_dnn_forward.3} parent=67 // pred_check_branch
        %2635 = sbr.rel (%p2633) target = $region95
      $region94: #{fourier_dnn_forward.3} parent=67 // pred_region
        %s2636 = ssub.s32 %s31, 1
        %p2637 = scmp.gt.s32.totalorder %s2636, 0
        %s2638 = scalar_select %p2637, %s2636, 0
        %p2639 = scmp.lt.s32.totalorder %s2638, 4
        %s2640 = scalar_select %p2639, %s2638, 4
        %s2641 = smul.u32 2, %s30
      $region95: #{fourier_dnn_forward.3} parent=67 // pred_fallthru
        _
      // Predicated region
      $region96: #{fourier_dnn_forward.3} parent=67 // pred_check
        %p2642 = pneg %p414
      $region97: #{fourier_dnn_forward.3} parent=67 // pred_check_branch
        %2644 = sbr.rel (%p2642) target = $region99
      $region98: #{fourier_dnn_forward.3} parent=67 // pred_region
        %s2645 = smul.u32 2, %s30
      $region99: #{fourier_dnn_forward.3} parent=67 // pred_fallthru
        _
      // Predicated region
      $region100: #{fourier_dnn_forward.3} parent=67 // pred_check
        %p2646 = pneg %p414
      $region101: #{fourier_dnn_forward.3} parent=67 // pred_check_branch
        %2648 = sbr.rel (%p2646) target = $region103
      $region102: #{fourier_dnn_forward.3} parent=67 // pred_region
        %s2649 = smul.u32 2, %s30
        %p2650 = scmp.lt.s32.totalorder %s2649, 1
        %s2651 = scalar_select %p2650, %s2649, 1
        %s2652 = smul.addr %s2651, 16
        %s2653 = smul.addr %s2652, 8
        %s2654 = scalar_lea.vmem %s14, %s2653
      $region103: #{fourier_dnn_forward.3} parent=67 // pred_fallthru
        _
    $region68: #{fourier_dnn_forward.3} parent=5 // pred_fallthru
      _
    %p2655 = scmp.le.s32.totalorder 2, %s21
    // Predicated region
    $region104: #{fourier_dnn_forward.3} parent=5 // pred_check
      %p2656 = pneg %p2655
    $region105: #{fourier_dnn_forward.3} parent=5 // pred_check_branch
      %2658 = sbr.rel (%p2656) target = $region107
    $region106: #{fourier_dnn_forward.3} parent=5 // pred_region
      %s2659 = ssub.s32 %s21, 2
      // Predicated region
      $region108: #{fourier_dnn_forward.3} parent=106 // pred_check
        %p2660 = pneg %p356
      $region109: #{fourier_dnn_forward.3} parent=106 // pred_check_branch
        %2662 = sbr.rel (%p2660) target = $region111
      $region110: #{fourier_dnn_forward.3} parent=106 // pred_region
        %s2663 = ssub.s32 %s33, 1
        %p2664 = scmp.gt.s32.totalorder %s2663, 0
        %s2665 = scalar_select %p2664, %s2663, 0
        %p2666 = scmp.lt.s32.totalorder %s2665, 4
        %s2667 = scalar_select %p2666, %s2665, 4
        %s2668 = smul.u32 2, %s32
        %p2669 = scmp.lt.s32.totalorder %s2667, 4
        %s2670 = scalar_select %p2669, %s2667, 4
        %p2671 = scmp.lt.s32.totalorder %s2668, 1
        %s2672 = scalar_select %p2671, %s2668, 1
        %s2673 = smul.addr %s2672, 16
        %s2674 = smul.addr %s2670, 32
        %s2675 = sadd.s32 %s2673, %s2674
        %s2676 = smul.addr %s2675, 8
        %s2677 = scalar_lea.vmem %s12, %s2676
      $region111: #{fourier_dnn_forward.3} parent=106 // pred_fallthru
        _
      // Predicated region
      $region112: #{fourier_dnn_forward.3} parent=106 // pred_check
        %p2678 = pneg %p394
      $region113: #{fourier_dnn_forward.3} parent=106 // pred_check_branch
        %2680 = sbr.rel (%p2678) target = $region115
      $region114: #{fourier_dnn_forward.3} parent=106 // pred_region
        %s2681 = ssub.s32 %s33, 1
        %p2682 = scmp.gt.s32.totalorder %s2681, 0
        %s2683 = scalar_select %p2682, %s2681, 0
        %p2684 = scmp.lt.s32.totalorder %s2683, 4
        %s2685 = scalar_select %p2684, %s2683, 4
        %s2686 = smul.u32 2, %s32
        %p2687 = scmp.lt.s32.totalorder %s2685, 4
        %s2688 = scalar_select %p2687, %s2685, 4
        %p2689 = scmp.lt.s32.totalorder %s2686, 1
        %s2690 = scalar_select %p2689, %s2686, 1
        %s2691 = smul.addr %s2690, 16
        %s2692 = smul.addr %s2688, 32
        %s2693 = sadd.s32 %s2691, %s2692
        %s2694 = smul.addr %s2693, 8
        %s2695 = scalar_lea.vmem %s13, %s2694
      $region115: #{fourier_dnn_forward.3} parent=106 // pred_fallthru
        _
    $region107: #{fourier_dnn_forward.3} parent=5 // pred_fallthru
      _
  $region6: #{fourier_dnn_forward.3} parent=0 // loop_footer
    %s25 = sadd.s32 1, %s21
  $region7: #{fourier_dnn_forward.3} parent=0 // loop_footer_branch
    %20 = sbr.rel target = $region3
  $region8: #{fourier_dnn_forward.3} parent=0 // loop_exit
    _

</llo_original>
